<compile_context>
chip_gen: v5e
topology: v5e:2x2
jax: 0.10.0
libtpu: 0.0.40
codegen_flags: <defaults>
</compile_context>

<pallas_src>
import functools

import jax
import jax.numpy as jnp
from jax.experimental import pallas as pl
from jax.experimental.pallas import tpu as pltpu


# ----------------------------------------------------------------------------
# Fused conv (+ bias + InstanceNorm + LeakyReLU) kernel
# ----------------------------------------------------------------------------
def _conv_fused_kernel(p_ref, w_ref, b_ref, o_ref, acc_ref, *,
                       m_real, apply_in, apply_lrelu, eps, slope):
    """One instance (grid axis 0) x one K-tile (grid axis 1).

    p_ref : (1, Mi, TK)   bf16 im2col patches of one instance, K-tile kk
    w_ref : (TK, Coutp)   bf16 weights, K-tile kk
    b_ref : (1, Coutp)    f32 bias
    o_ref : (1, Mi, Coutp) f32 output (lane-dense, written on last K-tile)
    acc_ref: (Mi, Coutp)  f32 VMEM accumulator (persists across K-tiles)
    """
    kk = pl.program_id(1)

    @pl.when(kk == 0)
    def _():
        acc_ref[...] = jnp.zeros_like(acc_ref)

    acc_ref[...] += jnp.dot(p_ref[0], w_ref[...],
                            preferred_element_type=jnp.float32)

    @pl.when(kk == pl.num_programs(1) - 1)
    def _():
        y = acc_ref[...] + b_ref[...]
        if apply_in:
            # InstanceNorm2d(affine=False): biased variance over the m_real
            # valid spatial rows of this instance (padded rows excluded).
            mi = y.shape[0]
            inv_n = 1.0 / float(m_real)
            if m_real < mi:
                rows = jax.lax.broadcasted_iota(jnp.int32, (mi, 1), 0)
                mask = (rows < m_real).astype(jnp.float32)
                mean = jnp.sum(y * mask, axis=0, keepdims=True) * inv_n
                d = y - mean
                var = jnp.sum(d * d * mask, axis=0, keepdims=True) * inv_n
            else:
                mean = jnp.mean(y, axis=0, keepdims=True)
                d = y - mean
                var = jnp.mean(d * d, axis=0, keepdims=True)
            y = d * jax.lax.rsqrt(var + eps)
        if apply_lrelu:
            y = jnp.where(y >= 0, y, slope * y)
        o_ref[0] = y


# ----------------------------------------------------------------------------
# Wrappers
# ----------------------------------------------------------------------------
def _round_up(x, m):
    return -(-x // m) * m


def conv2d_fused(x_nhwc, w, b, *, stride, padding, apply_in, apply_lrelu,
                 eps=1e-5, slope=0.2, tk_max=512):
    """Conv2d (+ optional InstanceNorm + LeakyReLU) via im2col + fused Pallas matmul.

    x_nhwc: (N, H, W, Cin) f32; w: (Cout, Cin, k, k) f32 (PyTorch layout); b: (Cout,).
    """
    N, H, W, Cin = x_nhwc.shape
    Cout, _, k, _ = w.shape

    xp = jnp.pad(x_nhwc, ((0, 0), (padding, padding), (padding, padding), (0, 0)))
    Hp, Wp = H + 2 * padding, W + 2 * padding
    Ho = (Hp - k) // stride + 1
    Wo = (Wp - k) // stride + 1

    # im2col (JAX glue): tap order (kh, kw, cin) matches the weight reshape below.
    cols = [
        xp[:, kh:kh + stride * Ho:stride, kw:kw + stride * Wo:stride, :]
        for kh in range(k) for kw in range(k)
    ]
    K = k * k * Cin
    M = Ho * Wo
    patches = jnp.concatenate(cols, axis=-1).reshape(N, M, K)

    Kp = _round_up(K, 128)          # K-tileable / lane aligned
    Mi = _round_up(M, 16)           # bf16 sublane packing
    Coutp = _round_up(Cout, 128)    # lane-dense output stores (unmasked vst)

    patches = jnp.pad(patches, ((0, 0), (0, Mi - M), (0, Kp - K))).astype(jnp.bfloat16)
    wm = jnp.transpose(w, (2, 3, 1, 0)).reshape(K, Cout)
    wm = jnp.pad(wm, ((0, Kp - K), (0, Coutp - Cout))).astype(jnp.bfloat16)
    bm = jnp.pad(b.reshape(1, Cout), ((0, 0), (0, Coutp - Cout))).astype(jnp.float32)

    TK = min(Kp, tk_max)
    if Kp % TK != 0:
        TK = 128                     # Kp is always a multiple of 128

    kernel = functools.partial(_conv_fused_kernel, m_real=M, apply_in=apply_in,
                               apply_lrelu=apply_lrelu, eps=eps, slope=slope)
    out = pl.pallas_call(
        kernel,
        out_shape=jax.ShapeDtypeStruct((N, Mi, Coutp), jnp.float32),
        grid=(N, Kp // TK),
        in_specs=[
            pl.BlockSpec((1, Mi, TK), lambda n, kk: (n, 0, kk)),
            pl.BlockSpec((TK, Coutp), lambda n, kk: (kk, 0)),
            pl.BlockSpec((1, Coutp), lambda n, kk: (0, 0)),
        ],
        out_specs=pl.BlockSpec((1, Mi, Coutp), lambda n, kk: (n, 0, 0)),
        scratch_shapes=[pltpu.VMEM((Mi, Coutp), jnp.float32)],
        compiler_params=pltpu.CompilerParams(
            dimension_semantics=("parallel", "arbitrary")),
    )(patches, wm, bm)

    return out[:, :M, :Cout].reshape(N, Ho, Wo, Cout)


def conv_gap_fused(x_nhwc, w, b, *, padding=1):
    """Final Conv2d (Cout=1, no activation) fused exactly with avg_pool2d(full)+flatten.

    Mean over output positions commutes with the linear conv: average each of the
    k*k tap windows over spatial first, then one tiny matvec + bias. Kept in plain
    jnp — the working set is a few KiB, so a pallas_call is pure launch overhead.
    """
    N, H, W, Cin = x_nhwc.shape
    Cout, _, k, _ = w.shape
    xp = jnp.pad(x_nhwc, ((0, 0), (padding, padding), (padding, padding), (0, 0)))
    Ho = H + 2 * padding - k + 1
    Wo = W + 2 * padding - k + 1
    taps = jnp.stack(
        [jnp.mean(xp[:, kh:kh + Ho, kw:kw + Wo, :], axis=(1, 2))
         for kh in range(k) for kw in range(k)],
        axis=1,
    )  # (N, k*k, Cin) — tap order (kh, kw) matches weight reshape
    wm = jnp.transpose(w, (2, 3, 1, 0)).reshape(k * k * Cin, Cout)
    return taps.reshape(N, k * k * Cin) @ wm + b.reshape(1, Cout)  # (N, 1)


# ----------------------------------------------------------------------------
# Model
# ----------------------------------------------------------------------------
def init_params(key):
    """Deterministic synthetic parameters (PyTorch conv weight layout Cout,Cin,kh,kw)."""
    layer_dims = [(3, 64), (64, 128), (128, 256), (256, 512), (512, 1)]
    params = {}
    for idx, (cin, cout) in enumerate(layer_dims, start=1):
        key, kw_, kb_ = jax.random.split(key, 3)
        params[f"w{idx}"] = 0.02 * jax.random.normal(kw_, (cout, cin, 4, 4), jnp.float32)
        params[f"b{idx}"] = 0.01 * jax.random.normal(kb_, (cout,), jnp.float32)
    return params


@jax.jit
def discriminator_forward(params, x_nchw):
    # layout: input NCHW (PyTorch convention) -> internal NHWC.
    x = jnp.transpose(x_nchw, (0, 2, 3, 1)).astype(jnp.float32)

    # Conv(3->64, s=2, p=1) + LeakyReLU(0.2)                 [fused epilogue]
    x = conv2d_fused(x, params["w1"], params["b1"], stride=2, padding=1,
                     apply_in=False, apply_lrelu=True)
    # Conv(64->128, s=2, p=1) + InstanceNorm + LeakyReLU     [fused epilogue]
    x = conv2d_fused(x, params["w2"], params["b2"], stride=2, padding=1,
                     apply_in=True, apply_lrelu=True)
    # Conv(128->256, s=2, p=1) + InstanceNorm + LeakyReLU    [fused epilogue]
    x = conv2d_fused(x, params["w3"], params["b3"], stride=2, padding=1,
                     apply_in=True, apply_lrelu=True)
    # Conv(256->512, s=1, p=1) + InstanceNorm + LeakyReLU    [fused epilogue]
    x = conv2d_fused(x, params["w4"], params["b4"], stride=1, padding=1,
                     apply_in=True, apply_lrelu=True)
    # Conv(512->1, s=1, p=1) fused with avg_pool2d(full spatial) + flatten(1)
    return conv_gap_fused(x, params["w5"], params["b5"], padding=1)


if __name__ == "__main__":
    key = jax.random.PRNGKey(0)
    key, kx = jax.random.split(key)
    params = init_params(key)

    # Small input consistent with the module: (N=2, C=3, H=32, W=32).
    x = jax.random.normal(kx, (2, 3, 32, 32), jnp.float32)

    out = discriminator_forward(params, x)
    out = jax.block_until_ready(out)

    assert out.shape == (2, 1), f"unexpected output shape {out.shape}"
    assert bool(jnp.all(jnp.isfinite(out))), "non-finite values in output"
    print("KERNEL_OK")
</pallas_src>

<mosaic_0001>
module attributes {stable_mosaic.version = 11 : i64} {
  func.func @_conv_fused_kernel(%arg0: i32, %arg1: i32, %arg2: memref<1x256x128xbf16, #tpu.memory_space<vmem>>, %arg3: memref<128x128xbf16, #tpu.memory_space<vmem>>, %arg4: memref<1x128xf32, #tpu.memory_space<vmem>>, %arg5: memref<1x256x128xf32, #tpu.memory_space<vmem>>, %arg6: memref<256x128xf32, #tpu.memory_space<vmem>>) attributes {dimension_semantics = [#tpu.dimension_semantics<parallel>, #tpu.dimension_semantics<arbitrary>], iteration_bounds = array<i64: 2, 1>, scalar_prefetch = 0 : i64, scratch_operands = 1 : i64, tpu.core_type = #tpu.core_type<tc>, window_params = [{transform_indices = @transform_0, window_bounds = array<i64: 1, 256, 128>}, {transform_indices = @transform_1, window_bounds = array<i64: 128, 128>}, {pipeline_mode = #tpu.pipeline_mode<synchronous>, transform_indices = @transform_2, window_bounds = array<i64: 1, 128>}, {transform_indices = @transform_3, window_bounds = array<i64: 1, 256, 128>}]} {
    %c0_i32 = arith.constant 0 : i32
    %0 = arith.cmpi eq, %arg1, %c0_i32 : i32
    %1 = arith.extui %0 : i1 to i32
    %c0_i32_0 = arith.constant 0 : i32
    %2 = arith.cmpi ne, %1, %c0_i32_0 : i32
    scf.if %2 {
      %cst_11 = arith.constant 0.000000e+00 : f32
      %13 = vector.broadcast %cst_11 : f32 to vector<256x128xf32>
      %c0_12 = arith.constant 0 : index
      %c0_13 = arith.constant 0 : index
      %14 = vector.load %arg6[%c0_12, %c0_13] : memref<256x128xf32, #tpu.memory_space<vmem>>, vector<256x128xf32>
      tpu.vector_store %arg6[%c0_12, %c0_13], %13 {strides = array<i32>} : memref<256x128xf32, #tpu.memory_space<vmem>>, vector<256x128xf32>,
    } else {
    }
    %c0 = arith.constant 0 : index
    %c0_1 = arith.constant 0 : index
    %3 = vector.load %arg6[%c0, %c0_1] : memref<256x128xf32, #tpu.memory_space<vmem>>, vector<256x128xf32>
    %c0_2 = arith.constant 0 : index
    %c0_3 = arith.constant 0 : index
    %c0_4 = arith.constant 0 : index
    %4 = vector.load %arg2[%c0_2, %c0_3, %c0_4] : memref<1x256x128xbf16, #tpu.memory_space<vmem>>, vector<1x256x128xbf16>
    %5 = vector.shape_cast %4 : vector<1x256x128xbf16> to vector<256x128xbf16>
    %c0_5 = arith.constant 0 : index
    %c0_6 = arith.constant 0 : index
    %6 = vector.load %arg3[%c0_5, %c0_6] : memref<128x128xbf16, #tpu.memory_space<vmem>>, vector<128x128xbf16>
    %cst = arith.constant dense<0.000000e+00> : vector<256x128xf32>
    %7 = tpu.matmul %5, %6, %cst {dimension_numbers = #tpu.dot_dimension_numbers<[1], [0], [0], [1], [0, 0, 1, 1], [], []>} : vector<256x128xbf16>, vector<128x128xbf16>, vector<256x128xf32> -> vector<256x128xf32>
    %8 = arith.addf %3, %7 : vector<256x128xf32>
    %c0_7 = arith.constant 0 : index
    %c0_8 = arith.constant 0 : index
    %9 = vector.load %arg6[%c0_7, %c0_8] : memref<256x128xf32, #tpu.memory_space<vmem>>, vector<256x128xf32>
    tpu.vector_store %arg6[%c0_7, %c0_8], %8 {strides = array<i32>} : memref<256x128xf32, #tpu.memory_space<vmem>>, vector<256x128xf32>,
    %c0_i32_9 = arith.constant 0 : i32
    %10 = arith.cmpi eq, %arg1, %c0_i32_9 : i32
    %11 = arith.extui %10 : i1 to i32
    %c0_i32_10 = arith.constant 0 : i32
    %12 = arith.cmpi ne, %11, %c0_i32_10 : i32
    scf.if %12 {
      %c0_11 = arith.constant 0 : index
      %c0_12 = arith.constant 0 : index
      %13 = vector.load %arg6[%c0_11, %c0_12] : memref<256x128xf32, #tpu.memory_space<vmem>>, vector<256x128xf32>
      %c0_13 = arith.constant 0 : index
      %c0_14 = arith.constant 0 : index
      %14 = vector.load %arg4[%c0_13, %c0_14] : memref<1x128xf32, #tpu.memory_space<vmem>>, vector<1x128xf32>
      %15 = vector.broadcast %14 : vector<1x128xf32> to vector<256x128xf32>
      %16 = arith.addf %13, %15 : vector<256x128xf32>
      %cst_15 = arith.constant 0.000000e+00 : f32
      %17 = vector.broadcast %cst_15 : f32 to vector<256x128xf32>
      %18 = arith.cmpf oge, %16, %17 : vector<256x128xf32>
      %cst_16 = arith.constant 2.000000e-01 : f32
      %19 = vector.broadcast %cst_16 : f32 to vector<256x128xf32>
      %20 = arith.mulf %19, %16 : vector<256x128xf32>
      %21 = arith.select %18, %16, %20 : vector<256x128xi1>, vector<256x128xf32>
      %c0_17 = arith.constant 0 : index
      %c0_18 = arith.constant 0 : index
      %c0_19 = arith.constant 0 : index
      %22 = vector.load %arg5[%c0_17, %c0_18, %c0_19] : memref<1x256x128xf32, #tpu.memory_space<vmem>>, vector<1x256x128xf32>
      %23 = vector.shape_cast %22 : vector<1x256x128xf32> to vector<256x128xf32>
      %24 = vector.shape_cast %21 : vector<256x128xf32> to vector<1x256x128xf32>
      tpu.vector_store %arg5[%c0_17, %c0_18, %c0_19], %24 {strides = array<i32>} : memref<1x256x128xf32, #tpu.memory_space<vmem>>, vector<1x256x128xf32>,
    } else {
    }
    return
  }
  func.func @transform_0(%arg0: i32, %arg1: i32) -> (i32, i32, i32) {
    %c0_i32 = arith.constant 0 : i32
    %c0_i32_0 = arith.constant 0 : i32
    return %arg0, %c0_i32, %arg1 : i32, i32, i32
  }
  func.func @transform_1(%arg0: i32, %arg1: i32) -> (i32, i32) {
    %c0_i32 = arith.constant 0 : i32
    %c0_i32_0 = arith.constant 0 : i32
    return %arg1, %c0_i32 : i32, i32
  }
  func.func @transform_2(%arg0: i32, %arg1: i32) -> (i32, i32) {
    %c0_i32 = arith.constant 0 : i32
    %c0_i32_0 = arith.constant 0 : i32
    %c0_i32_1 = arith.constant 0 : i32
    return %c0_i32, %c0_i32_0 : i32, i32
  }
  func.func @transform_3(%arg0: i32, %arg1: i32) -> (i32, i32, i32) {
    %c0_i32 = arith.constant 0 : i32
    %c0_i32_0 = arith.constant 0 : i32
    %c0_i32_1 = arith.constant 0 : i32
    return %arg0, %c0_i32, %c0_i32_0 : i32, i32, i32
  }
}

module attributes {stable_mosaic.version = 11 : i64} {
  func.func @_conv_fused_kernel(%arg0: i32, %arg1: i32, %arg2: memref<1x64x512xbf16, #tpu.memory_space<vmem>>, %arg3: memref<512x128xbf16, #tpu.memory_space<vmem>>, %arg4: memref<1x128xf32, #tpu.memory_space<vmem>>, %arg5: memref<1x64x128xf32, #tpu.memory_space<vmem>>, %arg6: memref<64x128xf32, #tpu.memory_space<vmem>>) attributes {dimension_semantics = [#tpu.dimension_semantics<parallel>, #tpu.dimension_semantics<arbitrary>], iteration_bounds = array<i64: 2, 2>, scalar_prefetch = 0 : i64, scratch_operands = 1 : i64, tpu.core_type = #tpu.core_type<tc>, window_params = [{transform_indices = @transform_0, window_bounds = array<i64: 1, 64, 512>}, {transform_indices = @transform_1, window_bounds = array<i64: 512, 128>}, {pipeline_mode = #tpu.pipeline_mode<synchronous>, transform_indices = @transform_2, window_bounds = array<i64: 1, 128>}, {transform_indices = @transform_3, window_bounds = array<i64: 1, 64, 128>}]} {
    %c0_i32 = arith.constant 0 : i32
    %0 = arith.cmpi eq, %arg1, %c0_i32 : i32
    %1 = arith.extui %0 : i1 to i32
    %c0_i32_0 = arith.constant 0 : i32
    %2 = arith.cmpi ne, %1, %c0_i32_0 : i32
    scf.if %2 {
      %cst_10 = arith.constant 0.000000e+00 : f32
      %13 = vector.broadcast %cst_10 : f32 to vector<64x128xf32>
      %c0_11 = arith.constant 0 : index
      %c0_12 = arith.constant 0 : index
      %14 = vector.load %arg6[%c0_11, %c0_12] : memref<64x128xf32, #tpu.memory_space<vmem>>, vector<64x128xf32>
      tpu.vector_store %arg6[%c0_11, %c0_12], %13 {strides = array<i32>} : memref<64x128xf32, #tpu.memory_space<vmem>>, vector<64x128xf32>,
    } else {
    }
    %c0 = arith.constant 0 : index
    %c0_1 = arith.constant 0 : index
    %3 = vector.load %arg6[%c0, %c0_1] : memref<64x128xf32, #tpu.memory_space<vmem>>, vector<64x128xf32>
    %c0_2 = arith.constant 0 : index
    %c0_3 = arith.constant 0 : index
    %c0_4 = arith.constant 0 : index
    %4 = vector.load %arg2[%c0_2, %c0_3, %c0_4] : memref<1x64x512xbf16, #tpu.memory_space<vmem>>, vector<1x64x512xbf16>
    %5 = vector.shape_cast %4 : vector<1x64x512xbf16> to vector<64x512xbf16>
    %c0_5 = arith.constant 0 : index
    %c0_6 = arith.constant 0 : index
    %6 = vector.load %arg3[%c0_5, %c0_6] : memref<512x128xbf16, #tpu.memory_space<vmem>>, vector<512x128xbf16>
    %cst = arith.constant dense<0.000000e+00> : vector<64x128xf32>
    %7 = tpu.matmul %5, %6, %cst {dimension_numbers = #tpu.dot_dimension_numbers<[1], [0], [0], [1], [0, 0, 1, 1], [], []>} : vector<64x512xbf16>, vector<512x128xbf16>, vector<64x128xf32> -> vector<64x128xf32>
    %8 = arith.addf %3, %7 : vector<64x128xf32>
    %c0_7 = arith.constant 0 : index
    %c0_8 = arith.constant 0 : index
    %9 = vector.load %arg6[%c0_7, %c0_8] : memref<64x128xf32, #tpu.memory_space<vmem>>, vector<64x128xf32>
    tpu.vector_store %arg6[%c0_7, %c0_8], %8 {strides = array<i32>} : memref<64x128xf32, #tpu.memory_space<vmem>>, vector<64x128xf32>,
    %c1_i32 = arith.constant 1 : i32
    %10 = arith.cmpi eq, %arg1, %c1_i32 : i32
    %11 = arith.extui %10 : i1 to i32
    %c0_i32_9 = arith.constant 0 : i32
    %12 = arith.cmpi ne, %11, %c0_i32_9 : i32
    scf.if %12 {
      %c0_10 = arith.constant 0 : index
      %c0_11 = arith.constant 0 : index
      %13 = vector.load %arg6[%c0_10, %c0_11] : memref<64x128xf32, #tpu.memory_space<vmem>>, vector<64x128xf32>
      %c0_12 = arith.constant 0 : index
      %c0_13 = arith.constant 0 : index
      %14 = vector.load %arg4[%c0_12, %c0_13] : memref<1x128xf32, #tpu.memory_space<vmem>>, vector<1x128xf32>
      %15 = vector.broadcast %14 : vector<1x128xf32> to vector<64x128xf32>
      %16 = arith.addf %13, %15 : vector<64x128xf32>
      %cst_14 = arith.constant dense<0.000000e+00> : vector<128xf32>
      %17 = vector.multi_reduction <add>, %16, %cst_14 [0] : vector<64x128xf32> to vector<128xf32>
      %18 = vector.shape_cast %17 : vector<128xf32> to vector<1x128xf32>
      %cst_15 = arith.constant 6.400000e+01 : f32
      %19 = vector.broadcast %cst_15 : f32 to vector<1x128xf32>
      %20 = arith.divf %18, %19 : vector<1x128xf32>
      %21 = vector.broadcast %20 : vector<1x128xf32> to vector<64x128xf32>
      %22 = arith.subf %16, %21 : vector<64x128xf32>
      %23 = arith.mulf %22, %22 : vector<64x128xf32>
      %cst_16 = arith.constant dense<0.000000e+00> : vector<128xf32>
      %24 = vector.multi_reduction <add>, %23, %cst_16 [0] : vector<64x128xf32> to vector<128xf32>
      %25 = vector.shape_cast %24 : vector<128xf32> to vector<1x128xf32>
      %cst_17 = arith.constant 6.400000e+01 : f32
      %26 = vector.broadcast %cst_17 : f32 to vector<1x128xf32>
      %27 = arith.divf %25, %26 : vector<1x128xf32>
      %cst_18 = arith.constant 9.99999974E-6 : f32
      %28 = vector.broadcast %cst_18 : f32 to vector<1x128xf32>
      %29 = arith.addf %27, %28 : vector<1x128xf32>
      %30 = math.rsqrt %29 : vector<1x128xf32>
      %31 = vector.broadcast %30 : vector<1x128xf32> to vector<64x128xf32>
      %32 = arith.mulf %22, %31 : vector<64x128xf32>
      %cst_19 = arith.constant 0.000000e+00 : f32
      %33 = vector.broadcast %cst_19 : f32 to vector<64x128xf32>
      %34 = arith.cmpf oge, %32, %33 : vector<64x128xf32>
      %cst_20 = arith.constant 2.000000e-01 : f32
      %35 = vector.broadcast %cst_20 : f32 to vector<64x128xf32>
      %36 = arith.mulf %35, %32 : vector<64x128xf32>
      %37 = arith.select %34, %32, %36 : vector<64x128xi1>, vector<64x128xf32>
      %c0_21 = arith.constant 0 : index
      %c0_22 = arith.constant 0 : index
      %c0_23 = arith.constant 0 : index
      %38 = vector.load %arg5[%c0_21, %c0_22, %c0_23] : memref<1x64x128xf32, #tpu.memory_space<vmem>>, vector<1x64x128xf32>
      %39 = vector.shape_cast %38 : vector<1x64x128xf32> to vector<64x128xf32>
      %40 = vector.shape_cast %37 : vector<64x128xf32> to vector<1x64x128xf32>
      tpu.vector_store %arg5[%c0_21, %c0_22, %c0_23], %40 {strides = array<i32>} : memref<1x64x128xf32, #tpu.memory_space<vmem>>, vector<1x64x128xf32>,
    } else {
    }
    return
  }
  func.func @transform_0(%arg0: i32, %arg1: i32) -> (i32, i32, i32) {
    %c0_i32 = arith.constant 0 : i32
    %c0_i32_0 = arith.constant 0 : i32
    return %arg0, %c0_i32, %arg1 : i32, i32, i32
  }
  func.func @transform_1(%arg0: i32, %arg1: i32) -> (i32, i32) {
    %c0_i32 = arith.constant 0 : i32
    %c0_i32_0 = arith.constant 0 : i32
    return %arg1, %c0_i32 : i32, i32
  }
  func.func @transform_2(%arg0: i32, %arg1: i32) -> (i32, i32) {
    %c0_i32 = arith.constant 0 : i32
    %c0_i32_0 = arith.constant 0 : i32
    %c0_i32_1 = arith.constant 0 : i32
    return %c0_i32, %c0_i32_0 : i32, i32
  }
  func.func @transform_3(%arg0: i32, %arg1: i32) -> (i32, i32, i32) {
    %c0_i32 = arith.constant 0 : i32
    %c0_i32_0 = arith.constant 0 : i32
    %c0_i32_1 = arith.constant 0 : i32
    return %arg0, %c0_i32, %c0_i32_0 : i32, i32, i32
  }
}

module attributes {stable_mosaic.version = 11 : i64} {
  func.func @_conv_fused_kernel(%arg0: i32, %arg1: i32, %arg2: memref<1x16x512xbf16, #tpu.memory_space<vmem>>, %arg3: memref<512x256xbf16, #tpu.memory_space<vmem>>, %arg4: memref<1x256xf32, #tpu.memory_space<vmem>>, %arg5: memref<1x16x256xf32, #tpu.memory_space<vmem>>, %arg6: memref<16x256xf32, #tpu.memory_space<vmem>>) attributes {dimension_semantics = [#tpu.dimension_semantics<parallel>, #tpu.dimension_semantics<arbitrary>], iteration_bounds = array<i64: 2, 4>, scalar_prefetch = 0 : i64, scratch_operands = 1 : i64, tpu.core_type = #tpu.core_type<tc>, window_params = [{transform_indices = @transform_0, window_bounds = array<i64: 1, 16, 512>}, {transform_indices = @transform_1, window_bounds = array<i64: 512, 256>}, {pipeline_mode = #tpu.pipeline_mode<synchronous>, transform_indices = @transform_2, window_bounds = array<i64: 1, 256>}, {transform_indices = @transform_3, window_bounds = array<i64: 1, 16, 256>}]} {
    %c0_i32 = arith.constant 0 : i32
    %0 = arith.cmpi eq, %arg1, %c0_i32 : i32
    %1 = arith.extui %0 : i1 to i32
    %c0_i32_0 = arith.constant 0 : i32
    %2 = arith.cmpi ne, %1, %c0_i32_0 : i32
    scf.if %2 {
      %cst_10 = arith.constant 0.000000e+00 : f32
      %13 = vector.broadcast %cst_10 : f32 to vector<16x256xf32>
      %c0_11 = arith.constant 0 : index
      %c0_12 = arith.constant 0 : index
      %14 = vector.load %arg6[%c0_11, %c0_12] : memref<16x256xf32, #tpu.memory_space<vmem>>, vector<16x256xf32>
      tpu.vector_store %arg6[%c0_11, %c0_12], %13 {strides = array<i32>} : memref<16x256xf32, #tpu.memory_space<vmem>>, vector<16x256xf32>,
    } else {
    }
    %c0 = arith.constant 0 : index
    %c0_1 = arith.constant 0 : index
    %3 = vector.load %arg6[%c0, %c0_1] : memref<16x256xf32, #tpu.memory_space<vmem>>, vector<16x256xf32>
    %c0_2 = arith.constant 0 : index
    %c0_3 = arith.constant 0 : index
    %c0_4 = arith.constant 0 : index
    %4 = vector.load %arg2[%c0_2, %c0_3, %c0_4] : memref<1x16x512xbf16, #tpu.memory_space<vmem>>, vector<1x16x512xbf16>
    %5 = vector.shape_cast %4 : vector<1x16x512xbf16> to vector<16x512xbf16>
    %c0_5 = arith.constant 0 : index
    %c0_6 = arith.constant 0 : index
    %6 = vector.load %arg3[%c0_5, %c0_6] : memref<512x256xbf16, #tpu.memory_space<vmem>>, vector<512x256xbf16>
    %cst = arith.constant dense<0.000000e+00> : vector<16x256xf32>
    %7 = tpu.matmul %5, %6, %cst {dimension_numbers = #tpu.dot_dimension_numbers<[1], [0], [0], [1], [0, 0, 1, 1], [], []>} : vector<16x512xbf16>, vector<512x256xbf16>, vector<16x256xf32> -> vector<16x256xf32>
    %8 = arith.addf %3, %7 : vector<16x256xf32>
    %c0_7 = arith.constant 0 : index
    %c0_8 = arith.constant 0 : index
    %9 = vector.load %arg6[%c0_7, %c0_8] : memref<16x256xf32, #tpu.memory_space<vmem>>, vector<16x256xf32>
    tpu.vector_store %arg6[%c0_7, %c0_8], %8 {strides = array<i32>} : memref<16x256xf32, #tpu.memory_space<vmem>>, vector<16x256xf32>,
    %c3_i32 = arith.constant 3 : i32
    %10 = arith.cmpi eq, %arg1, %c3_i32 : i32
    %11 = arith.extui %10 : i1 to i32
    %c0_i32_9 = arith.constant 0 : i32
    %12 = arith.cmpi ne, %11, %c0_i32_9 : i32
    scf.if %12 {
      %c0_10 = arith.constant 0 : index
      %c0_11 = arith.constant 0 : index
      %13 = vector.load %arg6[%c0_10, %c0_11] : memref<16x256xf32, #tpu.memory_space<vmem>>, vector<16x256xf32>
      %c0_12 = arith.constant 0 : index
      %c0_13 = arith.constant 0 : index
      %14 = vector.load %arg4[%c0_12, %c0_13] : memref<1x256xf32, #tpu.memory_space<vmem>>, vector<1x256xf32>
      %15 = vector.broadcast %14 : vector<1x256xf32> to vector<16x256xf32>
      %16 = arith.addf %13, %15 : vector<16x256xf32>
      %cst_14 = arith.constant dense<0.000000e+00> : vector<256xf32>
      %17 = vector.multi_reduction <add>, %16, %cst_14 [0] : vector<16x256xf32> to vector<256xf32>
      %18 = vector.shape_cast %17 : vector<256xf32> to vector<1x256xf32>
      %cst_15 = arith.constant 1.600000e+01 : f32
      %19 = vector.broadcast %cst_15 : f32 to vector<1x256xf32>
      %20 = arith.divf %18, %19 : vector<1x256xf32>
      %21 = vector.broadcast %20 : vector<1x256xf32> to vector<16x256xf32>
      %22 = arith.subf %16, %21 : vector<16x256xf32>
      %23 = arith.mulf %22, %22 : vector<16x256xf32>
      %cst_16 = arith.constant dense<0.000000e+00> : vector<256xf32>
      %24 = vector.multi_reduction <add>, %23, %cst_16 [0] : vector<16x256xf32> to vector<256xf32>
      %25 = vector.shape_cast %24 : vector<256xf32> to vector<1x256xf32>
      %cst_17 = arith.constant 1.600000e+01 : f32
      %26 = vector.broadcast %cst_17 : f32 to vector<1x256xf32>
      %27 = arith.divf %25, %26 : vector<1x256xf32>
      %cst_18 = arith.constant 9.99999974E-6 : f32
      %28 = vector.broadcast %cst_18 : f32 to vector<1x256xf32>
      %29 = arith.addf %27, %28 : vector<1x256xf32>
      %30 = math.rsqrt %29 : vector<1x256xf32>
      %31 = vector.broadcast %30 : vector<1x256xf32> to vector<16x256xf32>
      %32 = arith.mulf %22, %31 : vector<16x256xf32>
      %cst_19 = arith.constant 0.000000e+00 : f32
      %33 = vector.broadcast %cst_19 : f32 to vector<16x256xf32>
      %34 = arith.cmpf oge, %32, %33 : vector<16x256xf32>
      %cst_20 = arith.constant 2.000000e-01 : f32
      %35 = vector.broadcast %cst_20 : f32 to vector<16x256xf32>
      %36 = arith.mulf %35, %32 : vector<16x256xf32>
      %37 = arith.select %34, %32, %36 : vector<16x256xi1>, vector<16x256xf32>
      %c0_21 = arith.constant 0 : index
      %c0_22 = arith.constant 0 : index
      %c0_23 = arith.constant 0 : index
      %38 = vector.load %arg5[%c0_21, %c0_22, %c0_23] : memref<1x16x256xf32, #tpu.memory_space<vmem>>, vector<1x16x256xf32>
      %39 = vector.shape_cast %38 : vector<1x16x256xf32> to vector<16x256xf32>
      %40 = vector.shape_cast %37 : vector<16x256xf32> to vector<1x16x256xf32>
      tpu.vector_store %arg5[%c0_21, %c0_22, %c0_23], %40 {strides = array<i32>} : memref<1x16x256xf32, #tpu.memory_space<vmem>>, vector<1x16x256xf32>,
    } else {
    }
    return
  }
  func.func @transform_0(%arg0: i32, %arg1: i32) -> (i32, i32, i32) {
    %c0_i32 = arith.constant 0 : i32
    %c0_i32_0 = arith.constant 0 : i32
    return %arg0, %c0_i32, %arg1 : i32, i32, i32
  }
  func.func @transform_1(%arg0: i32, %arg1: i32) -> (i32, i32) {
    %c0_i32 = arith.constant 0 : i32
    %c0_i32_0 = arith.constant 0 : i32
    return %arg1, %c0_i32 : i32, i32
  }
  func.func @transform_2(%arg0: i32, %arg1: i32) -> (i32, i32) {
    %c0_i32 = arith.constant 0 : i32
    %c0_i32_0 = arith.constant 0 : i32
    %c0_i32_1 = arith.constant 0 : i32
    return %c0_i32, %c0_i32_0 : i32, i32
  }
  func.func @transform_3(%arg0: i32, %arg1: i32) -> (i32, i32, i32) {
    %c0_i32 = arith.constant 0 : i32
    %c0_i32_0 = arith.constant 0 : i32
    %c0_i32_1 = arith.constant 0 : i32
    return %arg0, %c0_i32, %c0_i32_0 : i32, i32, i32
  }
}

module attributes {stable_mosaic.version = 11 : i64} {
  func.func @_conv_fused_kernel(%arg0: i32, %arg1: i32, %arg2: memref<1x16x512xbf16, #tpu.memory_space<vmem>>, %arg3: memref<512x512xbf16, #tpu.memory_space<vmem>>, %arg4: memref<1x512xf32, #tpu.memory_space<vmem>>, %arg5: memref<1x16x512xf32, #tpu.memory_space<vmem>>, %arg6: memref<16x512xf32, #tpu.memory_space<vmem>>) attributes {dimension_semantics = [#tpu.dimension_semantics<parallel>, #tpu.dimension_semantics<arbitrary>], iteration_bounds = array<i64: 2, 8>, scalar_prefetch = 0 : i64, scratch_operands = 1 : i64, tpu.core_type = #tpu.core_type<tc>, window_params = [{transform_indices = @transform_0, window_bounds = array<i64: 1, 16, 512>}, {transform_indices = @transform_1, window_bounds = array<i64: 512, 512>}, {pipeline_mode = #tpu.pipeline_mode<synchronous>, transform_indices = @transform_2, window_bounds = array<i64: 1, 512>}, {transform_indices = @transform_3, window_bounds = array<i64: 1, 16, 512>}]} {
    %c0_i32 = arith.constant 0 : i32
    %0 = arith.cmpi eq, %arg1, %c0_i32 : i32
    %1 = arith.extui %0 : i1 to i32
    %c0_i32_0 = arith.constant 0 : i32
    %2 = arith.cmpi ne, %1, %c0_i32_0 : i32
    scf.if %2 {
      %cst_10 = arith.constant 0.000000e+00 : f32
      %13 = vector.broadcast %cst_10 : f32 to vector<16x512xf32>
      %c0_11 = arith.constant 0 : index
      %c0_12 = arith.constant 0 : index
      %14 = vector.load %arg6[%c0_11, %c0_12] : memref<16x512xf32, #tpu.memory_space<vmem>>, vector<16x512xf32>
      tpu.vector_store %arg6[%c0_11, %c0_12], %13 {strides = array<i32>} : memref<16x512xf32, #tpu.memory_space<vmem>>, vector<16x512xf32>,
    } else {
    }
    %c0 = arith.constant 0 : index
    %c0_1 = arith.constant 0 : index
    %3 = vector.load %arg6[%c0, %c0_1] : memref<16x512xf32, #tpu.memory_space<vmem>>, vector<16x512xf32>
    %c0_2 = arith.constant 0 : index
    %c0_3 = arith.constant 0 : index
    %c0_4 = arith.constant 0 : index
    %4 = vector.load %arg2[%c0_2, %c0_3, %c0_4] : memref<1x16x512xbf16, #tpu.memory_space<vmem>>, vector<1x16x512xbf16>
    %5 = vector.shape_cast %4 : vector<1x16x512xbf16> to vector<16x512xbf16>
    %c0_5 = arith.constant 0 : index
    %c0_6 = arith.constant 0 : index
    %6 = vector.load %arg3[%c0_5, %c0_6] : memref<512x512xbf16, #tpu.memory_space<vmem>>, vector<512x512xbf16>
    %cst = arith.constant dense<0.000000e+00> : vector<16x512xf32>
    %7 = tpu.matmul %5, %6, %cst {dimension_numbers = #tpu.dot_dimension_numbers<[1], [0], [0], [1], [0, 0, 1, 1], [], []>} : vector<16x512xbf16>, vector<512x512xbf16>, vector<16x512xf32> -> vector<16x512xf32>
    %8 = arith.addf %3, %7 : vector<16x512xf32>
    %c0_7 = arith.constant 0 : index
    %c0_8 = arith.constant 0 : index
    %9 = vector.load %arg6[%c0_7, %c0_8] : memref<16x512xf32, #tpu.memory_space<vmem>>, vector<16x512xf32>
    tpu.vector_store %arg6[%c0_7, %c0_8], %8 {strides = array<i32>} : memref<16x512xf32, #tpu.memory_space<vmem>>, vector<16x512xf32>,
    %c7_i32 = arith.constant 7 : i32
    %10 = arith.cmpi eq, %arg1, %c7_i32 : i32
    %11 = arith.extui %10 : i1 to i32
    %c0_i32_9 = arith.constant 0 : i32
    %12 = arith.cmpi ne, %11, %c0_i32_9 : i32
    scf.if %12 {
      %c0_10 = arith.constant 0 : index
      %c0_11 = arith.constant 0 : index
      %13 = vector.load %arg6[%c0_10, %c0_11] : memref<16x512xf32, #tpu.memory_space<vmem>>, vector<16x512xf32>
      %c0_12 = arith.constant 0 : index
      %c0_13 = arith.constant 0 : index
      %14 = vector.load %arg4[%c0_12, %c0_13] : memref<1x512xf32, #tpu.memory_space<vmem>>, vector<1x512xf32>
      %15 = vector.broadcast %14 : vector<1x512xf32> to vector<16x512xf32>
      %16 = arith.addf %13, %15 : vector<16x512xf32>
      %17 = tpu.iota {dimensions = array<i32: 0>} : vector<16x1xi32>
      %c9_i32 = arith.constant 9 : i32
      %18 = vector.broadcast %c9_i32 : i32 to vector<16x1xi32>
      %19 = arith.cmpi slt, %17, %18 : vector<16x1xi32>
      %20 = arith.extui %19 : vector<16x1xi1> to vector<16x1xi32>
      %21 = arith.sitofp %20 : vector<16x1xi32> to vector<16x1xf32>
      %22 = vector.broadcast %21 : vector<16x1xf32> to vector<16x512xf32>
      %23 = arith.mulf %16, %22 : vector<16x512xf32>
      %cst_14 = arith.constant dense<0.000000e+00> : vector<512xf32>
      %24 = vector.multi_reduction <add>, %23, %cst_14 [0] : vector<16x512xf32> to vector<512xf32>
      %25 = vector.shape_cast %24 : vector<512xf32> to vector<1x512xf32>
      %cst_15 = arith.constant 0.111111112 : f32
      %26 = vector.broadcast %cst_15 : f32 to vector<1x512xf32>
      %27 = arith.mulf %25, %26 : vector<1x512xf32>
      %28 = vector.broadcast %27 : vector<1x512xf32> to vector<16x512xf32>
      %29 = arith.subf %16, %28 : vector<16x512xf32>
      %30 = arith.mulf %29, %29 : vector<16x512xf32>
      %31 = vector.broadcast %21 : vector<16x1xf32> to vector<16x512xf32>
      %32 = arith.mulf %30, %31 : vector<16x512xf32>
      %cst_16 = arith.constant dense<0.000000e+00> : vector<512xf32>
      %33 = vector.multi_reduction <add>, %32, %cst_16 [0] : vector<16x512xf32> to vector<512xf32>
      %34 = vector.shape_cast %33 : vector<512xf32> to vector<1x512xf32>
      %cst_17 = arith.constant 0.111111112 : f32
      %35 = vector.broadcast %cst_17 : f32 to vector<1x512xf32>
      %36 = arith.mulf %34, %35 : vector<1x512xf32>
      %cst_18 = arith.constant 9.99999974E-6 : f32
      %37 = vector.broadcast %cst_18 : f32 to vector<1x512xf32>
      %38 = arith.addf %36, %37 : vector<1x512xf32>
      %39 = math.rsqrt %38 : vector<1x512xf32>
      %40 = vector.broadcast %39 : vector<1x512xf32> to vector<16x512xf32>
      %41 = arith.mulf %29, %40 : vector<16x512xf32>
      %cst_19 = arith.constant 0.000000e+00 : f32
      %42 = vector.broadcast %cst_19 : f32 to vector<16x512xf32>
      %43 = arith.cmpf oge, %41, %42 : vector<16x512xf32>
      %cst_20 = arith.constant 2.000000e-01 : f32
      %44 = vector.broadcast %cst_20 : f32 to vector<16x512xf32>
      %45 = arith.mulf %44, %41 : vector<16x512xf32>
      %46 = arith.select %43, %41, %45 : vector<16x512xi1>, vector<16x512xf32>
      %c0_21 = arith.constant 0 : index
      %c0_22 = arith.constant 0 : index
      %c0_23 = arith.constant 0 : index
      %47 = vector.load %arg5[%c0_21, %c0_22, %c0_23] : memref<1x16x512xf32, #tpu.memory_space<vmem>>, vector<1x16x512xf32>
      %48 = vector.shape_cast %47 : vector<1x16x512xf32> to vector<16x512xf32>
      %49 = vector.shape_cast %46 : vector<16x512xf32> to vector<1x16x512xf32>
      tpu.vector_store %arg5[%c0_21, %c0_22, %c0_23], %49 {strides = array<i32>} : memref<1x16x512xf32, #tpu.memory_space<vmem>>, vector<1x16x512xf32>,
    } else {
    }
    return
  }
  func.func @transform_0(%arg0: i32, %arg1: i32) -> (i32, i32, i32) {
    %c0_i32 = arith.constant 0 : i32
    %c0_i32_0 = arith.constant 0 : i32
    return %arg0, %c0_i32, %arg1 : i32, i32, i32
  }
  func.func @transform_1(%arg0: i32, %arg1: i32) -> (i32, i32) {
    %c0_i32 = arith.constant 0 : i32
    %c0_i32_0 = arith.constant 0 : i32
    return %arg1, %c0_i32 : i32, i32
  }
  func.func @transform_2(%arg0: i32, %arg1: i32) -> (i32, i32) {
    %c0_i32 = arith.constant 0 : i32
    %c0_i32_0 = arith.constant 0 : i32
    %c0_i32_1 = arith.constant 0 : i32
    return %c0_i32, %c0_i32_0 : i32, i32
  }
  func.func @transform_3(%arg0: i32, %arg1: i32) -> (i32, i32, i32) {
    %c0_i32 = arith.constant 0 : i32
    %c0_i32_0 = arith.constant 0 : i32
    %c0_i32_1 = arith.constant 0 : i32
    return %arg0, %c0_i32, %c0_i32_0 : i32, i32, i32
  }
}

</mosaic_0001>

<llo_original>
// kernel: discriminator_forward.4
$region0: #{discriminator_forward.4}
  #allocation0 [shape = 'u32[]', space=smem, size = 0x4, offset = 0x4, fixed_abs, tag = 'smem constant byte address 0x4 - core index']
  #allocation1 [shape = 'u32[72,128]{1,0:T(1,128)}', space=vmem, size = 0x9000, scoped, tag = 'internal scratch']
  #allocation2 [shape = 'f32[256,128]{1,0:T(8,128)}', space=vmem, size = 0x20000, scoped, tag = 'scratch operand']
  %s0 = inlined_call_operand.vmem [shape: bf16[2,256,128], index: 0, kind: input, shape index: {}]
  %s1 = inlined_call_operand.vmem [shape: bf16[128,128], index: 1, kind: input, shape index: {}]
  %s2 = inlined_call_operand.vmem [shape: f32[1,128], index: 2, kind: input, shape index: {}]
  %s3 = inlined_call_operand.vmem [shape: f32[2,256,128], index: 3, kind: output, shape index: {}]
  %s4 = sld [smem:[#allocation0]]
  $region53: #{discriminator_forward.4} parent=0
    _
  %s6 = ssub.s32 1, %s4
  %s7 = scalar_select 0, %s6, %s4
  loop: start=0, step=1, limit=4
  $region2: #{discriminator_forward.4} parent=0 // loop_pre_header
    _
  $region3: #{discriminator_forward.4} parent=0 // loop_header
    %s9 = sphi 0, %s13
    %p10 = scmp.ge.s32.totalorder %s9, 4
    %s16 = sphi 0, %s28
    %s17 = sphi 0, %s24
    %s18 = sphi 0, %s16
    %s19 = sphi 0, %s17
    %s20 = sphi 0, %s18
    %s21 = sphi 0, %s19
    %s33 = sphi 0, %s35
    %s36 = sphi 0, %s33
    %s37 = sphi 0, %s36
    %s53 = sphi 0, %s37
    %s59 = sphi 0, %s61
    %s62 = sphi 0, %s59
    %s63 = sphi 0, %s62
    %s79 = sphi 0, %s63
    %s83 = sphi 0, %s83
    %s85 = sphi 0, %s83
    %s86 = sphi 0, %s85
    %s100 = sphi 0, %s86
    %s106 = sphi 0, %s108
    %s109 = sphi 0, %s106
    %s110 = sphi 0, %s109
    %s126 = sphi 0, %s110
  $region4: #{discriminator_forward.4} parent=0 // loop_header_branch
    %12 = sbr.rel (%p10) target = $region8
  $region5: #{discriminator_forward.4} parent=0 // loop_body
    %s14 = ssub.s32 %s9, 1
    %s15 = ssub.s32 %s9, 2
    %s22 = sadd.s32 1, %s17
    %p23 = scmp.ge.s32.totalorder %s22, 1
    %s24 = scalar_select %p23, 0, %s22
    %s25 = sadd.s32 1, %s16
    %s26 = scalar_select %p23, %s25, %s16
    %p27 = scmp.ge.s32.totalorder %s26, 2
    %s28 = scalar_select %p27, 0, %s26
    %s29 = ssub.s32 %s16, %s28
    %s30 = ssub.s32 %s17, %s24
    %s31 = sor.u32 %s29, %s30
    %p32 = scmp.eq.s32.totalorder %s31, 0
    %s34 = sadd.s32 %s33, 1
    %s35 = scalar_select %p32, %s33, %s34
    %p38 = pneg %p32
    %p39 = scmp.eq.s32.totalorder %s9, 1
    %p40 = por %p38, %p39
    %p41 = scmp.ne.s32.totalorder %s33, %s36
    %p42 = scmp.eq.s32.totalorder %s9, 0
    %p43 = por %p41, %p42
    %p44 = scmp.ne.s32.totalorder %s33, %s36
    %p45 = scmp.eq.s32.totalorder %s14, 1
    %p46 = por %p44, %p45
    %p47 = scmp.ne.s32.totalorder %s36, %s37
    %p48 = scmp.eq.s32.totalorder %s14, 0
    %p49 = por %p47, %p48
    %p50 = scmp.ne.s32.totalorder %s36, %s37
    %p51 = scmp.eq.s32.totalorder %s15, 1
    %p52 = por %p50, %p51
    %p54 = scmp.ne.s32.totalorder %s37, %s53
    %p55 = scmp.eq.s32.totalorder %s15, 0
    %p56 = por %p54, %p55
    %s57 = ssub.s32 %s17, %s24
    %p58 = scmp.eq.s32.totalorder %s57, 0
    %s60 = sadd.s32 %s59, 1
    %s61 = scalar_select %p58, %s59, %s60
    %p64 = pneg %p58
    %p65 = scmp.eq.s32.totalorder %s9, 1
    %p66 = por %p64, %p65
    %p67 = scmp.ne.s32.totalorder %s59, %s62
    %p68 = scmp.eq.s32.totalorder %s9, 0
    %p69 = por %p67, %p68
    %p70 = scmp.ne.s32.totalorder %s59, %s62
    %p71 = scmp.eq.s32.totalorder %s14, 1
    %p72 = por %p70, %p71
    %p73 = scmp.ne.s32.totalorder %s62, %s63
    %p74 = scmp.eq.s32.totalorder %s14, 0
    %p75 = por %p73, %p74
    %p76 = scmp.ne.s32.totalorder %s62, %s63
    %p77 = scmp.eq.s32.totalorder %s15, 1
    %p78 = por %p76, %p77
    %p80 = scmp.ne.s32.totalorder %s63, %s79
    %p81 = scmp.eq.s32.totalorder %s15, 0
    %p82 = por %p80, %p81
    %s84 = sadd.s32 %s83, 1
    %p87 = scmp.eq.s32.totalorder %s9, 1
    %p88 = scmp.ne.s32.totalorder %s83, %s85
    %p89 = scmp.eq.s32.totalorder %s9, 0
    %p90 = por %p88, %p89
    %p91 = scmp.ne.s32.totalorder %s83, %s85
    %p92 = scmp.eq.s32.totalorder %s14, 1
    %p93 = por %p91, %p92
    %p94 = scmp.ne.s32.totalorder %s85, %s86
    %p95 = scmp.eq.s32.totalorder %s14, 0
    %p96 = por %p94, %p95
    %p97 = scmp.ne.s32.totalorder %s85, %s86
    %p98 = scmp.eq.s32.totalorder %s15, 1
    %p99 = por %p97, %p98
    %p101 = scmp.ne.s32.totalorder %s86, %s100
    %p102 = scmp.eq.s32.totalorder %s15, 0
    %p103 = por %p101, %p102
    %s104 = ssub.s32 %s16, %s28
    %p105 = scmp.eq.s32.totalorder %s104, 0
    %s107 = sadd.s32 %s106, 1
    %s108 = scalar_select %p105, %s106, %s107
    %p111 = pneg %p105
    %p112 = scmp.eq.s32.totalorder %s9, 1
    %p113 = por %p111, %p112
    %p114 = scmp.ne.s32.totalorder %s106, %s109
    %p115 = scmp.eq.s32.totalorder %s9, 0
    %p116 = por %p114, %p115
    %p117 = scmp.ne.s32.totalorder %s106, %s109
    %p118 = scmp.eq.s32.totalorder %s14, 1
    %p119 = por %p117, %p118
    %p120 = scmp.ne.s32.totalorder %s109, %s110
    %p121 = scmp.eq.s32.totalorder %s14, 0
    %p122 = por %p120, %p121
    %p123 = scmp.ne.s32.totalorder %s109, %s110
    %p124 = scmp.eq.s32.totalorder %s15, 1
    %p125 = por %p123, %p124
    %p127 = scmp.ne.s32.totalorder %s110, %s126
    %p128 = scmp.eq.s32.totalorder %s15, 0
    %p129 = por %p127, %p128
    %p130 = scmp.le.s32.totalorder 1, %s9
    %p131 = scmp.lt.s32.totalorder %s9, 3
    %p132 = pnand %p130, %p131
    %p133 = pneg %p132
    // Predicated region
    $region9: #{discriminator_forward.4} parent=5 // pred_check
      _
    $region10: #{discriminator_forward.4} parent=5 // pred_check_branch
      %135 = sbr.rel (%p132) target = $region12
    $region11: #{discriminator_forward.4} parent=5 // pred_region
      %s136 = ssub.s32 %s9, 1
      // Predicated region
      $region13: #{discriminator_forward.4} parent=11 // pred_check
        %p137 = pneg %p75
      $region14: #{discriminator_forward.4} parent=11 // pred_check_branch
        %139 = sbr.rel (%p137) target = $region16
      $region15: #{discriminator_forward.4} parent=11 // pred_region
        %s140 = smul.u32 16, %s19
        %p141 = scmp.lt.s32.totalorder %s140, 15
        %s142 = scalar_select %p141, %s140, 15
        %s143 = smul.addr %s142, 4
        %s144 = scalar_lea.vmem %s1, %s143
        %s145 = smul.u32 16, %s19
      $region16: #{discriminator_forward.4} parent=11 // pred_fallthru
        _
      // Predicated region
      $region17: #{discriminator_forward.4} parent=11 // pred_check
        %p146 = pneg %p96
      $region18: #{discriminator_forward.4} parent=11 // pred_check_branch
        %148 = sbr.rel (%p146) target = $region20
      $region19: #{discriminator_forward.4} parent=11 // pred_region
        _
      $region20: #{discriminator_forward.4} parent=11 // pred_fallthru
        _
    $region12: #{discriminator_forward.4} parent=5 // pred_fallthru
      _
    %p149 = scmp.lt.s32.totalorder %s9, 2
    // Predicated region
    $region21: #{discriminator_forward.4} parent=5 // pred_check
      %p150 = pneg %p149
    $region22: #{discriminator_forward.4} parent=5 // pred_check_branch
      %152 = sbr.rel (%p150) target = $region24
    $region23: #{discriminator_forward.4} parent=5 // pred_region
      // Predicated region
      $region25: #{discriminator_forward.4} parent=23 // pred_check
        %p153 = pneg %p43
      $region26: #{discriminator_forward.4} parent=23 // pred_check_branch
        %155 = sbr.rel (%p153) target = $region28
      $region27: #{discriminator_forward.4} parent=23 // pred_region
        %p156 = scmp.lt.s32.totalorder %s16, 1
        %s157 = scalar_select %p156, %s16, 1
        %p158 = scmp.lt.s32.totalorder %s17, 0
        %s159 = scalar_select %p158, %s17, 0
        %s160 = smul.addr %s157, 32
        %s161 = sadd.s32 %s159, %s160
        %s162 = smul.addr %s161, 4
        %s163 = scalar_lea.vmem %s0, %s162
      $region28: #{discriminator_forward.4} parent=23 // pred_fallthru
        _
    $region24: #{discriminator_forward.4} parent=5 // pred_fallthru
      _
    %p164 = scmp.le.s32.totalorder 1, %s9
    %p165 = scmp.lt.s32.totalorder %s9, 3
    %p166 = pnand %p164, %p165
    %p167 = pneg %p166
    // Predicated region
    $region29: #{discriminator_forward.4} parent=5 // pred_check
      _
    $region30: #{discriminator_forward.4} parent=5 // pred_check_branch
      %169 = sbr.rel (%p166) target = $region32
    $region31: #{discriminator_forward.4} parent=5 // pred_region
      %s170 = ssub.s32 %s9, 1
      %p171 = scmp.lt.s32.totalorder %s18, 1
      %s172 = scalar_select %p171, %s18, 1
      %p173 = scmp.lt.s32.totalorder %s19, 0
      %s174 = scalar_select %p173, %s19, 0
      %s175 = smul.addr %s172, 32
      %s176 = sadd.s32 %s174, %s175
      %s177 = smul.addr %s176, 4
      %s178 = scalar_lea.vmem %s0, %s177
      %p179 = pneg %p49
      %p180 = pneg %p46
      %s181 = smul.u32 16, %s19
      %p182 = scmp.lt.s32.totalorder %s181, 15
      %s183 = scalar_select %p182, %s181, 15
      %s184 = smul.addr %s183, 4
      %s185 = scalar_lea.vmem %s1, %s184
      %p186 = pneg %p75
      %p187 = pneg %p72
      %p188 = pneg %p96
      %p189 = pneg %p93
      %p190 = pneg %p122
      %p191 = pneg %p119
      %p192 = scmp.lt.s32.totalorder %s18, 1
      %s193 = scalar_select %p192, %s18, 1
      %s194 = smul.addr %s193, 32
      %s195 = smul.addr %s194, 8
      %s196 = scalar_lea.vmem %s3, %s195
      %p197 = scmp.lt.s32.totalorder %s18, 1
      %s198 = scalar_select %p197, %s18, 1
      %p199 = scmp.lt.s32.totalorder %s19, 0
      %s200 = scalar_select %p199, %s19, 0
      %s201 = smul.addr %s198, 32
      %s202 = sadd.s32 %s200, %s201
      %s203 = smul.addr %s202, 4
      %s204 = scalar_lea.vmem %s0, %s203
      %s205 = smul.u32 16, %s19
      %p206 = scmp.lt.s32.totalorder %s205, 15
      %s207 = scalar_select %p206, %s205, 15
      %s208 = smul.addr %s207, 4
      %s209 = scalar_lea.vmem %s1, %s208
      %s210 = smul.u32 16, %s19
      %p211 = scmp.lt.s32.totalorder %s18, 1
      %s212 = scalar_select %p211, %s18, 1
      %s213 = smul.addr %s212, 32
      %s214 = smul.addr %s213, 8
      %s215 = scalar_lea.vmem %s3, %s214
      %p216 = scmp.eq.s32.totalorder %s19, 0
      // Predicated region
      $region33: #{discriminator_forward.4} parent=31 // pred_check
        %p217 = pneg %p216
      $region34: #{discriminator_forward.4} parent=31 // pred_check_branch
        %219 = sbr.rel (%p217) target = $region36
      $region35: #{discriminator_forward.4} parent=31 // pred_region
        %220 = vst [vmem:[#allocation2] sm:$0xff] 0.0
        %221 = vst [vmem:[#allocation2 + $0x8] sm:$0xff] 0.0
        %222 = vst [vmem:[#allocation2 + $0x10] sm:$0xff] 0.0
        %223 = vst [vmem:[#allocation2 + $0x18] sm:$0xff] 0.0
        %224 = vst [vmem:[#allocation2 + $0x20] sm:$0xff] 0.0
        %225 = vst [vmem:[#allocation2 + $0x28] sm:$0xff] 0.0
        %226 = vst [vmem:[#allocation2 + $0x30] sm:$0xff] 0.0
        %227 = vst [vmem:[#allocation2 + $0x38] sm:$0xff] 0.0
        %228 = vst [vmem:[#allocation2 + $0x40] sm:$0xff] 0.0
        %229 = vst [vmem:[#allocation2 + $0x48] sm:$0xff] 0.0
        %230 = vst [vmem:[#allocation2 + $0x50] sm:$0xff] 0.0
        %231 = vst [vmem:[#allocation2 + $0x58] sm:$0xff] 0.0
        %232 = vst [vmem:[#allocation2 + $0x60] sm:$0xff] 0.0
        %233 = vst [vmem:[#allocation2 + $0x68] sm:$0xff] 0.0
        %234 = vst [vmem:[#allocation2 + $0x70] sm:$0xff] 0.0
        %235 = vst [vmem:[#allocation2 + $0x78] sm:$0xff] 0.0
        %236 = vst [vmem:[#allocation2 + $0x80] sm:$0xff] 0.0
        %237 = vst [vmem:[#allocation2 + $0x88] sm:$0xff] 0.0
        %238 = vst [vmem:[#allocation2 + $0x90] sm:$0xff] 0.0
        %239 = vst [vmem:[#allocation2 + $0x98] sm:$0xff] 0.0
        %240 = vst [vmem:[#allocation2 + $0xa0] sm:$0xff] 0.0
        %241 = vst [vmem:[#allocation2 + $0xa8] sm:$0xff] 0.0
        %242 = vst [vmem:[#allocation2 + $0xb0] sm:$0xff] 0.0
        %243 = vst [vmem:[#allocation2 + $0xb8] sm:$0xff] 0.0
        %244 = vst [vmem:[#allocation2 + $0xc0] sm:$0xff] 0.0
        %245 = vst [vmem:[#allocation2 + $0xc8] sm:$0xff] 0.0
        %246 = vst [vmem:[#allocation2 + $0xd0] sm:$0xff] 0.0
        %247 = vst [vmem:[#allocation2 + $0xd8] sm:$0xff] 0.0
        %248 = vst [vmem:[#allocation2 + $0xe0] sm:$0xff] 0.0
        %249 = vst [vmem:[#allocation2 + $0xe8] sm:$0xff] 0.0
        %250 = vst [vmem:[#allocation2 + $0xf0] sm:$0xff] 0.0
        %251 = vst [vmem:[#allocation2 + $0xf8] sm:$0xff] 0.0
      $region36: #{discriminator_forward.4} parent=31 // pred_fallthru
        _
      %v252 = vld [vmem:[#allocation2] sm:$0xff]
      %v253 = vld [vmem:[#allocation2 + $0x8] sm:$0xff]
      %v254 = vld [vmem:[#allocation2 + $0x10] sm:$0xff]
      %v255 = vld [vmem:[#allocation2 + $0x18] sm:$0xff]
      %v256 = vld [vmem:[#allocation2 + $0x20] sm:$0xff]
      %v257 = vld [vmem:[#allocation2 + $0x28] sm:$0xff]
      %v258 = vld [vmem:[#allocation2 + $0x30] sm:$0xff]
      %v259 = vld [vmem:[#allocation2 + $0x38] sm:$0xff]
      %v260 = vld [vmem:[#allocation2 + $0x40] sm:$0xff]
      %v261 = vld [vmem:[#allocation2 + $0x48] sm:$0xff]
      %v262 = vld [vmem:[#allocation2 + $0x50] sm:$0xff]
      %v263 = vld [vmem:[#allocation2 + $0x58] sm:$0xff]
      %v264 = vld [vmem:[#allocation2 + $0x60] sm:$0xff]
      %v265 = vld [vmem:[#allocation2 + $0x68] sm:$0xff]
      %v266 = vld [vmem:[#allocation2 + $0x70] sm:$0xff]
      %v267 = vld [vmem:[#allocation2 + $0x78] sm:$0xff]
      %v268 = vld [vmem:[#allocation2 + $0x80] sm:$0xff]
      %v269 = vld [vmem:[#allocation2 + $0x88] sm:$0xff]
      %v270 = vld [vmem:[#allocation2 + $0x90] sm:$0xff]
      %v271 = vld [vmem:[#allocation2 + $0x98] sm:$0xff]
      %v272 = vld [vmem:[#allocation2 + $0xa0] sm:$0xff]
      %v273 = vld [vmem:[#allocation2 + $0xa8] sm:$0xff]
      %v274 = vld [vmem:[#allocation2 + $0xb0] sm:$0xff]
      %v275 = vld [vmem:[#allocation2 + $0xb8] sm:$0xff]
      %v276 = vld [vmem:[#allocation2 + $0xc0] sm:$0xff]
      %v277 = vld [vmem:[#allocation2 + $0xc8] sm:$0xff]
      %v278 = vld [vmem:[#allocation2 + $0xd0] sm:$0xff]
      %v279 = vld [vmem:[#allocation2 + $0xd8] sm:$0xff]
      %v280 = vld [vmem:[#allocation2 + $0xe0] sm:$0xff]
      %v281 = vld [vmem:[#allocation2 + $0xe8] sm:$0xff]
      %v282 = vld [vmem:[#allocation2 + $0xf0] sm:$0xff]
      %v283 = vld [vmem:[#allocation2 + $0xf8] sm:$0xff]
      %v284 = vld [vmem:[%s204] sm:$0xf]
      %v285 = vld [vmem:[%s204 + $0x4] sm:$0xf]
      %v286 = vld [vmem:[%s204 + $0x8] sm:$0xf]
      %v287 = vld [vmem:[%s204 + $0xc] sm:$0xf]
      %v288 = vld [vmem:[%s204 + $0x10] sm:$0xf]
      %v289 = vld [vmem:[%s204 + $0x14] sm:$0xf]
      %v290 = vld [vmem:[%s204 + $0x18] sm:$0xf]
      %v291 = vld [vmem:[%s204 + $0x1c] sm:$0xf]
      %v292 = vld [vmem:[%s204 + $0x20] sm:$0xf]
      %v293 = vld [vmem:[%s204 + $0x24] sm:$0xf]
      %v294 = vld [vmem:[%s204 + $0x28] sm:$0xf]
      %v295 = vld [vmem:[%s204 + $0x2c] sm:$0xf]
      %v296 = vld [vmem:[%s204 + $0x30] sm:$0xf]
      %v297 = vld [vmem:[%s204 + $0x34] sm:$0xf]
      %v298 = vld [vmem:[%s204 + $0x38] sm:$0xf]
      %v299 = vld [vmem:[%s204 + $0x3c] sm:$0xf]
      %v300 = vld [vmem:[%s204 + $0x40] sm:$0xf]
      %v301 = vld [vmem:[%s204 + $0x44] sm:$0xf]
      %v302 = vld [vmem:[%s204 + $0x48] sm:$0xf]
      %v303 = vld [vmem:[%s204 + $0x4c] sm:$0xf]
      %v304 = vld [vmem:[%s204 + $0x50] sm:$0xf]
      %v305 = vld [vmem:[%s204 + $0x54] sm:$0xf]
      %v306 = vld [vmem:[%s204 + $0x58] sm:$0xf]
      %v307 = vld [vmem:[%s204 + $0x5c] sm:$0xf]
      %v308 = vld [vmem:[%s204 + $0x60] sm:$0xf]
      %v309 = vld [vmem:[%s204 + $0x64] sm:$0xf]
      %v310 = vld [vmem:[%s204 + $0x68] sm:$0xf]
      %v311 = vld [vmem:[%s204 + $0x6c] sm:$0xf]
      %v312 = vld [vmem:[%s204 + $0x70] sm:$0xf]
      %v313 = vld [vmem:[%s204 + $0x74] sm:$0xf]
      %v314 = vld [vmem:[%s204 + $0x78] sm:$0xf]
      %v315 = vld [vmem:[%s204 + $0x7c] sm:$0xf]
      %v316 = vld [vmem:[%s209] sm:$0xf]
      %v317 = vld [vmem:[%s209 + $0x4] sm:$0xf]
      %v318 = vld [vmem:[%s209 + $0x8] sm:$0xf]
      %v319 = vld [vmem:[%s209 + $0xc] sm:$0xf]
      %v320 = vld [vmem:[%s209 + $0x10] sm:$0xf]
      %v321 = vld [vmem:[%s209 + $0x14] sm:$0xf]
      %v322 = vld [vmem:[%s209 + $0x18] sm:$0xf]
      %v323 = vld [vmem:[%s209 + $0x1c] sm:$0xf]
      %v324 = vld [vmem:[%s209 + $0x20] sm:$0xf]
      %v325 = vld [vmem:[%s209 + $0x24] sm:$0xf]
      %v326 = vld [vmem:[%s209 + $0x28] sm:$0xf]
      %v327 = vld [vmem:[%s209 + $0x2c] sm:$0xf]
      %v328 = vld [vmem:[%s209 + $0x30] sm:$0xf]
      %v329 = vld [vmem:[%s209 + $0x34] sm:$0xf]
      %v330 = vld [vmem:[%s209 + $0x38] sm:$0xf]
      %v331 = vld [vmem:[%s209 + $0x3c] sm:$0xf]
      %v364 = vunpack.c.l.b16 %v284
      %v365 = vunpack.c.l.b16 %v285
      %v366 = vunpack.c.l.b16 %v286
      %v367 = vunpack.c.l.b16 %v287
      %v368 = vunpack.c.l.b16 %v288
      %v369 = vunpack.c.l.b16 %v289
      %v370 = vunpack.c.l.b16 %v290
      %v371 = vunpack.c.l.b16 %v291
      %v372 = vunpack.c.l.b16 %v292
      %v373 = vunpack.c.l.b16 %v293
      %v374 = vunpack.c.l.b16 %v294
      %v375 = vunpack.c.l.b16 %v295
      %v376 = vunpack.c.l.b16 %v296
      %v377 = vunpack.c.l.b16 %v297
      %v378 = vunpack.c.l.b16 %v298
      %v379 = vunpack.c.l.b16 %v299
      %v380 = vunpack.c.l.b16 %v300
      %v381 = vunpack.c.l.b16 %v301
      %v382 = vunpack.c.l.b16 %v302
      %v383 = vunpack.c.l.b16 %v303
      %v384 = vunpack.c.l.b16 %v304
      %v385 = vunpack.c.l.b16 %v305
      %v386 = vunpack.c.l.b16 %v306
      %v387 = vunpack.c.l.b16 %v307
      %v388 = vunpack.c.l.b16 %v308
      %v389 = vunpack.c.l.b16 %v309
      %v390 = vunpack.c.l.b16 %v310
      %v391 = vunpack.c.l.b16 %v311
      %v392 = vunpack.c.l.b16 %v312
      %v393 = vunpack.c.l.b16 %v313
      %v394 = vunpack.c.l.b16 %v314
      %v395 = vunpack.c.l.b16 %v315
      %v396 = vpack.c.b16 %v365, %v364
      %v397 = vpack.c.b16 %v367, %v366
      %v398 = vpack.c.b16 %v369, %v368
      %v399 = vpack.c.b16 %v371, %v370
      %v400 = vpack.c.b16 %v373, %v372
      %v401 = vpack.c.b16 %v375, %v374
      %v402 = vpack.c.b16 %v377, %v376
      %v403 = vpack.c.b16 %v379, %v378
      %v404 = vpack.c.b16 %v381, %v380
      %v405 = vpack.c.b16 %v383, %v382
      %v406 = vpack.c.b16 %v385, %v384
      %v407 = vpack.c.b16 %v387, %v386
      %v408 = vpack.c.b16 %v389, %v388
      %v409 = vpack.c.b16 %v391, %v390
      %v410 = vpack.c.b16 %v393, %v392
      %v411 = vpack.c.b16 %v395, %v394
      %v444 = vunpack.c.l.b16 %v316
      %v445 = vunpack.c.l.b16 %v317
      %v446 = vunpack.c.l.b16 %v318
      %v447 = vunpack.c.l.b16 %v319
      %v448 = vunpack.c.l.b16 %v320
      %v449 = vunpack.c.l.b16 %v321
      %v450 = vunpack.c.l.b16 %v322
      %v451 = vunpack.c.l.b16 %v323
      %v452 = vunpack.c.l.b16 %v324
      %v453 = vunpack.c.l.b16 %v325
      %v454 = vunpack.c.l.b16 %v326
      %v455 = vunpack.c.l.b16 %v327
      %v456 = vunpack.c.l.b16 %v328
      %v457 = vunpack.c.l.b16 %v329
      %v458 = vunpack.c.l.b16 %v330
      %v459 = vunpack.c.l.b16 %v331
      %v460 = vpack.c.b16 %v445, %v444
      %v461 = vpack.c.b16 %v447, %v446
      %v462 = vpack.c.b16 %v449, %v448
      %v463 = vpack.c.b16 %v451, %v450
      %v464 = vpack.c.b16 %v453, %v452
      %v465 = vpack.c.b16 %v455, %v454
      %v466 = vpack.c.b16 %v457, %v456
      %v467 = vpack.c.b16 %v459, %v458
      %476 = vmatpush.bf16.msra.mxu0 %v467
      %477 = vmatpush.bf16.msra.mxu0 %v466
      %478 = vmatpush.bf16.msra.mxu0 %v465
      %479 = vmatpush.bf16.msra.mxu0 %v464
      %480 = vmatpush.bf16.msra.mxu0 %v463
      %481 = vmatpush.bf16.msra.mxu0 %v462
      %482 = vmatpush.bf16.msra.mxu0 %v461
      %483 = vmatpush.bf16.msra.mxu0 %v460
      %484 = vmatmul.bf16.gmra.mxu0 %v396
      %v485 = vpop.f32.mrf.mxu0
      %v486 = vadd.f32 0.0, %v485
      %v487 = vpop.f32.mrf.mxu0
      %v488 = vadd.f32 0.0, %v487
      %489 = vmatmul.bf16.gmra.mxu0 %v397
      %v490 = vpop.f32.mrf.mxu0
      %v491 = vadd.f32 0.0, %v490
      %v492 = vpop.f32.mrf.mxu0
      %v493 = vadd.f32 0.0, %v492
      %494 = vmatmul.bf16.gmra.mxu0 %v398
      %v495 = vpop.f32.mrf.mxu0
      %v496 = vadd.f32 0.0, %v495
      %v497 = vpop.f32.mrf.mxu0
      %v498 = vadd.f32 0.0, %v497
      %499 = vmatmul.bf16.gmra.mxu0 %v399
      %v500 = vpop.f32.mrf.mxu0
      %v501 = vadd.f32 0.0, %v500
      %v502 = vpop.f32.mrf.mxu0
      %v503 = vadd.f32 0.0, %v502
      %504 = vmatmul.bf16.gmra.mxu0 %v400
      %v505 = vpop.f32.mrf.mxu0
      %v506 = vadd.f32 0.0, %v505
      %v507 = vpop.f32.mrf.mxu0
      %v508 = vadd.f32 0.0, %v507
      %509 = vmatmul.bf16.gmra.mxu0 %v401
      %v510 = vpop.f32.mrf.mxu0
      %v511 = vadd.f32 0.0, %v510
      %v512 = vpop.f32.mrf.mxu0
      %v513 = vadd.f32 0.0, %v512
      %514 = vmatmul.bf16.gmra.mxu0 %v402
      %v515 = vpop.f32.mrf.mxu0
      %v516 = vadd.f32 0.0, %v515
      %v517 = vpop.f32.mrf.mxu0
      %v518 = vadd.f32 0.0, %v517
      %519 = vmatmul.bf16.gmra.mxu0 %v403
      %v520 = vpop.f32.mrf.mxu0
      %v521 = vadd.f32 0.0, %v520
      %v522 = vpop.f32.mrf.mxu0
      %v523 = vadd.f32 0.0, %v522
      %524 = vmatmul.bf16.gmra.mxu0 %v404
      %v525 = vpop.f32.mrf.mxu0
      %v526 = vadd.f32 0.0, %v525
      %v527 = vpop.f32.mrf.mxu0
      %v528 = vadd.f32 0.0, %v527
      %529 = vmatmul.bf16.gmra.mxu0 %v405
      %v530 = vpop.f32.mrf.mxu0
      %v531 = vadd.f32 0.0, %v530
      %v532 = vpop.f32.mrf.mxu0
      %v533 = vadd.f32 0.0, %v532
      %534 = vmatmul.bf16.gmra.mxu0 %v406
      %v535 = vpop.f32.mrf.mxu0
      %v536 = vadd.f32 0.0, %v535
      %v537 = vpop.f32.mrf.mxu0
      %v538 = vadd.f32 0.0, %v537
      %539 = vmatmul.bf16.gmra.mxu0 %v407
      %v540 = vpop.f32.mrf.mxu0
      %v541 = vadd.f32 0.0, %v540
      %v542 = vpop.f32.mrf.mxu0
      %v543 = vadd.f32 0.0, %v542
      %544 = vmatmul.bf16.gmra.mxu0 %v408
      %v545 = vpop.f32.mrf.mxu0
      %v546 = vadd.f32 0.0, %v545
      %v547 = vpop.f32.mrf.mxu0
      %v548 = vadd.f32 0.0, %v547
      %549 = vmatmul.bf16.gmra.mxu0 %v409
      %v550 = vpop.f32.mrf.mxu0
      %v551 = vadd.f32 0.0, %v550
      %v552 = vpop.f32.mrf.mxu0
      %v553 = vadd.f32 0.0, %v552
      %554 = vmatmul.bf16.gmra.mxu0 %v410
      %v555 = vpop.f32.mrf.mxu0
      %v556 = vadd.f32 0.0, %v555
      %v557 = vpop.f32.mrf.mxu0
      %v558 = vadd.f32 0.0, %v557
      %559 = vmatmul.bf16.gmra.mxu0 %v411
      %v560 = vpop.f32.mrf.mxu0
      %v561 = vadd.f32 0.0, %v560
      %v562 = vpop.f32.mrf.mxu0
      %v563 = vadd.f32 0.0, %v562
      %564 = vdwg.mxu0
      %v565 = vadd.f32 %v252, %v486
      %v566 = vadd.f32 %v253, %v488
      %v567 = vadd.f32 %v254, %v491
      %v568 = vadd.f32 %v255, %v493
      %v569 = vadd.f32 %v256, %v496
      %v570 = vadd.f32 %v257, %v498
      %v571 = vadd.f32 %v258, %v501
      %v572 = vadd.f32 %v259, %v503
      %v573 = vadd.f32 %v260, %v506
      %v574 = vadd.f32 %v261, %v508
      %v575 = vadd.f32 %v262, %v511
      %v576 = vadd.f32 %v263, %v513
      %v577 = vadd.f32 %v264, %v516
      %v578 = vadd.f32 %v265, %v518
      %v579 = vadd.f32 %v266, %v521
      %v580 = vadd.f32 %v267, %v523
      %v581 = vadd.f32 %v268, %v526
      %v582 = vadd.f32 %v269, %v528
      %v583 = vadd.f32 %v270, %v531
      %v584 = vadd.f32 %v271, %v533
      %v585 = vadd.f32 %v272, %v536
      %v586 = vadd.f32 %v273, %v538
      %v587 = vadd.f32 %v274, %v541
      %v588 = vadd.f32 %v275, %v543
      %v589 = vadd.f32 %v276, %v546
      %v590 = vadd.f32 %v277, %v548
      %v591 = vadd.f32 %v278, %v551
      %v592 = vadd.f32 %v279, %v553
      %v593 = vadd.f32 %v280, %v556
      %v594 = vadd.f32 %v281, %v558
      %v595 = vadd.f32 %v282, %v561
      %v596 = vadd.f32 %v283, %v563
      %597 = vst [vmem:[#allocation2] sm:$0xff] %v565
      %598 = vst [vmem:[#allocation2 + $0x8] sm:$0xff] %v566
      %599 = vst [vmem:[#allocation2 + $0x10] sm:$0xff] %v567
      %600 = vst [vmem:[#allocation2 + $0x18] sm:$0xff] %v568
      %601 = vst [vmem:[#allocation2 + $0x20] sm:$0xff] %v569
      %602 = vst [vmem:[#allocation2 + $0x28] sm:$0xff] %v570
      %603 = vst [vmem:[#allocation2 + $0x30] sm:$0xff] %v571
      %604 = vst [vmem:[#allocation2 + $0x38] sm:$0xff] %v572
      %605 = vst [vmem:[#allocation2 + $0x40] sm:$0xff] %v573
      %606 = vst [vmem:[#allocation2 + $0x48] sm:$0xff] %v574
      %607 = vst [vmem:[#allocation2 + $0x50] sm:$0xff] %v575
      %608 = vst [vmem:[#allocation2 + $0x58] sm:$0xff] %v576
      %609 = vst [vmem:[#allocation2 + $0x60] sm:$0xff] %v577
      %610 = vst [vmem:[#allocation2 + $0x68] sm:$0xff] %v578
      %611 = vst [vmem:[#allocation2 + $0x70] sm:$0xff] %v579
      %612 = vst [vmem:[#allocation2 + $0x78] sm:$0xff] %v580
      %613 = vst [vmem:[#allocation2 + $0x80] sm:$0xff] %v581
      %614 = vst [vmem:[#allocation2 + $0x88] sm:$0xff] %v582
      %615 = vst [vmem:[#allocation2 + $0x90] sm:$0xff] %v583
      %616 = vst [vmem:[#allocation2 + $0x98] sm:$0xff] %v584
      %617 = vst [vmem:[#allocation2 + $0xa0] sm:$0xff] %v585
      %618 = vst [vmem:[#allocation2 + $0xa8] sm:$0xff] %v586
      %619 = vst [vmem:[#allocation2 + $0xb0] sm:$0xff] %v587
      %620 = vst [vmem:[#allocation2 + $0xb8] sm:$0xff] %v588
      %621 = vst [vmem:[#allocation2 + $0xc0] sm:$0xff] %v589
      %622 = vst [vmem:[#allocation2 + $0xc8] sm:$0xff] %v590
      %623 = vst [vmem:[#allocation2 + $0xd0] sm:$0xff] %v591
      %624 = vst [vmem:[#allocation2 + $0xd8] sm:$0xff] %v592
      %625 = vst [vmem:[#allocation2 + $0xe0] sm:$0xff] %v593
      %626 = vst [vmem:[#allocation2 + $0xe8] sm:$0xff] %v594
      %627 = vst [vmem:[#allocation2 + $0xf0] sm:$0xff] %v595
      %628 = vst [vmem:[#allocation2 + $0xf8] sm:$0xff] %v596
      // Predicated region
      $region37: #{discriminator_forward.4} parent=31 // pred_check
        %p629 = pneg %p216
      $region38: #{discriminator_forward.4} parent=31 // pred_check_branch
        %631 = sbr.rel (%p629) target = $region40
      $region39: #{discriminator_forward.4} parent=31 // pred_region
        %v632 = vld [vmem:[#allocation2] sm:$0xff]
        %v633 = vld [vmem:[#allocation2 + $0x8] sm:$0xff]
        %v634 = vld [vmem:[#allocation2 + $0x10] sm:$0xff]
        %v635 = vld [vmem:[#allocation2 + $0x18] sm:$0xff]
        %v636 = vld [vmem:[#allocation2 + $0x20] sm:$0xff]
        %v637 = vld [vmem:[#allocation2 + $0x28] sm:$0xff]
        %v638 = vld [vmem:[#allocation2 + $0x30] sm:$0xff]
        %v639 = vld [vmem:[#allocation2 + $0x38] sm:$0xff]
        %v640 = vld [vmem:[#allocation2 + $0x40] sm:$0xff]
        %v641 = vld [vmem:[#allocation2 + $0x48] sm:$0xff]
        %v642 = vld [vmem:[#allocation2 + $0x50] sm:$0xff]
        %v643 = vld [vmem:[#allocation2 + $0x58] sm:$0xff]
        %v644 = vld [vmem:[#allocation2 + $0x60] sm:$0xff]
        %v645 = vld [vmem:[#allocation2 + $0x68] sm:$0xff]
        %v646 = vld [vmem:[#allocation2 + $0x70] sm:$0xff]
        %v647 = vld [vmem:[#allocation2 + $0x78] sm:$0xff]
        %v648 = vld [vmem:[#allocation2 + $0x80] sm:$0xff]
        %v649 = vld [vmem:[#allocation2 + $0x88] sm:$0xff]
        %v650 = vld [vmem:[#allocation2 + $0x90] sm:$0xff]
        %v651 = vld [vmem:[#allocation2 + $0x98] sm:$0xff]
        %v652 = vld [vmem:[#allocation2 + $0xa0] sm:$0xff]
        %v653 = vld [vmem:[#allocation2 + $0xa8] sm:$0xff]
        %v654 = vld [vmem:[#allocation2 + $0xb0] sm:$0xff]
        %v655 = vld [vmem:[#allocation2 + $0xb8] sm:$0xff]
        %v656 = vld [vmem:[#allocation2 + $0xc0] sm:$0xff]
        %v657 = vld [vmem:[#allocation2 + $0xc8] sm:$0xff]
        %v658 = vld [vmem:[#allocation2 + $0xd0] sm:$0xff]
        %v659 = vld [vmem:[#allocation2 + $0xd8] sm:$0xff]
        %v660 = vld [vmem:[#allocation2 + $0xe0] sm:$0xff]
        %v661 = vld [vmem:[#allocation2 + $0xe8] sm:$0xff]
        %v662 = vld [vmem:[#allocation2 + $0xf0] sm:$0xff]
        %v663 = vld [vmem:[#allocation2 + $0xf8] sm:$0xff]
        %v664 = vld [vmem:[%s2] sm:$0x1]
        %v666 = vperm.slane %v664, 0
        %v668 = vadd.f32 %v632, %v666
        %v669 = vadd.f32 %v633, %v666
        %v670 = vadd.f32 %v634, %v666
        %v671 = vadd.f32 %v635, %v666
        %v672 = vadd.f32 %v636, %v666
        %v673 = vadd.f32 %v637, %v666
        %v674 = vadd.f32 %v638, %v666
        %v675 = vadd.f32 %v639, %v666
        %v676 = vadd.f32 %v640, %v666
        %v677 = vadd.f32 %v641, %v666
        %v678 = vadd.f32 %v642, %v666
        %v679 = vadd.f32 %v643, %v666
        %v680 = vadd.f32 %v644, %v666
        %v681 = vadd.f32 %v645, %v666
        %v682 = vadd.f32 %v646, %v666
        %v683 = vadd.f32 %v647, %v666
        %v684 = vadd.f32 %v648, %v666
        %v685 = vadd.f32 %v649, %v666
        %v686 = vadd.f32 %v650, %v666
        %v687 = vadd.f32 %v651, %v666
        %v688 = vadd.f32 %v652, %v666
        %v689 = vadd.f32 %v653, %v666
        %v690 = vadd.f32 %v654, %v666
        %v691 = vadd.f32 %v655, %v666
        %v692 = vadd.f32 %v656, %v666
        %v693 = vadd.f32 %v657, %v666
        %v694 = vadd.f32 %v658, %v666
        %v695 = vadd.f32 %v659, %v666
        %v696 = vadd.f32 %v660, %v666
        %v697 = vadd.f32 %v661, %v666
        %v698 = vadd.f32 %v662, %v666
        %v699 = vadd.f32 %v663, %v666
        %vm700 = vcmp.ge.f32.partialorder %v668, 0.0
        %vm701 = vcmp.ge.f32.partialorder %v669, 0.0
        %vm702 = vcmp.ge.f32.partialorder %v670, 0.0
        %vm703 = vcmp.ge.f32.partialorder %v671, 0.0
        %vm704 = vcmp.ge.f32.partialorder %v672, 0.0
        %vm705 = vcmp.ge.f32.partialorder %v673, 0.0
        %vm706 = vcmp.ge.f32.partialorder %v674, 0.0
        %vm707 = vcmp.ge.f32.partialorder %v675, 0.0
        %vm708 = vcmp.ge.f32.partialorder %v676, 0.0
        %vm709 = vcmp.ge.f32.partialorder %v677, 0.0
        %vm710 = vcmp.ge.f32.partialorder %v678, 0.0
        %vm711 = vcmp.ge.f32.partialorder %v679, 0.0
        %vm712 = vcmp.ge.f32.partialorder %v680, 0.0
        %vm713 = vcmp.ge.f32.partialorder %v681, 0.0
        %vm714 = vcmp.ge.f32.partialorder %v682, 0.0
        %vm715 = vcmp.ge.f32.partialorder %v683, 0.0
        %vm716 = vcmp.ge.f32.partialorder %v684, 0.0
        %vm717 = vcmp.ge.f32.partialorder %v685, 0.0
        %vm718 = vcmp.ge.f32.partialorder %v686, 0.0
        %vm719 = vcmp.ge.f32.partialorder %v687, 0.0
        %vm720 = vcmp.ge.f32.partialorder %v688, 0.0
        %vm721 = vcmp.ge.f32.partialorder %v689, 0.0
        %vm722 = vcmp.ge.f32.partialorder %v690, 0.0
        %vm723 = vcmp.ge.f32.partialorder %v691, 0.0
        %vm724 = vcmp.ge.f32.partialorder %v692, 0.0
        %vm725 = vcmp.ge.f32.partialorder %v693, 0.0
        %vm726 = vcmp.ge.f32.partialorder %v694, 0.0
        %vm727 = vcmp.ge.f32.partialorder %v695, 0.0
        %vm728 = vcmp.ge.f32.partialorder %v696, 0.0
        %vm729 = vcmp.ge.f32.partialorder %v697, 0.0
        %vm730 = vcmp.ge.f32.partialorder %v698, 0.0
        %vm731 = vcmp.ge.f32.partialorder %v699, 0.0
        %v732 = vmul.f32 %v668, 0.2
        %v733 = vmul.f32 %v669, 0.2
        %v734 = vmul.f32 %v670, 0.2
        %v735 = vmul.f32 %v671, 0.2
        %v736 = vmul.f32 %v672, 0.2
        %v737 = vmul.f32 %v673, 0.2
        %v738 = vmul.f32 %v674, 0.2
        %v739 = vmul.f32 %v675, 0.2
        %v740 = vmul.f32 %v676, 0.2
        %v741 = vmul.f32 %v677, 0.2
        %v742 = vmul.f32 %v678, 0.2
        %v743 = vmul.f32 %v679, 0.2
        %v744 = vmul.f32 %v680, 0.2
        %v745 = vmul.f32 %v681, 0.2
        %v746 = vmul.f32 %v682, 0.2
        %v747 = vmul.f32 %v683, 0.2
        %v748 = vmul.f32 %v684, 0.2
        %v749 = vmul.f32 %v685, 0.2
        %v750 = vmul.f32 %v686, 0.2
        %v751 = vmul.f32 %v687, 0.2
        %v752 = vmul.f32 %v688, 0.2
        %v753 = vmul.f32 %v689, 0.2
        %v754 = vmul.f32 %v690, 0.2
        %v755 = vmul.f32 %v691, 0.2
        %v756 = vmul.f32 %v692, 0.2
        %v757 = vmul.f32 %v693, 0.2
        %v758 = vmul.f32 %v694, 0.2
        %v759 = vmul.f32 %v695, 0.2
        %v760 = vmul.f32 %v696, 0.2
        %v761 = vmul.f32 %v697, 0.2
        %v762 = vmul.f32 %v698, 0.2
        %v763 = vmul.f32 %v699, 0.2
        %v764 = vsel %vm700, %v668, %v732
        %v765 = vsel %vm701, %v669, %v733
        %v766 = vsel %vm702, %v670, %v734
        %v767 = vsel %vm703, %v671, %v735
        %v768 = vsel %vm704, %v672, %v736
        %v769 = vsel %vm705, %v673, %v737
        %v770 = vsel %vm706, %v674, %v738
        %v771 = vsel %vm707, %v675, %v739
        %v772 = vsel %vm708, %v676, %v740
        %v773 = vsel %vm709, %v677, %v741
        %v774 = vsel %vm710, %v678, %v742
        %v775 = vsel %vm711, %v679, %v743
        %v776 = vsel %vm712, %v680, %v744
        %v777 = vsel %vm713, %v681, %v745
        %v778 = vsel %vm714, %v682, %v746
        %v779 = vsel %vm715, %v683, %v747
        %v780 = vsel %vm716, %v684, %v748
        %v781 = vsel %vm717, %v685, %v749
        %v782 = vsel %vm718, %v686, %v750
        %v783 = vsel %vm719, %v687, %v751
        %v784 = vsel %vm720, %v688, %v752
        %v785 = vsel %vm721, %v689, %v753
        %v786 = vsel %vm722, %v690, %v754
        %v787 = vsel %vm723, %v691, %v755
        %v788 = vsel %vm724, %v692, %v756
        %v789 = vsel %vm725, %v693, %v757
        %v790 = vsel %vm726, %v694, %v758
        %v791 = vsel %vm727, %v695, %v759
        %v792 = vsel %vm728, %v696, %v760
        %v793 = vsel %vm729, %v697, %v761
        %v794 = vsel %vm730, %v698, %v762
        %v795 = vsel %vm731, %v699, %v763
        %796 = vst [vmem:[%s215] sm:$0xff] %v764
        %797 = vst [vmem:[%s215 + $0x8] sm:$0xff] %v765
        %798 = vst [vmem:[%s215 + $0x10] sm:$0xff] %v766
        %799 = vst [vmem:[%s215 + $0x18] sm:$0xff] %v767
        %800 = vst [vmem:[%s215 + $0x20] sm:$0xff] %v768
        %801 = vst [vmem:[%s215 + $0x28] sm:$0xff] %v769
        %802 = vst [vmem:[%s215 + $0x30] sm:$0xff] %v770
        %803 = vst [vmem:[%s215 + $0x38] sm:$0xff] %v771
        %804 = vst [vmem:[%s215 + $0x40] sm:$0xff] %v772
        %805 = vst [vmem:[%s215 + $0x48] sm:$0xff] %v773
        %806 = vst [vmem:[%s215 + $0x50] sm:$0xff] %v774
        %807 = vst [vmem:[%s215 + $0x58] sm:$0xff] %v775
        %808 = vst [vmem:[%s215 + $0x60] sm:$0xff] %v776
        %809 = vst [vmem:[%s215 + $0x68] sm:$0xff] %v777
        %810 = vst [vmem:[%s215 + $0x70] sm:$0xff] %v778
        %811 = vst [vmem:[%s215 + $0x78] sm:$0xff] %v779
        %812 = vst [vmem:[%s215 + $0x80] sm:$0xff] %v780
        %813 = vst [vmem:[%s215 + $0x88] sm:$0xff] %v781
        %814 = vst [vmem:[%s215 + $0x90] sm:$0xff] %v782
        %815 = vst [vmem:[%s215 + $0x98] sm:$0xff] %v783
        %816 = vst [vmem:[%s215 + $0xa0] sm:$0xff] %v784
        %817 = vst [vmem:[%s215 + $0xa8] sm:$0xff] %v785
        %818 = vst [vmem:[%s215 + $0xb0] sm:$0xff] %v786
        %819 = vst [vmem:[%s215 + $0xb8] sm:$0xff] %v787
        %820 = vst [vmem:[%s215 + $0xc0] sm:$0xff] %v788
        %821 = vst [vmem:[%s215 + $0xc8] sm:$0xff] %v789
        %822 = vst [vmem:[%s215 + $0xd0] sm:$0xff] %v790
        %823 = vst [vmem:[%s215 + $0xd8] sm:$0xff] %v791
        %824 = vst [vmem:[%s215 + $0xe0] sm:$0xff] %v792
        %825 = vst [vmem:[%s215 + $0xe8] sm:$0xff] %v793
        %826 = vst [vmem:[%s215 + $0xf0] sm:$0xff] %v794
        %827 = vst [vmem:[%s215 + $0xf8] sm:$0xff] %v795
      $region40: #{discriminator_forward.4} parent=31 // pred_fallthru
        _
      %p828 = scmp.lt.s32.totalorder %s18, 1
      %s829 = scalar_select %p828, %s18, 1
      %s830 = smul.addr %s829, 32
      %s831 = smul.addr %s830, 8
      %s832 = scalar_lea.vmem %s3, %s831
      // Predicated region
      $region41: #{discriminator_forward.4} parent=31 // pred_check
        %p833 = pneg %p119
      $region42: #{discriminator_forward.4} parent=31 // pred_check_branch
        %835 = sbr.rel (%p833) target = $region44
      $region43: #{discriminator_forward.4} parent=31 // pred_region
        _
      $region44: #{discriminator_forward.4} parent=31 // pred_fallthru
        _
    $region32: #{discriminator_forward.4} parent=5 // pred_fallthru
      _
    %p836 = scmp.le.s32.totalorder 2, %s9
    // Predicated region
    $region45: #{discriminator_forward.4} parent=5 // pred_check
      %p837 = pneg %p836
    $region46: #{discriminator_forward.4} parent=5 // pred_check_branch
      %839 = sbr.rel (%p837) target = $region48
    $region47: #{discriminator_forward.4} parent=5 // pred_region
      %s840 = ssub.s32 %s9, 2
      // Predicated region
      $region49: #{discriminator_forward.4} parent=47 // pred_check
        %p841 = pneg %p125
      $region50: #{discriminator_forward.4} parent=47 // pred_check_branch
        %843 = sbr.rel (%p841) target = $region52
      $region51: #{discriminator_forward.4} parent=47 // pred_region
        %p844 = scmp.lt.s32.totalorder %s20, 1
        %s845 = scalar_select %p844, %s20, 1
        %s846 = smul.addr %s845, 32
        %s847 = smul.addr %s846, 8
        %s848 = scalar_lea.vmem %s3, %s847
      $region52: #{discriminator_forward.4} parent=47 // pred_fallthru
        _
    $region48: #{discriminator_forward.4} parent=5 // pred_fallthru
      _
  $region6: #{discriminator_forward.4} parent=0 // loop_footer
    %s13 = sadd.s32 1, %s9
  $region7: #{discriminator_forward.4} parent=0 // loop_footer_branch
    %8 = sbr.rel target = $region3
  $region8: #{discriminator_forward.4} parent=0 // loop_exit
    _

// kernel: discriminator_forward.5
$region0: #{discriminator_forward.5}
  #allocation0 [shape = 'u32[]', space=smem, size = 0x4, offset = 0x4, fixed_abs, tag = 'smem constant byte address 0x4 - core index']
  #allocation1 [shape = 'u32[72,128]{1,0:T(1,128)}', space=vmem, size = 0x9000, scoped, tag = 'internal scratch']
  #allocation2 [shape = 'f32[64,128]{1,0:T(8,128)}', space=vmem, size = 0x8000, scoped, tag = 'scratch operand']
  %s0 = inlined_call_operand.vmem [shape: bf16[2,64,1024], index: 0, kind: input, shape index: {}]
  %s1 = inlined_call_operand.vmem [shape: bf16[1024,128], index: 1, kind: input, shape index: {}]
  %s2 = inlined_call_operand.vmem [shape: f32[1,128], index: 2, kind: input, shape index: {}]
  %s3 = inlined_call_operand.vmem [shape: f32[2,64,128], index: 3, kind: output, shape index: {}]
  %s4 = sld [smem:[#allocation0]]
  $region76: #{discriminator_forward.5} parent=0
    _
  %s6 = ssub.s32 1, %s4
  %s7 = scalar_select 0, %s6, %s4
  $region1: #{discriminator_forward.5} parent=0
    #allocation3 [shape = 'u8[131072]{0}', space=vmem, size = 0x20000, scoped, tag = 'input window, operand 0']
    loop: start=0, step=1, limit=6
    $region2: #{discriminator_forward.5} parent=1 // loop_pre_header
      _
    $region3: #{discriminator_forward.5} parent=1 // loop_header
      %s9 = sphi 0, %s13
      %p10 = scmp.ge.s32.totalorder %s9, 6
      %s16 = sphi 0, %s28
      %s17 = sphi 0, %s24
      %s18 = sphi 0, %s16
      %s19 = sphi 0, %s17
      %s20 = sphi 0, %s18
      %s21 = sphi 0, %s19
      %s33 = sphi 0, %s35
      %s36 = sphi 0, %s33
      %s37 = sphi 0, %s36
      %s53 = sphi 0, %s37
      %s59 = sphi 0, %s61
      %s62 = sphi 0, %s59
      %s63 = sphi 0, %s62
      %s79 = sphi 0, %s63
      %s83 = sphi 0, %s83
      %s85 = sphi 0, %s83
      %s86 = sphi 0, %s85
      %s100 = sphi 0, %s86
      %s106 = sphi 0, %s108
      %s109 = sphi 0, %s106
      %s110 = sphi 0, %s109
      %s126 = sphi 0, %s110
    $region4: #{discriminator_forward.5} parent=1 // loop_header_branch
      %12 = sbr.rel (%p10) target = $region8
    $region5: #{discriminator_forward.5} parent=1 // loop_body
      %s14 = ssub.s32 %s9, 1
      %s15 = ssub.s32 %s9, 2
      %s22 = sadd.s32 1, %s17
      %p23 = scmp.ge.s32.totalorder %s22, 2
      %s24 = scalar_select %p23, 0, %s22
      %s25 = sadd.s32 1, %s16
      %s26 = scalar_select %p23, %s25, %s16
      %p27 = scmp.ge.s32.totalorder %s26, 2
      %s28 = scalar_select %p27, 0, %s26
      %s29 = ssub.s32 %s16, %s28
      %s30 = ssub.s32 %s17, %s24
      %s31 = sor.u32 %s29, %s30
      %p32 = scmp.eq.s32.totalorder %s31, 0
      %s34 = sadd.s32 %s33, 1
      %s35 = scalar_select %p32, %s33, %s34
      %p38 = pneg %p32
      %p39 = scmp.eq.s32.totalorder %s9, 3
      %p40 = por %p38, %p39
      %p41 = scmp.ne.s32.totalorder %s33, %s36
      %p42 = scmp.eq.s32.totalorder %s9, 0
      %p43 = por %p41, %p42
      %p44 = scmp.ne.s32.totalorder %s33, %s36
      %p45 = scmp.eq.s32.totalorder %s14, 3
      %p46 = por %p44, %p45
      %p47 = scmp.ne.s32.totalorder %s36, %s37
      %p48 = scmp.eq.s32.totalorder %s14, 0
      %p49 = por %p47, %p48
      %p50 = scmp.ne.s32.totalorder %s36, %s37
      %p51 = scmp.eq.s32.totalorder %s15, 3
      %p52 = por %p50, %p51
      %p54 = scmp.ne.s32.totalorder %s37, %s53
      %p55 = scmp.eq.s32.totalorder %s15, 0
      %p56 = por %p54, %p55
      %s57 = ssub.s32 %s17, %s24
      %p58 = scmp.eq.s32.totalorder %s57, 0
      %s60 = sadd.s32 %s59, 1
      %s61 = scalar_select %p58, %s59, %s60
      %p64 = pneg %p58
      %p65 = scmp.eq.s32.totalorder %s9, 3
      %p66 = por %p64, %p65
      %p67 = scmp.ne.s32.totalorder %s59, %s62
      %p68 = scmp.eq.s32.totalorder %s9, 0
      %p69 = por %p67, %p68
      %p70 = scmp.ne.s32.totalorder %s59, %s62
      %p71 = scmp.eq.s32.totalorder %s14, 3
      %p72 = por %p70, %p71
      %p73 = scmp.ne.s32.totalorder %s62, %s63
      %p74 = scmp.eq.s32.totalorder %s14, 0
      %p75 = por %p73, %p74
      %p76 = scmp.ne.s32.totalorder %s62, %s63
      %p77 = scmp.eq.s32.totalorder %s15, 3
      %p78 = por %p76, %p77
      %p80 = scmp.ne.s32.totalorder %s63, %s79
      %p81 = scmp.eq.s32.totalorder %s15, 0
      %p82 = por %p80, %p81
      %s84 = sadd.s32 %s83, 1
      %p87 = scmp.eq.s32.totalorder %s9, 3
      %p88 = scmp.ne.s32.totalorder %s83, %s85
      %p89 = scmp.eq.s32.totalorder %s9, 0
      %p90 = por %p88, %p89
      %p91 = scmp.ne.s32.totalorder %s83, %s85
      %p92 = scmp.eq.s32.totalorder %s14, 3
      %p93 = por %p91, %p92
      %p94 = scmp.ne.s32.totalorder %s85, %s86
      %p95 = scmp.eq.s32.totalorder %s14, 0
      %p96 = por %p94, %p95
      %p97 = scmp.ne.s32.totalorder %s85, %s86
      %p98 = scmp.eq.s32.totalorder %s15, 3
      %p99 = por %p97, %p98
      %p101 = scmp.ne.s32.totalorder %s86, %s100
      %p102 = scmp.eq.s32.totalorder %s15, 0
      %p103 = por %p101, %p102
      %s104 = ssub.s32 %s16, %s28
      %p105 = scmp.eq.s32.totalorder %s104, 0
      %s107 = sadd.s32 %s106, 1
      %s108 = scalar_select %p105, %s106, %s107
      %p111 = pneg %p105
      %p112 = scmp.eq.s32.totalorder %s9, 3
      %p113 = por %p111, %p112
      %p114 = scmp.ne.s32.totalorder %s106, %s109
      %p115 = scmp.eq.s32.totalorder %s9, 0
      %p116 = por %p114, %p115
      %p117 = scmp.ne.s32.totalorder %s106, %s109
      %p118 = scmp.eq.s32.totalorder %s14, 3
      %p119 = por %p117, %p118
      %p120 = scmp.ne.s32.totalorder %s109, %s110
      %p121 = scmp.eq.s32.totalorder %s14, 0
      %p122 = por %p120, %p121
      %p123 = scmp.ne.s32.totalorder %s109, %s110
      %p124 = scmp.eq.s32.totalorder %s15, 3
      %p125 = por %p123, %p124
      %p127 = scmp.ne.s32.totalorder %s110, %s126
      %p128 = scmp.eq.s32.totalorder %s15, 0
      %p129 = por %p127, %p128
      %p130 = scmp.le.s32.totalorder 1, %s9
      %p131 = scmp.lt.s32.totalorder %s9, 5
      %p132 = pnand %p130, %p131
      %p133 = pneg %p132
      // Predicated region
      $region9: #{discriminator_forward.5} parent=5 // pred_check
        _
      $region10: #{discriminator_forward.5} parent=5 // pred_check_branch
        %135 = sbr.rel (%p132) target = $region12
      $region11: #{discriminator_forward.5} parent=5 // pred_region
        %s136 = ssub.s32 %s9, 1
        // Predicated region
        $region13: #{discriminator_forward.5} parent=11 // pred_check
          %p137 = pneg %p96
        $region14: #{discriminator_forward.5} parent=11 // pred_check_branch
          %139 = sbr.rel (%p137) target = $region16
        $region15: #{discriminator_forward.5} parent=11 // pred_region
          _
        $region16: #{discriminator_forward.5} parent=11 // pred_fallthru
          _
      $region12: #{discriminator_forward.5} parent=5 // pred_fallthru
        _
      %p140 = scmp.lt.s32.totalorder %s9, 4
      // Predicated region
      $region17: #{discriminator_forward.5} parent=5 // pred_check
        %p141 = pneg %p140
      $region18: #{discriminator_forward.5} parent=5 // pred_check_branch
        %143 = sbr.rel (%p141) target = $region20
      $region19: #{discriminator_forward.5} parent=5 // pred_region
        // Predicated region
        $region21: #{discriminator_forward.5} parent=19 // pred_check
          %p144 = pneg %p43
        $region22: #{discriminator_forward.5} parent=19 // pred_check_branch
          %146 = sbr.rel (%p144) target = $region24
        $region23: #{discriminator_forward.5} parent=19 // pred_region
          %s147 = sand.u32 %s33, 1
          %s148 = sand.u32 %s33, 1
          %s149 = smul.addr %s148, 128
          %s150 = scalar_lea.vmem [#allocation3], %s149
          %s151 = smul.u32 4, %s17
          %s152 = smul.addr %s16, 64
          %s153 = sadd.s32 %s151, %s152
          %s154 = smul.addr %s153, 4
          %s155 = scalar_lea.vmem %s0, %s154
          // Predicated region
          $region25: #{discriminator_forward.5} parent=23 // pred_check
            _
          $region26: #{discriminator_forward.5} parent=23 // pred_check_branch
            %157 = sbr.rel (0) target = $region28
          $region27: #{discriminator_forward.5} parent=23 // pred_region
            // Predicated region
            $region29: #{discriminator_forward.5} parent=27 // pred_check
              _
            $region30: #{discriminator_forward.5} parent=27 // pred_check_branch
              %159 = sbr.rel (0) target = $region32
            $region31: #{discriminator_forward.5} parent=27 // pred_region
              loop: start=0, step=1, limit=1
              $region33: #{discriminator_forward.5} parent=31 // loop_pre_header
                _
              $region34: #{discriminator_forward.5} parent=31 // loop_header
                %s161 = sphi 0, %s165
                %p162 = scmp.ge.s32.totalorder %s161, 1
                %s166 = sphi %s155, %s155
                %s167 = sphi %s150, %s150
              $region35: #{discriminator_forward.5} parent=31 // loop_header_branch
                %164 = sbr.rel (%p162) target = $region39
              $region36: #{discriminator_forward.5} parent=31 // loop_body
                %v168 = vld [vmem:[%s166] sm:$0xff]
                %169 = vst [vmem:[%s167] sm:$0xff] %v168
                %v170 = vld [vmem:[%s166 + $0x8] sm:$0xff]
                %171 = vst [vmem:[%s167 + $0x8] sm:$0xff] %v170
                %v172 = vld [vmem:[%s166 + $0x20] sm:$0xff]
                %173 = vst [vmem:[%s167 + $0x10] sm:$0xff] %v172
                %v174 = vld [vmem:[%s166 + $0x28] sm:$0xff]
                %175 = vst [vmem:[%s167 + $0x18] sm:$0xff] %v174
                %v176 = vld [vmem:[%s166 + $0x40] sm:$0xff]
                %177 = vst [vmem:[%s167 + $0x20] sm:$0xff] %v176
                %v178 = vld [vmem:[%s166 + $0x48] sm:$0xff]
                %179 = vst [vmem:[%s167 + $0x28] sm:$0xff] %v178
                %v180 = vld [vmem:[%s166 + $0x60] sm:$0xff]
                %181 = vst [vmem:[%s167 + $0x30] sm:$0xff] %v180
                %v182 = vld [vmem:[%s166 + $0x68] sm:$0xff]
                %183 = vst [vmem:[%s167 + $0x38] sm:$0xff] %v182
                %v184 = vld [vmem:[%s166 + $0x80] sm:$0xff]
                %185 = vst [vmem:[%s167 + $0x40] sm:$0xff] %v184
                %v186 = vld [vmem:[%s166 + $0x88] sm:$0xff]
                %187 = vst [vmem:[%s167 + $0x48] sm:$0xff] %v186
                %v188 = vld [vmem:[%s166 + $0xa0] sm:$0xff]
                %189 = vst [vmem:[%s167 + $0x50] sm:$0xff] %v188
                %v190 = vld [vmem:[%s166 + $0xa8] sm:$0xff]
                %191 = vst [vmem:[%s167 + $0x58] sm:$0xff] %v190
                %v192 = vld [vmem:[%s166 + $0xc0] sm:$0xff]
                %193 = vst [vmem:[%s167 + $0x60] sm:$0xff] %v192
                %v194 = vld [vmem:[%s166 + $0xc8] sm:$0xff]
                %195 = vst [vmem:[%s167 + $0x68] sm:$0xff] %v194
                %v196 = vld [vmem:[%s166 + $0xe0] sm:$0xff]
                %197 = vst [vmem:[%s167 + $0x70] sm:$0xff] %v196
                %v198 = vld [vmem:[%s166 + $0xe8] sm:$0xff]
                %199 = vst [vmem:[%s167 + $0x78] sm:$0xff] %v198
              $region37: #{discriminator_forward.5} parent=31 // loop_footer
                %s165 = sadd.s32 1, %s161
              $region38: #{discriminator_forward.5} parent=31 // loop_footer_branch
                %160 = sbr.rel target = $region34
              $region39: #{discriminator_forward.5} parent=31 // loop_exit
                _
            $region32: #{discriminator_forward.5} parent=27 // pred_fallthru
              _
            // Predicated region
            $region40: #{discriminator_forward.5} parent=27 // pred_check
              _
            $region41: #{discriminator_forward.5} parent=27 // pred_check_branch
              %201 = sbr.rel target = $region43
            $region42: #{discriminator_forward.5} parent=27 // pred_region
              _
            $region43: #{discriminator_forward.5} parent=27 // pred_fallthru
              _
          $region28: #{discriminator_forward.5} parent=23 // pred_fallthru
            _
          %202 = vnop
        $region24: #{discriminator_forward.5} parent=19 // pred_fallthru
          _
        // Predicated region
        $region44: #{discriminator_forward.5} parent=19 // pred_check
          %p203 = pneg %p69
        $region45: #{discriminator_forward.5} parent=19 // pred_check_branch
          %205 = sbr.rel (%p203) target = $region47
        $region46: #{discriminator_forward.5} parent=19 // pred_region
          %s206 = smul.u32 64, %s17
          %p207 = scmp.lt.s32.totalorder %s206, 127
          %s208 = scalar_select %p207, %s206, 127
          %s209 = smul.addr %s208, 4
          %s210 = scalar_lea.vmem %s1, %s209
          %s211 = smul.u32 64, %s17
        $region47: #{discriminator_forward.5} parent=19 // pred_fallthru
          _
      $region20: #{discriminator_forward.5} parent=5 // pred_fallthru
        _
      %p212 = scmp.le.s32.totalorder 1, %s9
      %p213 = scmp.lt.s32.totalorder %s9, 5
      %p214 = pnand %p212, %p213
      %p215 = pneg %p214
      // Predicated region
      $region48: #{discriminator_forward.5} parent=5 // pred_check
        _
      $region49: #{discriminator_forward.5} parent=5 // pred_check_branch
        %217 = sbr.rel (%p214) target = $region51
      $region50: #{discriminator_forward.5} parent=5 // pred_region
        %s218 = ssub.s32 %s9, 1
        %s219 = sand.u32 %s36, 1
        %s220 = sand.u32 %s36, 1
        %s221 = smul.addr %s220, 128
        %s222 = scalar_lea.vmem [#allocation3], %s221
        // Predicated region
        $region52: #{discriminator_forward.5} parent=50 // pred_check
          %p223 = pneg %p49
        $region53: #{discriminator_forward.5} parent=50 // pred_check_branch
          %225 = sbr.rel (%p223) target = $region55
        $region54: #{discriminator_forward.5} parent=50 // pred_region
          _
        $region55: #{discriminator_forward.5} parent=50 // pred_fallthru
          _
        %s226 = sand.u32 %s36, 1
        %s227 = sand.u32 %s36, 1
        %s228 = smul.addr %s227, 128
        %s229 = scalar_lea.vmem [#allocation3], %s228
        %p230 = pneg %p49
        %p231 = pneg %p46
        %s232 = smul.u32 64, %s19
        %p233 = scmp.lt.s32.totalorder %s232, 127
        %s234 = scalar_select %p233, %s232, 127
        %s235 = smul.addr %s234, 4
        %s236 = scalar_lea.vmem %s1, %s235
        %p237 = pneg %p75
        %p238 = pneg %p72
        %p239 = pneg %p96
        %p240 = pneg %p93
        %p241 = pneg %p122
        %p242 = pneg %p119
        %p243 = scmp.lt.s32.totalorder %s18, 1
        %s244 = scalar_select %p243, %s18, 1
        %s245 = smul.addr %s244, 8
        %s246 = smul.addr %s245, 8
        %s247 = scalar_lea.vmem %s3, %s246
        %s248 = smul.u32 4, %s19
        %s249 = smul.u32 64, %s19
        %p250 = scmp.lt.s32.totalorder %s249, 127
        %s251 = scalar_select %p250, %s249, 127
        %s252 = smul.addr %s251, 4
        %s253 = scalar_lea.vmem %s1, %s252
        %s254 = smul.u32 64, %s19
        %p255 = scmp.lt.s32.totalorder %s18, 1
        %s256 = scalar_select %p255, %s18, 1
        %s257 = smul.addr %s256, 8
        %s258 = smul.addr %s257, 8
        %s259 = scalar_lea.vmem %s3, %s258
        %p260 = scmp.eq.s32.totalorder %s19, 0
        // Predicated region
        $region56: #{discriminator_forward.5} parent=50 // pred_check
          %p261 = pneg %p260
        $region57: #{discriminator_forward.5} parent=50 // pred_check_branch
          %263 = sbr.rel (%p261) target = $region59
        $region58: #{discriminator_forward.5} parent=50 // pred_region
          %264 = vst [vmem:[#allocation2] sm:$0xff] 0.0
          %265 = vst [vmem:[#allocation2 + $0x8] sm:$0xff] 0.0
          %266 = vst [vmem:[#allocation2 + $0x10] sm:$0xff] 0.0
          %267 = vst [vmem:[#allocation2 + $0x18] sm:$0xff] 0.0
          %268 = vst [vmem:[#allocation2 + $0x20] sm:$0xff] 0.0
          %269 = vst [vmem:[#allocation2 + $0x28] sm:$0xff] 0.0
          %270 = vst [vmem:[#allocation2 + $0x30] sm:$0xff] 0.0
          %271 = vst [vmem:[#allocation2 + $0x38] sm:$0xff] 0.0
        $region59: #{discriminator_forward.5} parent=50 // pred_fallthru
          _
        %v272 = vld [vmem:[#allocation2] sm:$0xff]
        %v273 = vld [vmem:[#allocation2 + $0x8] sm:$0xff]
        %v274 = vld [vmem:[#allocation2 + $0x10] sm:$0xff]
        %v275 = vld [vmem:[#allocation2 + $0x18] sm:$0xff]
        %v276 = vld [vmem:[#allocation2 + $0x20] sm:$0xff]
        %v277 = vld [vmem:[#allocation2 + $0x28] sm:$0xff]
        %v278 = vld [vmem:[#allocation2 + $0x30] sm:$0xff]
        %v279 = vld [vmem:[#allocation2 + $0x38] sm:$0xff]
        %v280 = vld [vmem:[%s222] sm:$0xff]
        %v281 = vld [vmem:[%s222 + $0x8] sm:$0xff]
        %v282 = vld [vmem:[%s222 + $0x10] sm:$0xff]
        %v283 = vld [vmem:[%s222 + $0x18] sm:$0xff]
        %v284 = vld [vmem:[%s222 + $0x20] sm:$0xff]
        %v285 = vld [vmem:[%s222 + $0x28] sm:$0xff]
        %v286 = vld [vmem:[%s222 + $0x30] sm:$0xff]
        %v287 = vld [vmem:[%s222 + $0x38] sm:$0xff]
        %v288 = vld [vmem:[%s222 + $0x40] sm:$0xff]
        %v289 = vld [vmem:[%s222 + $0x48] sm:$0xff]
        %v290 = vld [vmem:[%s222 + $0x50] sm:$0xff]
        %v291 = vld [vmem:[%s222 + $0x58] sm:$0xff]
        %v292 = vld [vmem:[%s222 + $0x60] sm:$0xff]
        %v293 = vld [vmem:[%s222 + $0x68] sm:$0xff]
        %v294 = vld [vmem:[%s222 + $0x70] sm:$0xff]
        %v295 = vld [vmem:[%s222 + $0x78] sm:$0xff]
        %v296 = vld [vmem:[%s253] sm:$0xf]
        %v297 = vld [vmem:[%s253 + $0x4] sm:$0xf]
        %v298 = vld [vmem:[%s253 + $0x8] sm:$0xf]
        %v299 = vld [vmem:[%s253 + $0xc] sm:$0xf]
        %v300 = vld [vmem:[%s253 + $0x10] sm:$0xf]
        %v301 = vld [vmem:[%s253 + $0x14] sm:$0xf]
        %v302 = vld [vmem:[%s253 + $0x18] sm:$0xf]
        %v303 = vld [vmem:[%s253 + $0x1c] sm:$0xf]
        %v304 = vld [vmem:[%s253 + $0x20] sm:$0xf]
        %v305 = vld [vmem:[%s253 + $0x24] sm:$0xf]
        %v306 = vld [vmem:[%s253 + $0x28] sm:$0xf]
        %v307 = vld [vmem:[%s253 + $0x2c] sm:$0xf]
        %v308 = vld [vmem:[%s253 + $0x30] sm:$0xf]
        %v309 = vld [vmem:[%s253 + $0x34] sm:$0xf]
        %v310 = vld [vmem:[%s253 + $0x38] sm:$0xf]
        %v311 = vld [vmem:[%s253 + $0x3c] sm:$0xf]
        %v312 = vld [vmem:[%s253 + $0x40] sm:$0xf]
        %v313 = vld [vmem:[%s253 + $0x44] sm:$0xf]
        %v314 = vld [vmem:[%s253 + $0x48] sm:$0xf]
        %v315 = vld [vmem:[%s253 + $0x4c] sm:$0xf]
        %v316 = vld [vmem:[%s253 + $0x50] sm:$0xf]
        %v317 = vld [vmem:[%s253 + $0x54] sm:$0xf]
        %v318 = vld [vmem:[%s253 + $0x58] sm:$0xf]
        %v319 = vld [vmem:[%s253 + $0x5c] sm:$0xf]
        %v320 = vld [vmem:[%s253 + $0x60] sm:$0xf]
        %v321 = vld [vmem:[%s253 + $0x64] sm:$0xf]
        %v322 = vld [vmem:[%s253 + $0x68] sm:$0xf]
        %v323 = vld [vmem:[%s253 + $0x6c] sm:$0xf]
        %v324 = vld [vmem:[%s253 + $0x70] sm:$0xf]
        %v325 = vld [vmem:[%s253 + $0x74] sm:$0xf]
        %v326 = vld [vmem:[%s253 + $0x78] sm:$0xf]
        %v327 = vld [vmem:[%s253 + $0x7c] sm:$0xf]
        %v328 = vld [vmem:[%s253 + $0x80] sm:$0xf]
        %v329 = vld [vmem:[%s253 + $0x84] sm:$0xf]
        %v330 = vld [vmem:[%s253 + $0x88] sm:$0xf]
        %v331 = vld [vmem:[%s253 + $0x8c] sm:$0xf]
        %v332 = vld [vmem:[%s253 + $0x90] sm:$0xf]
        %v333 = vld [vmem:[%s253 + $0x94] sm:$0xf]
        %v334 = vld [vmem:[%s253 + $0x98] sm:$0xf]
        %v335 = vld [vmem:[%s253 + $0x9c] sm:$0xf]
        %v336 = vld [vmem:[%s253 + $0xa0] sm:$0xf]
        %v337 = vld [vmem:[%s253 + $0xa4] sm:$0xf]
        %v338 = vld [vmem:[%s253 + $0xa8] sm:$0xf]
        %v339 = vld [vmem:[%s253 + $0xac] sm:$0xf]
        %v340 = vld [vmem:[%s253 + $0xb0] sm:$0xf]
        %v341 = vld [vmem:[%s253 + $0xb4] sm:$0xf]
        %v342 = vld [vmem:[%s253 + $0xb8] sm:$0xf]
        %v343 = vld [vmem:[%s253 + $0xbc] sm:$0xf]
        %v344 = vld [vmem:[%s253 + $0xc0] sm:$0xf]
        %v345 = vld [vmem:[%s253 + $0xc4] sm:$0xf]
        %v346 = vld [vmem:[%s253 + $0xc8] sm:$0xf]
        %v347 = vld [vmem:[%s253 + $0xcc] sm:$0xf]
        %v348 = vld [vmem:[%s253 + $0xd0] sm:$0xf]
        %v349 = vld [vmem:[%s253 + $0xd4] sm:$0xf]
        %v350 = vld [vmem:[%s253 + $0xd8] sm:$0xf]
        %v351 = vld [vmem:[%s253 + $0xdc] sm:$0xf]
        %v352 = vld [vmem:[%s253 + $0xe0] sm:$0xf]
        %v353 = vld [vmem:[%s253 + $0xe4] sm:$0xf]
        %v354 = vld [vmem:[%s253 + $0xe8] sm:$0xf]
        %v355 = vld [vmem:[%s253 + $0xec] sm:$0xf]
        %v356 = vld [vmem:[%s253 + $0xf0] sm:$0xf]
        %v357 = vld [vmem:[%s253 + $0xf4] sm:$0xf]
        %v358 = vld [vmem:[%s253 + $0xf8] sm:$0xf]
        %v359 = vld [vmem:[%s253 + $0xfc] sm:$0xf]
        %v376 = vunpack.c.l.b16 %v280
        %v377 = vunpack.c.h.b16 %v280
        %v378 = vunpack.c.l.b16 %v281
        %v379 = vunpack.c.h.b16 %v281
        %v380 = vunpack.c.l.b16 %v282
        %v381 = vunpack.c.h.b16 %v282
        %v382 = vunpack.c.l.b16 %v283
        %v383 = vunpack.c.h.b16 %v283
        %v384 = vunpack.c.l.b16 %v284
        %v385 = vunpack.c.h.b16 %v284
        %v386 = vunpack.c.l.b16 %v285
        %v387 = vunpack.c.h.b16 %v285
        %v388 = vunpack.c.l.b16 %v286
        %v389 = vunpack.c.h.b16 %v286
        %v390 = vunpack.c.l.b16 %v287
        %v391 = vunpack.c.h.b16 %v287
        %v392 = vunpack.c.l.b16 %v288
        %v393 = vunpack.c.h.b16 %v288
        %v394 = vunpack.c.l.b16 %v289
        %v395 = vunpack.c.h.b16 %v289
        %v396 = vunpack.c.l.b16 %v290
        %v397 = vunpack.c.h.b16 %v290
        %v398 = vunpack.c.l.b16 %v291
        %v399 = vunpack.c.h.b16 %v291
        %v400 = vunpack.c.l.b16 %v292
        %v401 = vunpack.c.h.b16 %v292
        %v402 = vunpack.c.l.b16 %v293
        %v403 = vunpack.c.h.b16 %v293
        %v404 = vunpack.c.l.b16 %v294
        %v405 = vunpack.c.h.b16 %v294
        %v406 = vunpack.c.l.b16 %v295
        %v407 = vunpack.c.h.b16 %v295
        %v408 = vpack.c.b16 %v380, %v376
        %v409 = vpack.c.b16 %v381, %v377
        %v410 = vpack.c.b16 %v382, %v378
        %v411 = vpack.c.b16 %v383, %v379
        %v412 = vpack.c.b16 %v388, %v384
        %v413 = vpack.c.b16 %v389, %v385
        %v414 = vpack.c.b16 %v390, %v386
        %v415 = vpack.c.b16 %v391, %v387
        %v416 = vpack.c.b16 %v396, %v392
        %v417 = vpack.c.b16 %v397, %v393
        %v418 = vpack.c.b16 %v398, %v394
        %v419 = vpack.c.b16 %v399, %v395
        %v420 = vpack.c.b16 %v404, %v400
        %v421 = vpack.c.b16 %v405, %v401
        %v422 = vpack.c.b16 %v406, %v402
        %v423 = vpack.c.b16 %v407, %v403
        %v504 = vunpack.c.l.b16 %v296
        %v505 = vunpack.c.l.b16 %v297
        %v506 = vunpack.c.l.b16 %v298
        %v507 = vunpack.c.l.b16 %v299
        %v508 = vunpack.c.l.b16 %v300
        %v509 = vunpack.c.l.b16 %v301
        %v510 = vunpack.c.l.b16 %v302
        %v511 = vunpack.c.l.b16 %v303
        %v512 = vunpack.c.l.b16 %v304
        %v513 = vunpack.c.l.b16 %v305
        %v514 = vunpack.c.l.b16 %v306
        %v515 = vunpack.c.l.b16 %v307
        %v516 = vunpack.c.l.b16 %v308
        %v517 = vunpack.c.l.b16 %v309
        %v518 = vunpack.c.l.b16 %v310
        %v519 = vunpack.c.l.b16 %v311
        %v520 = vunpack.c.l.b16 %v312
        %v521 = vunpack.c.l.b16 %v313
        %v522 = vunpack.c.l.b16 %v314
        %v523 = vunpack.c.l.b16 %v315
        %v524 = vunpack.c.l.b16 %v316
        %v525 = vunpack.c.l.b16 %v317
        %v526 = vunpack.c.l.b16 %v318
        %v527 = vunpack.c.l.b16 %v319
        %v528 = vunpack.c.l.b16 %v320
        %v529 = vunpack.c.l.b16 %v321
        %v530 = vunpack.c.l.b16 %v322
        %v531 = vunpack.c.l.b16 %v323
        %v532 = vunpack.c.l.b16 %v324
        %v533 = vunpack.c.l.b16 %v325
        %v534 = vunpack.c.l.b16 %v326
        %v535 = vunpack.c.l.b16 %v327
        %v536 = vunpack.c.l.b16 %v328
        %v537 = vunpack.c.l.b16 %v329
        %v538 = vunpack.c.l.b16 %v330
        %v539 = vunpack.c.l.b16 %v331
        %v540 = vunpack.c.l.b16 %v332
        %v541 = vunpack.c.l.b16 %v333
        %v542 = vunpack.c.l.b16 %v334
        %v543 = vunpack.c.l.b16 %v335
        %v544 = vunpack.c.l.b16 %v336
        %v545 = vunpack.c.l.b16 %v337
        %v546 = vunpack.c.l.b16 %v338
        %v547 = vunpack.c.l.b16 %v339
        %v548 = vunpack.c.l.b16 %v340
        %v549 = vunpack.c.l.b16 %v341
        %v550 = vunpack.c.l.b16 %v342
        %v551 = vunpack.c.l.b16 %v343
        %v552 = vunpack.c.l.b16 %v344
        %v553 = vunpack.c.l.b16 %v345
        %v554 = vunpack.c.l.b16 %v346
        %v555 = vunpack.c.l.b16 %v347
        %v556 = vunpack.c.l.b16 %v348
        %v557 = vunpack.c.l.b16 %v349
        %v558 = vunpack.c.l.b16 %v350
        %v559 = vunpack.c.l.b16 %v351
        %v560 = vunpack.c.l.b16 %v352
        %v561 = vunpack.c.l.b16 %v353
        %v562 = vunpack.c.l.b16 %v354
        %v563 = vunpack.c.l.b16 %v355
        %v564 = vunpack.c.l.b16 %v356
        %v565 = vunpack.c.l.b16 %v357
        %v566 = vunpack.c.l.b16 %v358
        %v567 = vunpack.c.l.b16 %v359
        %v568 = vpack.c.b16 %v505, %v504
        %v569 = vpack.c.b16 %v507, %v506
        %v570 = vpack.c.b16 %v509, %v508
        %v571 = vpack.c.b16 %v511, %v510
        %v572 = vpack.c.b16 %v513, %v512
        %v573 = vpack.c.b16 %v515, %v514
        %v574 = vpack.c.b16 %v517, %v516
        %v575 = vpack.c.b16 %v519, %v518
        %v576 = vpack.c.b16 %v521, %v520
        %v577 = vpack.c.b16 %v523, %v522
        %v578 = vpack.c.b16 %v525, %v524
        %v579 = vpack.c.b16 %v527, %v526
        %v580 = vpack.c.b16 %v529, %v528
        %v581 = vpack.c.b16 %v531, %v530
        %v582 = vpack.c.b16 %v533, %v532
        %v583 = vpack.c.b16 %v535, %v534
        %v584 = vpack.c.b16 %v537, %v536
        %v585 = vpack.c.b16 %v539, %v538
        %v586 = vpack.c.b16 %v541, %v540
        %v587 = vpack.c.b16 %v543, %v542
        %v588 = vpack.c.b16 %v545, %v544
        %v589 = vpack.c.b16 %v547, %v546
        %v590 = vpack.c.b16 %v549, %v548
        %v591 = vpack.c.b16 %v551, %v550
        %v592 = vpack.c.b16 %v553, %v552
        %v593 = vpack.c.b16 %v555, %v554
        %v594 = vpack.c.b16 %v557, %v556
        %v595 = vpack.c.b16 %v559, %v558
        %v596 = vpack.c.b16 %v561, %v560
        %v597 = vpack.c.b16 %v563, %v562
        %v598 = vpack.c.b16 %v565, %v564
        %v599 = vpack.c.b16 %v567, %v566
        %632 = vmatpush.bf16.msra.mxu0 %v575
        %633 = vmatpush.bf16.msra.mxu0 %v574
        %634 = vmatpush.bf16.msra.mxu0 %v573
        %635 = vmatpush.bf16.msra.mxu0 %v572
        %636 = vmatpush.bf16.msra.mxu0 %v571
        %637 = vmatpush.bf16.msra.mxu0 %v570
        %638 = vmatpush.bf16.msra.mxu0 %v569
        %639 = vmatpush.bf16.msra.mxu0 %v568
        %640 = vmatmul.bf16.gmra.mxu0 %v408
        %v641 = vpop.f32.mrf.mxu0
        %v642 = vadd.f32 0.0, %v641
        %v643 = vpop.f32.mrf.mxu0
        %v644 = vadd.f32 0.0, %v643
        %645 = vmatmul.bf16.gmra.mxu0 %v412
        %v646 = vpop.f32.mrf.mxu0
        %v647 = vadd.f32 0.0, %v646
        %v648 = vpop.f32.mrf.mxu0
        %v649 = vadd.f32 0.0, %v648
        %650 = vmatmul.bf16.gmra.mxu0 %v416
        %v651 = vpop.f32.mrf.mxu0
        %v652 = vadd.f32 0.0, %v651
        %v653 = vpop.f32.mrf.mxu0
        %v654 = vadd.f32 0.0, %v653
        %655 = vmatmul.bf16.gmra.mxu0 %v420
        %v656 = vpop.f32.mrf.mxu0
        %v657 = vadd.f32 0.0, %v656
        %v658 = vpop.f32.mrf.mxu0
        %v659 = vadd.f32 0.0, %v658
        %660 = vdwg.mxu0
        %661 = vmatpush.bf16.msra.mxu0 %v583
        %662 = vmatpush.bf16.msra.mxu0 %v582
        %663 = vmatpush.bf16.msra.mxu0 %v581
        %664 = vmatpush.bf16.msra.mxu0 %v580
        %665 = vmatpush.bf16.msra.mxu0 %v579
        %666 = vmatpush.bf16.msra.mxu0 %v578
        %667 = vmatpush.bf16.msra.mxu0 %v577
        %668 = vmatpush.bf16.msra.mxu0 %v576
        %669 = vmatmul.bf16.gmra.mxu0 %v409
        %v670 = vpop.f32.mrf.mxu0
        %v671 = vadd.f32 %v642, %v670
        %v672 = vpop.f32.mrf.mxu0
        %v673 = vadd.f32 %v644, %v672
        %674 = vmatmul.bf16.gmra.mxu0 %v413
        %v675 = vpop.f32.mrf.mxu0
        %v676 = vadd.f32 %v647, %v675
        %v677 = vpop.f32.mrf.mxu0
        %v678 = vadd.f32 %v649, %v677
        %679 = vmatmul.bf16.gmra.mxu0 %v417
        %v680 = vpop.f32.mrf.mxu0
        %v681 = vadd.f32 %v652, %v680
        %v682 = vpop.f32.mrf.mxu0
        %v683 = vadd.f32 %v654, %v682
        %684 = vmatmul.bf16.gmra.mxu0 %v421
        %v685 = vpop.f32.mrf.mxu0
        %v686 = vadd.f32 %v657, %v685
        %v687 = vpop.f32.mrf.mxu0
        %v688 = vadd.f32 %v659, %v687
        %689 = vdwg.mxu0
        %690 = vmatpush.bf16.msra.mxu0 %v591
        %691 = vmatpush.bf16.msra.mxu0 %v590
        %692 = vmatpush.bf16.msra.mxu0 %v589
        %693 = vmatpush.bf16.msra.mxu0 %v588
        %694 = vmatpush.bf16.msra.mxu0 %v587
        %695 = vmatpush.bf16.msra.mxu0 %v586
        %696 = vmatpush.bf16.msra.mxu0 %v585
        %697 = vmatpush.bf16.msra.mxu0 %v584
        %698 = vmatmul.bf16.gmra.mxu0 %v410
        %v699 = vpop.f32.mrf.mxu0
        %v700 = vadd.f32 %v671, %v699
        %v701 = vpop.f32.mrf.mxu0
        %v702 = vadd.f32 %v673, %v701
        %703 = vmatmul.bf16.gmra.mxu0 %v414
        %v704 = vpop.f32.mrf.mxu0
        %v705 = vadd.f32 %v676, %v704
        %v706 = vpop.f32.mrf.mxu0
        %v707 = vadd.f32 %v678, %v706
        %708 = vmatmul.bf16.gmra.mxu0 %v418
        %v709 = vpop.f32.mrf.mxu0
        %v710 = vadd.f32 %v681, %v709
        %v711 = vpop.f32.mrf.mxu0
        %v712 = vadd.f32 %v683, %v711
        %713 = vmatmul.bf16.gmra.mxu0 %v422
        %v714 = vpop.f32.mrf.mxu0
        %v715 = vadd.f32 %v686, %v714
        %v716 = vpop.f32.mrf.mxu0
        %v717 = vadd.f32 %v688, %v716
        %718 = vdwg.mxu0
        %719 = vmatpush.bf16.msra.mxu0 %v599
        %720 = vmatpush.bf16.msra.mxu0 %v598
        %721 = vmatpush.bf16.msra.mxu0 %v597
        %722 = vmatpush.bf16.msra.mxu0 %v596
        %723 = vmatpush.bf16.msra.mxu0 %v595
        %724 = vmatpush.bf16.msra.mxu0 %v594
        %725 = vmatpush.bf16.msra.mxu0 %v593
        %726 = vmatpush.bf16.msra.mxu0 %v592
        %727 = vmatmul.bf16.gmra.mxu0 %v411
        %v728 = vpop.f32.mrf.mxu0
        %v729 = vadd.f32 %v700, %v728
        %v730 = vpop.f32.mrf.mxu0
        %v731 = vadd.f32 %v702, %v730
        %732 = vmatmul.bf16.gmra.mxu0 %v415
        %v733 = vpop.f32.mrf.mxu0
        %v734 = vadd.f32 %v705, %v733
        %v735 = vpop.f32.mrf.mxu0
        %v736 = vadd.f32 %v707, %v735
        %737 = vmatmul.bf16.gmra.mxu0 %v419
        %v738 = vpop.f32.mrf.mxu0
        %v739 = vadd.f32 %v710, %v738
        %v740 = vpop.f32.mrf.mxu0
        %v741 = vadd.f32 %v712, %v740
        %742 = vmatmul.bf16.gmra.mxu0 %v423
        %v743 = vpop.f32.mrf.mxu0
        %v744 = vadd.f32 %v715, %v743
        %v745 = vpop.f32.mrf.mxu0
        %v746 = vadd.f32 %v717, %v745
        %747 = vdwg.mxu0
        %v748 = vadd.f32 %v272, %v729
        %v749 = vadd.f32 %v273, %v731
        %v750 = vadd.f32 %v274, %v734
        %v751 = vadd.f32 %v275, %v736
        %v752 = vadd.f32 %v276, %v739
        %v753 = vadd.f32 %v277, %v741
        %v754 = vadd.f32 %v278, %v744
        %v755 = vadd.f32 %v279, %v746
        %756 = vst [vmem:[#allocation2] sm:$0xff] %v748
        %757 = vst [vmem:[#allocation2 + $0x8] sm:$0xff] %v749
        %758 = vst [vmem:[#allocation2 + $0x10] sm:$0xff] %v750
        %759 = vst [vmem:[#allocation2 + $0x18] sm:$0xff] %v751
        %760 = vst [vmem:[#allocation2 + $0x20] sm:$0xff] %v752
        %761 = vst [vmem:[#allocation2 + $0x28] sm:$0xff] %v753
        %762 = vst [vmem:[#allocation2 + $0x30] sm:$0xff] %v754
        %763 = vst [vmem:[#allocation2 + $0x38] sm:$0xff] %v755
        %p764 = scmp.eq.s32.totalorder %s19, 1
        // Predicated region
        $region60: #{discriminator_forward.5} parent=50 // pred_check
          %p765 = pneg %p764
        $region61: #{discriminator_forward.5} parent=50 // pred_check_branch
          %767 = sbr.rel (%p765) target = $region63
        $region62: #{discriminator_forward.5} parent=50 // pred_region
          %v768 = vld [vmem:[#allocation2] sm:$0xff]
          %v769 = vld [vmem:[#allocation2 + $0x8] sm:$0xff]
          %v770 = vld [vmem:[#allocation2 + $0x10] sm:$0xff]
          %v771 = vld [vmem:[#allocation2 + $0x18] sm:$0xff]
          %v772 = vld [vmem:[#allocation2 + $0x20] sm:$0xff]
          %v773 = vld [vmem:[#allocation2 + $0x28] sm:$0xff]
          %v774 = vld [vmem:[#allocation2 + $0x30] sm:$0xff]
          %v775 = vld [vmem:[#allocation2 + $0x38] sm:$0xff]
          %v776 = vld [vmem:[%s2] sm:$0x1]
          %v778 = vperm.slane %v776, 0
          %v780 = vadd.f32 %v768, %v778
          %v781 = vadd.f32 %v769, %v778
          %v782 = vadd.f32 %v770, %v778
          %v783 = vadd.f32 %v771, %v778
          %v784 = vadd.f32 %v772, %v778
          %v785 = vadd.f32 %v773, %v778
          %v786 = vadd.f32 %v774, %v778
          %v787 = vadd.f32 %v775, %v778
          %v788 = vadd.f32 %v780, %v781
          %v789 = vadd.f32 %v788, %v782
          %v790 = vadd.f32 %v789, %v783
          %v791 = vadd.f32 %v790, %v784
          %v792 = vadd.f32 %v791, %v785
          %v793 = vadd.f32 %v792, %v786
          %v794 = vadd.f32 %v793, %v787
          %v795 = vrot.slane %v794, 4
          %v796 = vadd.f32 %v794, %v795
          %v797 = vrot.slane %v796, 2
          %v798 = vadd.f32 %v796, %v797
          %v799 = vrot.slane %v798, 1
          %v800 = vadd.f32 %v798, %v799
          %v801 = vrcp.pop 64.0
          %v802 = vmul.f32 64.0, %v801
          %v803 = vsub.f32 1.0, %v802
          %v804 = vmul.f32 %v801, %v803
          %v805 = vadd.f32 %v801, %v804
          %vm806 = vweird.f32 %v801
          %v807 = vsel %vm806, %v801, %v805
          %v808 = vmul.f32 %v800, %v807
          %v809 = vsub.f32 %v780, %v808
          %v810 = vsub.f32 %v781, %v808
          %v811 = vsub.f32 %v782, %v808
          %v812 = vsub.f32 %v783, %v808
          %v813 = vsub.f32 %v784, %v808
          %v814 = vsub.f32 %v785, %v808
          %v815 = vsub.f32 %v786, %v808
          %v816 = vsub.f32 %v787, %v808
          %v817 = vmul.f32 %v809, %v809
          %v818 = vmul.f32 %v810, %v810
          %v819 = vmul.f32 %v811, %v811
          %v820 = vmul.f32 %v812, %v812
          %v821 = vmul.f32 %v813, %v813
          %v822 = vmul.f32 %v814, %v814
          %v823 = vmul.f32 %v815, %v815
          %v824 = vmul.f32 %v816, %v816
          %v825 = vadd.f32 %v817, %v818
          %v826 = vadd.f32 %v825, %v819
          %v827 = vadd.f32 %v826, %v820
          %v828 = vadd.f32 %v827, %v821
          %v829 = vadd.f32 %v828, %v822
          %v830 = vadd.f32 %v829, %v823
          %v831 = vadd.f32 %v830, %v824
          %v832 = vrot.slane %v831, 4
          %v833 = vadd.f32 %v831, %v832
          %v834 = vrot.slane %v833, 2
          %v835 = vadd.f32 %v833, %v834
          %v836 = vrot.slane %v835, 1
          %v837 = vadd.f32 %v835, %v836
          %v838 = vmul.f32 %v837, %v807
          %v839 = vadd.f32 %v838, 1e-05
          %v840 = vrsqrt.pop %v839
          %v841 = vmul.f32 %v840, %v839
          %v842 = vmul.f32 %v841, %v840
          %v843 = vmul.f32 0.5, %v842
          %v844 = vsub.f32 1.5, %v843
          %v845 = vmul.f32 %v840, %v844
          %vm846 = vweird.f32 %v839
          %vm847 = vweird.f32 %v840
          %vm848 = vmor %vm846, %vm847
          %v849 = vsel %vm848, %v840, %v845
          %v850 = vmul.f32 %v809, %v849
          %v851 = vmul.f32 %v810, %v849
          %v852 = vmul.f32 %v811, %v849
          %v853 = vmul.f32 %v812, %v849
          %v854 = vmul.f32 %v813, %v849
          %v855 = vmul.f32 %v814, %v849
          %v856 = vmul.f32 %v815, %v849
          %v857 = vmul.f32 %v816, %v849
          %vm858 = vcmp.ge.f32.partialorder %v850, 0.0
          %vm859 = vcmp.ge.f32.partialorder %v851, 0.0
          %vm860 = vcmp.ge.f32.partialorder %v852, 0.0
          %vm861 = vcmp.ge.f32.partialorder %v853, 0.0
          %vm862 = vcmp.ge.f32.partialorder %v854, 0.0
          %vm863 = vcmp.ge.f32.partialorder %v855, 0.0
          %vm864 = vcmp.ge.f32.partialorder %v856, 0.0
          %vm865 = vcmp.ge.f32.partialorder %v857, 0.0
          %v866 = vmul.f32 %v850, 0.2
          %v867 = vmul.f32 %v851, 0.2
          %v868 = vmul.f32 %v852, 0.2
          %v869 = vmul.f32 %v853, 0.2
          %v870 = vmul.f32 %v854, 0.2
          %v871 = vmul.f32 %v855, 0.2
          %v872 = vmul.f32 %v856, 0.2
          %v873 = vmul.f32 %v857, 0.2
          %v874 = vsel %vm858, %v850, %v866
          %v875 = vsel %vm859, %v851, %v867
          %v876 = vsel %vm860, %v852, %v868
          %v877 = vsel %vm861, %v853, %v869
          %v878 = vsel %vm862, %v854, %v870
          %v879 = vsel %vm863, %v855, %v871
          %v880 = vsel %vm864, %v856, %v872
          %v881 = vsel %vm865, %v857, %v873
          %882 = vst [vmem:[%s259] sm:$0xff] %v874
          %883 = vst [vmem:[%s259 + $0x8] sm:$0xff] %v875
          %884 = vst [vmem:[%s259 + $0x10] sm:$0xff] %v876
          %885 = vst [vmem:[%s259 + $0x18] sm:$0xff] %v877
          %886 = vst [vmem:[%s259 + $0x20] sm:$0xff] %v878
          %887 = vst [vmem:[%s259 + $0x28] sm:$0xff] %v879
          %888 = vst [vmem:[%s259 + $0x30] sm:$0xff] %v880
          %889 = vst [vmem:[%s259 + $0x38] sm:$0xff] %v881
        $region63: #{discriminator_forward.5} parent=50 // pred_fallthru
          _
        %p890 = scmp.lt.s32.totalorder %s18, 1
        %s891 = scalar_select %p890, %s18, 1
        %s892 = smul.addr %s891, 8
        %s893 = smul.addr %s892, 8
        %s894 = scalar_lea.vmem %s3, %s893
        // Predicated region
        $region64: #{discriminator_forward.5} parent=50 // pred_check
          %p895 = pneg %p119
        $region65: #{discriminator_forward.5} parent=50 // pred_check_branch
          %897 = sbr.rel (%p895) target = $region67
        $region66: #{discriminator_forward.5} parent=50 // pred_region
          _
        $region67: #{discriminator_forward.5} parent=50 // pred_fallthru
          _
      $region51: #{discriminator_forward.5} parent=5 // pred_fallthru
        _
      %p898 = scmp.le.s32.totalorder 2, %s9
      // Predicated region
      $region68: #{discriminator_forward.5} parent=5 // pred_check
        %p899 = pneg %p898
      $region69: #{discriminator_forward.5} parent=5 // pred_check_branch
        %901 = sbr.rel (%p899) target = $region71
      $region70: #{discriminator_forward.5} parent=5 // pred_region
        %s902 = ssub.s32 %s9, 2
        // Predicated region
        $region72: #{discriminator_forward.5} parent=70 // pred_check
          %p903 = pneg %p125
        $region73: #{discriminator_forward.5} parent=70 // pred_check_branch
          %905 = sbr.rel (%p903) target = $region75
        $region74: #{discriminator_forward.5} parent=70 // pred_region
          %p906 = scmp.lt.s32.totalorder %s20, 1
          %s907 = scalar_select %p906, %s20, 1
          %s908 = smul.addr %s907, 8
          %s909 = smul.addr %s908, 8
          %s910 = scalar_lea.vmem %s3, %s909
        $region75: #{discriminator_forward.5} parent=70 // pred_fallthru
          _
      $region71: #{discriminator_forward.5} parent=5 // pred_fallthru
        _
    $region6: #{discriminator_forward.5} parent=1 // loop_footer
      %s13 = sadd.s32 1, %s9
    $region7: #{discriminator_forward.5} parent=1 // loop_footer_branch
      %8 = sbr.rel target = $region3
    $region8: #{discriminator_forward.5} parent=1 // loop_exit
      _

// kernel: discriminator_forward.6
$region0: #{discriminator_forward.6}
  #allocation0 [shape = 'u32[]', space=smem, size = 0x4, offset = 0x4, fixed_abs, tag = 'smem constant byte address 0x4 - core index']
  #allocation1 [shape = 'u32[72,128]{1,0:T(1,128)}', space=vmem, size = 0x9000, scoped, tag = 'internal scratch']
  #allocation2 [shape = 'f32[16,256]{1,0:T(8,128)}', space=vmem, size = 0x4000, scoped, tag = 'scratch operand']
  %s0 = inlined_call_operand.vmem [shape: bf16[2,16,2048], index: 0, kind: input, shape index: {}]
  %s1 = inlined_call_operand.vmem [shape: bf16[2048,256], index: 1, kind: input, shape index: {}]
  %s2 = inlined_call_operand.vmem [shape: f32[1,256], index: 2, kind: input, shape index: {}]
  %s3 = inlined_call_operand.vmem [shape: f32[2,16,256], index: 3, kind: output, shape index: {}]
  %s4 = sld [smem:[#allocation0]]
  $region76: #{discriminator_forward.6} parent=0
    _
  %s6 = ssub.s32 1, %s4
  %s7 = scalar_select 0, %s6, %s4
  $region1: #{discriminator_forward.6} parent=0
    #allocation3 [shape = 'u8[32768]{0}', space=vmem, size = 0x8000, scoped, tag = 'input window, operand 0']
    loop: start=0, step=1, limit=10
    $region2: #{discriminator_forward.6} parent=1 // loop_pre_header
      _
    $region3: #{discriminator_forward.6} parent=1 // loop_header
      %s9 = sphi 0, %s13
      %p10 = scmp.ge.s32.totalorder %s9, 10
      %s16 = sphi 0, %s28
      %s17 = sphi 0, %s24
      %s18 = sphi 0, %s16
      %s19 = sphi 0, %s17
      %s20 = sphi 0, %s18
      %s21 = sphi 0, %s19
      %s33 = sphi 0, %s35
      %s36 = sphi 0, %s33
      %s37 = sphi 0, %s36
      %s53 = sphi 0, %s37
      %s59 = sphi 0, %s61
      %s62 = sphi 0, %s59
      %s63 = sphi 0, %s62
      %s79 = sphi 0, %s63
      %s83 = sphi 0, %s83
      %s85 = sphi 0, %s83
      %s86 = sphi 0, %s85
      %s100 = sphi 0, %s86
      %s106 = sphi 0, %s108
      %s109 = sphi 0, %s106
      %s110 = sphi 0, %s109
      %s126 = sphi 0, %s110
    $region4: #{discriminator_forward.6} parent=1 // loop_header_branch
      %12 = sbr.rel (%p10) target = $region8
    $region5: #{discriminator_forward.6} parent=1 // loop_body
      %s14 = ssub.s32 %s9, 1
      %s15 = ssub.s32 %s9, 2
      %s22 = sadd.s32 1, %s17
      %p23 = scmp.ge.s32.totalorder %s22, 4
      %s24 = scalar_select %p23, 0, %s22
      %s25 = sadd.s32 1, %s16
      %s26 = scalar_select %p23, %s25, %s16
      %p27 = scmp.ge.s32.totalorder %s26, 2
      %s28 = scalar_select %p27, 0, %s26
      %s29 = ssub.s32 %s16, %s28
      %s30 = ssub.s32 %s17, %s24
      %s31 = sor.u32 %s29, %s30
      %p32 = scmp.eq.s32.totalorder %s31, 0
      %s34 = sadd.s32 %s33, 1
      %s35 = scalar_select %p32, %s33, %s34
      %p38 = pneg %p32
      %p39 = scmp.eq.s32.totalorder %s9, 7
      %p40 = por %p38, %p39
      %p41 = scmp.ne.s32.totalorder %s33, %s36
      %p42 = scmp.eq.s32.totalorder %s9, 0
      %p43 = por %p41, %p42
      %p44 = scmp.ne.s32.totalorder %s33, %s36
      %p45 = scmp.eq.s32.totalorder %s14, 7
      %p46 = por %p44, %p45
      %p47 = scmp.ne.s32.totalorder %s36, %s37
      %p48 = scmp.eq.s32.totalorder %s14, 0
      %p49 = por %p47, %p48
      %p50 = scmp.ne.s32.totalorder %s36, %s37
      %p51 = scmp.eq.s32.totalorder %s15, 7
      %p52 = por %p50, %p51
      %p54 = scmp.ne.s32.totalorder %s37, %s53
      %p55 = scmp.eq.s32.totalorder %s15, 0
      %p56 = por %p54, %p55
      %s57 = ssub.s32 %s17, %s24
      %p58 = scmp.eq.s32.totalorder %s57, 0
      %s60 = sadd.s32 %s59, 1
      %s61 = scalar_select %p58, %s59, %s60
      %p64 = pneg %p58
      %p65 = scmp.eq.s32.totalorder %s9, 7
      %p66 = por %p64, %p65
      %p67 = scmp.ne.s32.totalorder %s59, %s62
      %p68 = scmp.eq.s32.totalorder %s9, 0
      %p69 = por %p67, %p68
      %p70 = scmp.ne.s32.totalorder %s59, %s62
      %p71 = scmp.eq.s32.totalorder %s14, 7
      %p72 = por %p70, %p71
      %p73 = scmp.ne.s32.totalorder %s62, %s63
      %p74 = scmp.eq.s32.totalorder %s14, 0
      %p75 = por %p73, %p74
      %p76 = scmp.ne.s32.totalorder %s62, %s63
      %p77 = scmp.eq.s32.totalorder %s15, 7
      %p78 = por %p76, %p77
      %p80 = scmp.ne.s32.totalorder %s63, %s79
      %p81 = scmp.eq.s32.totalorder %s15, 0
      %p82 = por %p80, %p81
      %s84 = sadd.s32 %s83, 1
      %p87 = scmp.eq.s32.totalorder %s9, 7
      %p88 = scmp.ne.s32.totalorder %s83, %s85
      %p89 = scmp.eq.s32.totalorder %s9, 0
      %p90 = por %p88, %p89
      %p91 = scmp.ne.s32.totalorder %s83, %s85
      %p92 = scmp.eq.s32.totalorder %s14, 7
      %p93 = por %p91, %p92
      %p94 = scmp.ne.s32.totalorder %s85, %s86
      %p95 = scmp.eq.s32.totalorder %s14, 0
      %p96 = por %p94, %p95
      %p97 = scmp.ne.s32.totalorder %s85, %s86
      %p98 = scmp.eq.s32.totalorder %s15, 7
      %p99 = por %p97, %p98
      %p101 = scmp.ne.s32.totalorder %s86, %s100
      %p102 = scmp.eq.s32.totalorder %s15, 0
      %p103 = por %p101, %p102
      %s104 = ssub.s32 %s16, %s28
      %p105 = scmp.eq.s32.totalorder %s104, 0
      %s107 = sadd.s32 %s106, 1
      %s108 = scalar_select %p105, %s106, %s107
      %p111 = pneg %p105
      %p112 = scmp.eq.s32.totalorder %s9, 7
      %p113 = por %p111, %p112
      %p114 = scmp.ne.s32.totalorder %s106, %s109
      %p115 = scmp.eq.s32.totalorder %s9, 0
      %p116 = por %p114, %p115
      %p117 = scmp.ne.s32.totalorder %s106, %s109
      %p118 = scmp.eq.s32.totalorder %s14, 7
      %p119 = por %p117, %p118
      %p120 = scmp.ne.s32.totalorder %s109, %s110
      %p121 = scmp.eq.s32.totalorder %s14, 0
      %p122 = por %p120, %p121
      %p123 = scmp.ne.s32.totalorder %s109, %s110
      %p124 = scmp.eq.s32.totalorder %s15, 7
      %p125 = por %p123, %p124
      %p127 = scmp.ne.s32.totalorder %s110, %s126
      %p128 = scmp.eq.s32.totalorder %s15, 0
      %p129 = por %p127, %p128
      %p130 = scmp.le.s32.totalorder 1, %s9
      %p131 = scmp.lt.s32.totalorder %s9, 9
      %p132 = pnand %p130, %p131
      %p133 = pneg %p132
      // Predicated region
      $region9: #{discriminator_forward.6} parent=5 // pred_check
        _
      $region10: #{discriminator_forward.6} parent=5 // pred_check_branch
        %135 = sbr.rel (%p132) target = $region12
      $region11: #{discriminator_forward.6} parent=5 // pred_region
        %s136 = ssub.s32 %s9, 1
        // Predicated region
        $region13: #{discriminator_forward.6} parent=11 // pred_check
          %p137 = pneg %p96
        $region14: #{discriminator_forward.6} parent=11 // pred_check_branch
          %139 = sbr.rel (%p137) target = $region16
        $region15: #{discriminator_forward.6} parent=11 // pred_region
          _
        $region16: #{discriminator_forward.6} parent=11 // pred_fallthru
          _
      $region12: #{discriminator_forward.6} parent=5 // pred_fallthru
        _
      %p140 = scmp.lt.s32.totalorder %s9, 8
      // Predicated region
      $region17: #{discriminator_forward.6} parent=5 // pred_check
        %p141 = pneg %p140
      $region18: #{discriminator_forward.6} parent=5 // pred_check_branch
        %143 = sbr.rel (%p141) target = $region20
      $region19: #{discriminator_forward.6} parent=5 // pred_region
        // Predicated region
        $region21: #{discriminator_forward.6} parent=19 // pred_check
          %p144 = pneg %p43
        $region22: #{discriminator_forward.6} parent=19 // pred_check_branch
          %146 = sbr.rel (%p144) target = $region24
        $region23: #{discriminator_forward.6} parent=19 // pred_region
          %s147 = sand.u32 %s33, 1
          %s148 = sand.u32 %s33, 1
          %s149 = smul.addr %s148, 32
          %s150 = scalar_lea.vmem [#allocation3], %s149
          %s151 = smul.u32 4, %s17
          %s152 = smul.addr %s16, 32
          %s153 = sadd.s32 %s151, %s152
          %s154 = smul.addr %s153, 4
          %s155 = scalar_lea.vmem %s0, %s154
          // Predicated region
          $region25: #{discriminator_forward.6} parent=23 // pred_check
            _
          $region26: #{discriminator_forward.6} parent=23 // pred_check_branch
            %157 = sbr.rel (0) target = $region28
          $region27: #{discriminator_forward.6} parent=23 // pred_region
            // Predicated region
            $region29: #{discriminator_forward.6} parent=27 // pred_check
              _
            $region30: #{discriminator_forward.6} parent=27 // pred_check_branch
              %159 = sbr.rel (0) target = $region32
            $region31: #{discriminator_forward.6} parent=27 // pred_region
              loop: start=0, step=1, limit=1
              $region33: #{discriminator_forward.6} parent=31 // loop_pre_header
                _
              $region34: #{discriminator_forward.6} parent=31 // loop_header
                %s161 = sphi 0, %s165
                %p162 = scmp.ge.s32.totalorder %s161, 1
                %s166 = sphi %s155, %s155
                %s167 = sphi %s150, %s150
              $region35: #{discriminator_forward.6} parent=31 // loop_header_branch
                %164 = sbr.rel (%p162) target = $region39
              $region36: #{discriminator_forward.6} parent=31 // loop_body
                %v168 = vld [vmem:[%s166] sm:$0xff]
                %169 = vst [vmem:[%s167] sm:$0xff] %v168
                %v170 = vld [vmem:[%s166 + $0x8] sm:$0xff]
                %171 = vst [vmem:[%s167 + $0x8] sm:$0xff] %v170
                %v172 = vld [vmem:[%s166 + $0x40] sm:$0xff]
                %173 = vst [vmem:[%s167 + $0x10] sm:$0xff] %v172
                %v174 = vld [vmem:[%s166 + $0x48] sm:$0xff]
                %175 = vst [vmem:[%s167 + $0x18] sm:$0xff] %v174
              $region37: #{discriminator_forward.6} parent=31 // loop_footer
                %s165 = sadd.s32 1, %s161
              $region38: #{discriminator_forward.6} parent=31 // loop_footer_branch
                %160 = sbr.rel target = $region34
              $region39: #{discriminator_forward.6} parent=31 // loop_exit
                _
            $region32: #{discriminator_forward.6} parent=27 // pred_fallthru
              _
            // Predicated region
            $region40: #{discriminator_forward.6} parent=27 // pred_check
              _
            $region41: #{discriminator_forward.6} parent=27 // pred_check_branch
              %177 = sbr.rel target = $region43
            $region42: #{discriminator_forward.6} parent=27 // pred_region
              _
            $region43: #{discriminator_forward.6} parent=27 // pred_fallthru
              _
          $region28: #{discriminator_forward.6} parent=23 // pred_fallthru
            _
          %178 = vnop
        $region24: #{discriminator_forward.6} parent=19 // pred_fallthru
          _
        // Predicated region
        $region44: #{discriminator_forward.6} parent=19 // pred_check
          %p179 = pneg %p69
        $region45: #{discriminator_forward.6} parent=19 // pred_check_branch
          %181 = sbr.rel (%p179) target = $region47
        $region46: #{discriminator_forward.6} parent=19 // pred_region
          %s182 = smul.u32 64, %s17
          %p183 = scmp.lt.s32.totalorder %s182, 255
          %s184 = scalar_select %p183, %s182, 255
          %s185 = smul.addr %s184, 2
          %s186 = smul.addr %s185, 4
          %s187 = scalar_lea.vmem %s1, %s186
          %s188 = smul.u32 64, %s17
        $region47: #{discriminator_forward.6} parent=19 // pred_fallthru
          _
      $region20: #{discriminator_forward.6} parent=5 // pred_fallthru
        _
      %p189 = scmp.le.s32.totalorder 1, %s9
      %p190 = scmp.lt.s32.totalorder %s9, 9
      %p191 = pnand %p189, %p190
      %p192 = pneg %p191
      // Predicated region
      $region48: #{discriminator_forward.6} parent=5 // pred_check
        _
      $region49: #{discriminator_forward.6} parent=5 // pred_check_branch
        %194 = sbr.rel (%p191) target = $region51
      $region50: #{discriminator_forward.6} parent=5 // pred_region
        %s195 = ssub.s32 %s9, 1
        %s196 = sand.u32 %s36, 1
        %s197 = sand.u32 %s36, 1
        %s198 = smul.addr %s197, 32
        %s199 = scalar_lea.vmem [#allocation3], %s198
        // Predicated region
        $region52: #{discriminator_forward.6} parent=50 // pred_check
          %p200 = pneg %p49
        $region53: #{discriminator_forward.6} parent=50 // pred_check_branch
          %202 = sbr.rel (%p200) target = $region55
        $region54: #{discriminator_forward.6} parent=50 // pred_region
          _
        $region55: #{discriminator_forward.6} parent=50 // pred_fallthru
          _
        %s203 = sand.u32 %s36, 1
        %s204 = sand.u32 %s36, 1
        %s205 = smul.addr %s204, 32
        %s206 = scalar_lea.vmem [#allocation3], %s205
        %p207 = pneg %p49
        %p208 = pneg %p46
        %s209 = smul.u32 64, %s19
        %p210 = scmp.lt.s32.totalorder %s209, 255
        %s211 = scalar_select %p210, %s209, 255
        %s212 = smul.addr %s211, 2
        %s213 = smul.addr %s212, 4
        %s214 = scalar_lea.vmem %s1, %s213
        %p215 = pneg %p75
        %p216 = pneg %p72
        %p217 = pneg %p96
        %p218 = pneg %p93
        %p219 = pneg %p122
        %p220 = pneg %p119
        %p221 = scmp.lt.s32.totalorder %s18, 1
        %s222 = scalar_select %p221, %s18, 1
        %s223 = smul.addr %s222, 4
        %s224 = smul.addr %s223, 8
        %s225 = scalar_lea.vmem %s3, %s224
        %s226 = smul.u32 4, %s19
        %s227 = smul.u32 64, %s19
        %p228 = scmp.lt.s32.totalorder %s227, 255
        %s229 = scalar_select %p228, %s227, 255
        %s230 = smul.addr %s229, 2
        %s231 = smul.addr %s230, 4
        %s232 = scalar_lea.vmem %s1, %s231
        %s233 = smul.u32 64, %s19
        %p234 = scmp.lt.s32.totalorder %s18, 1
        %s235 = scalar_select %p234, %s18, 1
        %s236 = smul.addr %s235, 4
        %s237 = smul.addr %s236, 8
        %s238 = scalar_lea.vmem %s3, %s237
        %p239 = scmp.eq.s32.totalorder %s19, 0
        // Predicated region
        $region56: #{discriminator_forward.6} parent=50 // pred_check
          %p240 = pneg %p239
        $region57: #{discriminator_forward.6} parent=50 // pred_check_branch
          %242 = sbr.rel (%p240) target = $region59
        $region58: #{discriminator_forward.6} parent=50 // pred_region
          %243 = vst [vmem:[#allocation2] sm:$0xff] 0.0
          %244 = vst [vmem:[#allocation2 + $0x8] sm:$0xff] 0.0
          %245 = vst [vmem:[#allocation2 + $0x10] sm:$0xff] 0.0
          %246 = vst [vmem:[#allocation2 + $0x18] sm:$0xff] 0.0
        $region59: #{discriminator_forward.6} parent=50 // pred_fallthru
          _
        %v247 = vld [vmem:[#allocation2] sm:$0xff]
        %v248 = vld [vmem:[#allocation2 + $0x8] sm:$0xff]
        %v249 = vld [vmem:[#allocation2 + $0x10] sm:$0xff]
        %v250 = vld [vmem:[#allocation2 + $0x18] sm:$0xff]
        %v251 = vld [vmem:[%s199] sm:$0xff]
        %v252 = vld [vmem:[%s199 + $0x8] sm:$0xff]
        %v253 = vld [vmem:[%s199 + $0x10] sm:$0xff]
        %v254 = vld [vmem:[%s199 + $0x18] sm:$0xff]
        %v255 = vld [vmem:[%s232] sm:$0xff]
        %v256 = vld [vmem:[%s232 + $0x8] sm:$0xff]
        %v257 = vld [vmem:[%s232 + $0x10] sm:$0xff]
        %v258 = vld [vmem:[%s232 + $0x18] sm:$0xff]
        %v259 = vld [vmem:[%s232 + $0x20] sm:$0xff]
        %v260 = vld [vmem:[%s232 + $0x28] sm:$0xff]
        %v261 = vld [vmem:[%s232 + $0x30] sm:$0xff]
        %v262 = vld [vmem:[%s232 + $0x38] sm:$0xff]
        %v263 = vld [vmem:[%s232 + $0x40] sm:$0xff]
        %v264 = vld [vmem:[%s232 + $0x48] sm:$0xff]
        %v265 = vld [vmem:[%s232 + $0x50] sm:$0xff]
        %v266 = vld [vmem:[%s232 + $0x58] sm:$0xff]
        %v267 = vld [vmem:[%s232 + $0x60] sm:$0xff]
        %v268 = vld [vmem:[%s232 + $0x68] sm:$0xff]
        %v269 = vld [vmem:[%s232 + $0x70] sm:$0xff]
        %v270 = vld [vmem:[%s232 + $0x78] sm:$0xff]
        %v271 = vld [vmem:[%s232 + $0x80] sm:$0xff]
        %v272 = vld [vmem:[%s232 + $0x88] sm:$0xff]
        %v273 = vld [vmem:[%s232 + $0x90] sm:$0xff]
        %v274 = vld [vmem:[%s232 + $0x98] sm:$0xff]
        %v275 = vld [vmem:[%s232 + $0xa0] sm:$0xff]
        %v276 = vld [vmem:[%s232 + $0xa8] sm:$0xff]
        %v277 = vld [vmem:[%s232 + $0xb0] sm:$0xff]
        %v278 = vld [vmem:[%s232 + $0xb8] sm:$0xff]
        %v279 = vld [vmem:[%s232 + $0xc0] sm:$0xff]
        %v280 = vld [vmem:[%s232 + $0xc8] sm:$0xff]
        %v281 = vld [vmem:[%s232 + $0xd0] sm:$0xff]
        %v282 = vld [vmem:[%s232 + $0xd8] sm:$0xff]
        %v283 = vld [vmem:[%s232 + $0xe0] sm:$0xff]
        %v284 = vld [vmem:[%s232 + $0xe8] sm:$0xff]
        %v285 = vld [vmem:[%s232 + $0xf0] sm:$0xff]
        %v286 = vld [vmem:[%s232 + $0xf8] sm:$0xff]
        %v287 = vld [vmem:[%s232 + $0x100] sm:$0xff]
        %v288 = vld [vmem:[%s232 + $0x108] sm:$0xff]
        %v289 = vld [vmem:[%s232 + $0x110] sm:$0xff]
        %v290 = vld [vmem:[%s232 + $0x118] sm:$0xff]
        %v291 = vld [vmem:[%s232 + $0x120] sm:$0xff]
        %v292 = vld [vmem:[%s232 + $0x128] sm:$0xff]
        %v293 = vld [vmem:[%s232 + $0x130] sm:$0xff]
        %v294 = vld [vmem:[%s232 + $0x138] sm:$0xff]
        %v295 = vld [vmem:[%s232 + $0x140] sm:$0xff]
        %v296 = vld [vmem:[%s232 + $0x148] sm:$0xff]
        %v297 = vld [vmem:[%s232 + $0x150] sm:$0xff]
        %v298 = vld [vmem:[%s232 + $0x158] sm:$0xff]
        %v299 = vld [vmem:[%s232 + $0x160] sm:$0xff]
        %v300 = vld [vmem:[%s232 + $0x168] sm:$0xff]
        %v301 = vld [vmem:[%s232 + $0x170] sm:$0xff]
        %v302 = vld [vmem:[%s232 + $0x178] sm:$0xff]
        %v303 = vld [vmem:[%s232 + $0x180] sm:$0xff]
        %v304 = vld [vmem:[%s232 + $0x188] sm:$0xff]
        %v305 = vld [vmem:[%s232 + $0x190] sm:$0xff]
        %v306 = vld [vmem:[%s232 + $0x198] sm:$0xff]
        %v307 = vld [vmem:[%s232 + $0x1a0] sm:$0xff]
        %v308 = vld [vmem:[%s232 + $0x1a8] sm:$0xff]
        %v309 = vld [vmem:[%s232 + $0x1b0] sm:$0xff]
        %v310 = vld [vmem:[%s232 + $0x1b8] sm:$0xff]
        %v311 = vld [vmem:[%s232 + $0x1c0] sm:$0xff]
        %v312 = vld [vmem:[%s232 + $0x1c8] sm:$0xff]
        %v313 = vld [vmem:[%s232 + $0x1d0] sm:$0xff]
        %v314 = vld [vmem:[%s232 + $0x1d8] sm:$0xff]
        %v315 = vld [vmem:[%s232 + $0x1e0] sm:$0xff]
        %v316 = vld [vmem:[%s232 + $0x1e8] sm:$0xff]
        %v317 = vld [vmem:[%s232 + $0x1f0] sm:$0xff]
        %v318 = vld [vmem:[%s232 + $0x1f8] sm:$0xff]
        %v323 = vunpack.c.l.b16 %v251
        %v324 = vunpack.c.h.b16 %v251
        %v325 = vunpack.c.l.b16 %v252
        %v326 = vunpack.c.h.b16 %v252
        %v327 = vunpack.c.l.b16 %v253
        %v328 = vunpack.c.h.b16 %v253
        %v329 = vunpack.c.l.b16 %v254
        %v330 = vunpack.c.h.b16 %v254
        %v331 = vpack.c.b16 %v327, %v323
        %v332 = vpack.c.b16 %v328, %v324
        %v333 = vpack.c.b16 %v329, %v325
        %v334 = vpack.c.b16 %v330, %v326
        %v403 = vunpack.c.l.b16 %v255
        %v404 = vunpack.c.h.b16 %v255
        %v405 = vunpack.c.l.b16 %v256
        %v406 = vunpack.c.h.b16 %v256
        %v407 = vunpack.c.l.b16 %v257
        %v408 = vunpack.c.h.b16 %v257
        %v409 = vunpack.c.l.b16 %v258
        %v410 = vunpack.c.h.b16 %v258
        %v411 = vunpack.c.l.b16 %v259
        %v412 = vunpack.c.h.b16 %v259
        %v413 = vunpack.c.l.b16 %v260
        %v414 = vunpack.c.h.b16 %v260
        %v415 = vunpack.c.l.b16 %v261
        %v416 = vunpack.c.h.b16 %v261
        %v417 = vunpack.c.l.b16 %v262
        %v418 = vunpack.c.h.b16 %v262
        %v419 = vunpack.c.l.b16 %v263
        %v420 = vunpack.c.h.b16 %v263
        %v421 = vunpack.c.l.b16 %v264
        %v422 = vunpack.c.h.b16 %v264
        %v423 = vunpack.c.l.b16 %v265
        %v424 = vunpack.c.h.b16 %v265
        %v425 = vunpack.c.l.b16 %v266
        %v426 = vunpack.c.h.b16 %v266
        %v427 = vunpack.c.l.b16 %v267
        %v428 = vunpack.c.h.b16 %v267
        %v429 = vunpack.c.l.b16 %v268
        %v430 = vunpack.c.h.b16 %v268
        %v431 = vunpack.c.l.b16 %v269
        %v432 = vunpack.c.h.b16 %v269
        %v433 = vunpack.c.l.b16 %v270
        %v434 = vunpack.c.h.b16 %v270
        %v435 = vunpack.c.l.b16 %v271
        %v436 = vunpack.c.h.b16 %v271
        %v437 = vunpack.c.l.b16 %v272
        %v438 = vunpack.c.h.b16 %v272
        %v439 = vunpack.c.l.b16 %v273
        %v440 = vunpack.c.h.b16 %v273
        %v441 = vunpack.c.l.b16 %v274
        %v442 = vunpack.c.h.b16 %v274
        %v443 = vunpack.c.l.b16 %v275
        %v444 = vunpack.c.h.b16 %v275
        %v445 = vunpack.c.l.b16 %v276
        %v446 = vunpack.c.h.b16 %v276
        %v447 = vunpack.c.l.b16 %v277
        %v448 = vunpack.c.h.b16 %v277
        %v449 = vunpack.c.l.b16 %v278
        %v450 = vunpack.c.h.b16 %v278
        %v451 = vunpack.c.l.b16 %v279
        %v452 = vunpack.c.h.b16 %v279
        %v453 = vunpack.c.l.b16 %v280
        %v454 = vunpack.c.h.b16 %v280
        %v455 = vunpack.c.l.b16 %v281
        %v456 = vunpack.c.h.b16 %v281
        %v457 = vunpack.c.l.b16 %v282
        %v458 = vunpack.c.h.b16 %v282
        %v459 = vunpack.c.l.b16 %v283
        %v460 = vunpack.c.h.b16 %v283
        %v461 = vunpack.c.l.b16 %v284
        %v462 = vunpack.c.h.b16 %v284
        %v463 = vunpack.c.l.b16 %v285
        %v464 = vunpack.c.h.b16 %v285
        %v465 = vunpack.c.l.b16 %v286
        %v466 = vunpack.c.h.b16 %v286
        %v467 = vunpack.c.l.b16 %v287
        %v468 = vunpack.c.h.b16 %v287
        %v469 = vunpack.c.l.b16 %v288
        %v470 = vunpack.c.h.b16 %v288
        %v471 = vunpack.c.l.b16 %v289
        %v472 = vunpack.c.h.b16 %v289
        %v473 = vunpack.c.l.b16 %v290
        %v474 = vunpack.c.h.b16 %v290
        %v475 = vunpack.c.l.b16 %v291
        %v476 = vunpack.c.h.b16 %v291
        %v477 = vunpack.c.l.b16 %v292
        %v478 = vunpack.c.h.b16 %v292
        %v479 = vunpack.c.l.b16 %v293
        %v480 = vunpack.c.h.b16 %v293
        %v481 = vunpack.c.l.b16 %v294
        %v482 = vunpack.c.h.b16 %v294
        %v483 = vunpack.c.l.b16 %v295
        %v484 = vunpack.c.h.b16 %v295
        %v485 = vunpack.c.l.b16 %v296
        %v486 = vunpack.c.h.b16 %v296
        %v487 = vunpack.c.l.b16 %v297
        %v488 = vunpack.c.h.b16 %v297
        %v489 = vunpack.c.l.b16 %v298
        %v490 = vunpack.c.h.b16 %v298
        %v491 = vunpack.c.l.b16 %v299
        %v492 = vunpack.c.h.b16 %v299
        %v493 = vunpack.c.l.b16 %v300
        %v494 = vunpack.c.h.b16 %v300
        %v495 = vunpack.c.l.b16 %v301
        %v496 = vunpack.c.h.b16 %v301
        %v497 = vunpack.c.l.b16 %v302
        %v498 = vunpack.c.h.b16 %v302
        %v499 = vunpack.c.l.b16 %v303
        %v500 = vunpack.c.h.b16 %v303
        %v501 = vunpack.c.l.b16 %v304
        %v502 = vunpack.c.h.b16 %v304
        %v503 = vunpack.c.l.b16 %v305
        %v504 = vunpack.c.h.b16 %v305
        %v505 = vunpack.c.l.b16 %v306
        %v506 = vunpack.c.h.b16 %v306
        %v507 = vunpack.c.l.b16 %v307
        %v508 = vunpack.c.h.b16 %v307
        %v509 = vunpack.c.l.b16 %v308
        %v510 = vunpack.c.h.b16 %v308
        %v511 = vunpack.c.l.b16 %v309
        %v512 = vunpack.c.h.b16 %v309
        %v513 = vunpack.c.l.b16 %v310
        %v514 = vunpack.c.h.b16 %v310
        %v515 = vunpack.c.l.b16 %v311
        %v516 = vunpack.c.h.b16 %v311
        %v517 = vunpack.c.l.b16 %v312
        %v518 = vunpack.c.h.b16 %v312
        %v519 = vunpack.c.l.b16 %v313
        %v520 = vunpack.c.h.b16 %v313
        %v521 = vunpack.c.l.b16 %v314
        %v522 = vunpack.c.h.b16 %v314
        %v523 = vunpack.c.l.b16 %v315
        %v524 = vunpack.c.h.b16 %v315
        %v525 = vunpack.c.l.b16 %v316
        %v526 = vunpack.c.h.b16 %v316
        %v527 = vunpack.c.l.b16 %v317
        %v528 = vunpack.c.h.b16 %v317
        %v529 = vunpack.c.l.b16 %v318
        %v530 = vunpack.c.h.b16 %v318
        %v531 = vpack.c.b16 %v405, %v403
        %v532 = vpack.c.b16 %v406, %v404
        %v533 = vpack.c.b16 %v409, %v407
        %v534 = vpack.c.b16 %v410, %v408
        %v535 = vpack.c.b16 %v413, %v411
        %v536 = vpack.c.b16 %v414, %v412
        %v537 = vpack.c.b16 %v417, %v415
        %v538 = vpack.c.b16 %v418, %v416
        %v539 = vpack.c.b16 %v421, %v419
        %v540 = vpack.c.b16 %v422, %v420
        %v541 = vpack.c.b16 %v425, %v423
        %v542 = vpack.c.b16 %v426, %v424
        %v543 = vpack.c.b16 %v429, %v427
        %v544 = vpack.c.b16 %v430, %v428
        %v545 = vpack.c.b16 %v433, %v431
        %v546 = vpack.c.b16 %v434, %v432
        %v547 = vpack.c.b16 %v437, %v435
        %v548 = vpack.c.b16 %v438, %v436
        %v549 = vpack.c.b16 %v441, %v439
        %v550 = vpack.c.b16 %v442, %v440
        %v551 = vpack.c.b16 %v445, %v443
        %v552 = vpack.c.b16 %v446, %v444
        %v553 = vpack.c.b16 %v449, %v447
        %v554 = vpack.c.b16 %v450, %v448
        %v555 = vpack.c.b16 %v453, %v451
        %v556 = vpack.c.b16 %v454, %v452
        %v557 = vpack.c.b16 %v457, %v455
        %v558 = vpack.c.b16 %v458, %v456
        %v559 = vpack.c.b16 %v461, %v459
        %v560 = vpack.c.b16 %v462, %v460
        %v561 = vpack.c.b16 %v465, %v463
        %v562 = vpack.c.b16 %v466, %v464
        %v563 = vpack.c.b16 %v469, %v467
        %v564 = vpack.c.b16 %v470, %v468
        %v565 = vpack.c.b16 %v473, %v471
        %v566 = vpack.c.b16 %v474, %v472
        %v567 = vpack.c.b16 %v477, %v475
        %v568 = vpack.c.b16 %v478, %v476
        %v569 = vpack.c.b16 %v481, %v479
        %v570 = vpack.c.b16 %v482, %v480
        %v571 = vpack.c.b16 %v485, %v483
        %v572 = vpack.c.b16 %v486, %v484
        %v573 = vpack.c.b16 %v489, %v487
        %v574 = vpack.c.b16 %v490, %v488
        %v575 = vpack.c.b16 %v493, %v491
        %v576 = vpack.c.b16 %v494, %v492
        %v577 = vpack.c.b16 %v497, %v495
        %v578 = vpack.c.b16 %v498, %v496
        %v579 = vpack.c.b16 %v501, %v499
        %v580 = vpack.c.b16 %v502, %v500
        %v581 = vpack.c.b16 %v505, %v503
        %v582 = vpack.c.b16 %v506, %v504
        %v583 = vpack.c.b16 %v509, %v507
        %v584 = vpack.c.b16 %v510, %v508
        %v585 = vpack.c.b16 %v513, %v511
        %v586 = vpack.c.b16 %v514, %v512
        %v587 = vpack.c.b16 %v517, %v515
        %v588 = vpack.c.b16 %v518, %v516
        %v589 = vpack.c.b16 %v521, %v519
        %v590 = vpack.c.b16 %v522, %v520
        %v591 = vpack.c.b16 %v525, %v523
        %v592 = vpack.c.b16 %v526, %v524
        %v593 = vpack.c.b16 %v529, %v527
        %v594 = vpack.c.b16 %v530, %v528
        %659 = vmatpush.bf16.msra.mxu0 %v545
        %660 = vmatpush.bf16.msra.mxu0 %v543
        %661 = vmatpush.bf16.msra.mxu0 %v541
        %662 = vmatpush.bf16.msra.mxu0 %v539
        %663 = vmatpush.bf16.msra.mxu0 %v537
        %664 = vmatpush.bf16.msra.mxu0 %v535
        %665 = vmatpush.bf16.msra.mxu0 %v533
        %666 = vmatpush.bf16.msra.mxu0 %v531
        %667 = vmatmul.bf16.gmra.mxu0 %v331
        %v668 = vpop.f32.mrf.mxu0
        %v669 = vadd.f32 0.0, %v668
        %v670 = vpop.f32.mrf.mxu0
        %v671 = vadd.f32 0.0, %v670
        %672 = vdwg.mxu0
        %673 = vmatpush.bf16.msra.mxu0 %v561
        %674 = vmatpush.bf16.msra.mxu0 %v559
        %675 = vmatpush.bf16.msra.mxu0 %v557
        %676 = vmatpush.bf16.msra.mxu0 %v555
        %677 = vmatpush.bf16.msra.mxu0 %v553
        %678 = vmatpush.bf16.msra.mxu0 %v551
        %679 = vmatpush.bf16.msra.mxu0 %v549
        %680 = vmatpush.bf16.msra.mxu0 %v547
        %681 = vmatmul.bf16.gmra.mxu0 %v332
        %v682 = vpop.f32.mrf.mxu0
        %v683 = vadd.f32 %v669, %v682
        %v684 = vpop.f32.mrf.mxu0
        %v685 = vadd.f32 %v671, %v684
        %686 = vdwg.mxu0
        %687 = vmatpush.bf16.msra.mxu0 %v577
        %688 = vmatpush.bf16.msra.mxu0 %v575
        %689 = vmatpush.bf16.msra.mxu0 %v573
        %690 = vmatpush.bf16.msra.mxu0 %v571
        %691 = vmatpush.bf16.msra.mxu0 %v569
        %692 = vmatpush.bf16.msra.mxu0 %v567
        %693 = vmatpush.bf16.msra.mxu0 %v565
        %694 = vmatpush.bf16.msra.mxu0 %v563
        %695 = vmatmul.bf16.gmra.mxu0 %v333
        %v696 = vpop.f32.mrf.mxu0
        %v697 = vadd.f32 %v683, %v696
        %v698 = vpop.f32.mrf.mxu0
        %v699 = vadd.f32 %v685, %v698
        %700 = vdwg.mxu0
        %701 = vmatpush.bf16.msra.mxu0 %v593
        %702 = vmatpush.bf16.msra.mxu0 %v591
        %703 = vmatpush.bf16.msra.mxu0 %v589
        %704 = vmatpush.bf16.msra.mxu0 %v587
        %705 = vmatpush.bf16.msra.mxu0 %v585
        %706 = vmatpush.bf16.msra.mxu0 %v583
        %707 = vmatpush.bf16.msra.mxu0 %v581
        %708 = vmatpush.bf16.msra.mxu0 %v579
        %709 = vmatmul.bf16.gmra.mxu0 %v334
        %v710 = vpop.f32.mrf.mxu0
        %v711 = vadd.f32 %v697, %v710
        %v712 = vpop.f32.mrf.mxu0
        %v713 = vadd.f32 %v699, %v712
        %714 = vdwg.mxu0
        %715 = vmatpush.bf16.msra.mxu0 %v546
        %716 = vmatpush.bf16.msra.mxu0 %v544
        %717 = vmatpush.bf16.msra.mxu0 %v542
        %718 = vmatpush.bf16.msra.mxu0 %v540
        %719 = vmatpush.bf16.msra.mxu0 %v538
        %720 = vmatpush.bf16.msra.mxu0 %v536
        %721 = vmatpush.bf16.msra.mxu0 %v534
        %722 = vmatpush.bf16.msra.mxu0 %v532
        %723 = vmatmul.bf16.gmra.mxu0 %v331
        %v724 = vpop.f32.mrf.mxu0
        %v725 = vadd.f32 0.0, %v724
        %v726 = vpop.f32.mrf.mxu0
        %v727 = vadd.f32 0.0, %v726
        %728 = vdwg.mxu0
        %729 = vmatpush.bf16.msra.mxu0 %v562
        %730 = vmatpush.bf16.msra.mxu0 %v560
        %731 = vmatpush.bf16.msra.mxu0 %v558
        %732 = vmatpush.bf16.msra.mxu0 %v556
        %733 = vmatpush.bf16.msra.mxu0 %v554
        %734 = vmatpush.bf16.msra.mxu0 %v552
        %735 = vmatpush.bf16.msra.mxu0 %v550
        %736 = vmatpush.bf16.msra.mxu0 %v548
        %737 = vmatmul.bf16.gmra.mxu0 %v332
        %v738 = vpop.f32.mrf.mxu0
        %v739 = vadd.f32 %v725, %v738
        %v740 = vpop.f32.mrf.mxu0
        %v741 = vadd.f32 %v727, %v740
        %742 = vdwg.mxu0
        %743 = vmatpush.bf16.msra.mxu0 %v578
        %744 = vmatpush.bf16.msra.mxu0 %v576
        %745 = vmatpush.bf16.msra.mxu0 %v574
        %746 = vmatpush.bf16.msra.mxu0 %v572
        %747 = vmatpush.bf16.msra.mxu0 %v570
        %748 = vmatpush.bf16.msra.mxu0 %v568
        %749 = vmatpush.bf16.msra.mxu0 %v566
        %750 = vmatpush.bf16.msra.mxu0 %v564
        %751 = vmatmul.bf16.gmra.mxu0 %v333
        %v752 = vpop.f32.mrf.mxu0
        %v753 = vadd.f32 %v739, %v752
        %v754 = vpop.f32.mrf.mxu0
        %v755 = vadd.f32 %v741, %v754
        %756 = vdwg.mxu0
        %757 = vmatpush.bf16.msra.mxu0 %v594
        %758 = vmatpush.bf16.msra.mxu0 %v592
        %759 = vmatpush.bf16.msra.mxu0 %v590
        %760 = vmatpush.bf16.msra.mxu0 %v588
        %761 = vmatpush.bf16.msra.mxu0 %v586
        %762 = vmatpush.bf16.msra.mxu0 %v584
        %763 = vmatpush.bf16.msra.mxu0 %v582
        %764 = vmatpush.bf16.msra.mxu0 %v580
        %765 = vmatmul.bf16.gmra.mxu0 %v334
        %v766 = vpop.f32.mrf.mxu0
        %v767 = vadd.f32 %v753, %v766
        %v768 = vpop.f32.mrf.mxu0
        %v769 = vadd.f32 %v755, %v768
        %770 = vdwg.mxu0
        %v771 = vadd.f32 %v247, %v711
        %v772 = vadd.f32 %v248, %v767
        %v773 = vadd.f32 %v249, %v713
        %v774 = vadd.f32 %v250, %v769
        %775 = vst [vmem:[#allocation2] sm:$0xff] %v771
        %776 = vst [vmem:[#allocation2 + $0x8] sm:$0xff] %v772
        %777 = vst [vmem:[#allocation2 + $0x10] sm:$0xff] %v773
        %778 = vst [vmem:[#allocation2 + $0x18] sm:$0xff] %v774
        %p779 = scmp.eq.s32.totalorder %s19, 3
        // Predicated region
        $region60: #{discriminator_forward.6} parent=50 // pred_check
          %p780 = pneg %p779
        $region61: #{discriminator_forward.6} parent=50 // pred_check_branch
          %782 = sbr.rel (%p780) target = $region63
        $region62: #{discriminator_forward.6} parent=50 // pred_region
          %v783 = vld [vmem:[#allocation2] sm:$0xff]
          %v784 = vld [vmem:[#allocation2 + $0x8] sm:$0xff]
          %v785 = vld [vmem:[#allocation2 + $0x10] sm:$0xff]
          %v786 = vld [vmem:[#allocation2 + $0x18] sm:$0xff]
          %v787 = vld [vmem:[%s2] sm:$0x3]
          %v789 = vperm.slane %v787, 0
          %v790 = vperm.slane %v787, 1
          %v793 = vadd.f32 %v783, %v789
          %v794 = vadd.f32 %v784, %v790
          %v795 = vadd.f32 %v785, %v789
          %v796 = vadd.f32 %v786, %v790
          %v797 = vadd.f32 %v793, %v795
          %v798 = vrot.slane %v797, 4
          %v799 = vadd.f32 %v797, %v798
          %v800 = vrot.slane %v799, 2
          %v801 = vadd.f32 %v799, %v800
          %v802 = vrot.slane %v801, 1
          %v803 = vadd.f32 %v801, %v802
          %v804 = vadd.f32 %v794, %v796
          %v805 = vrot.slane %v804, 4
          %v806 = vadd.f32 %v804, %v805
          %v807 = vrot.slane %v806, 2
          %v808 = vadd.f32 %v806, %v807
          %v809 = vrot.slane %v808, 1
          %v810 = vadd.f32 %v808, %v809
          %v811 = vrcp.pop 16.0
          %v812 = vmul.f32 16.0, %v811
          %v813 = vsub.f32 1.0, %v812
          %v814 = vmul.f32 %v811, %v813
          %v815 = vadd.f32 %v811, %v814
          %vm816 = vweird.f32 %v811
          %v817 = vsel %vm816, %v811, %v815
          %v818 = vmul.f32 %v803, %v817
          %v819 = vmul.f32 %v810, %v817
          %v820 = vsub.f32 %v793, %v818
          %v821 = vsub.f32 %v794, %v819
          %v822 = vsub.f32 %v795, %v818
          %v823 = vsub.f32 %v796, %v819
          %v824 = vmul.f32 %v820, %v820
          %v825 = vmul.f32 %v821, %v821
          %v826 = vmul.f32 %v822, %v822
          %v827 = vmul.f32 %v823, %v823
          %v828 = vadd.f32 %v824, %v826
          %v829 = vrot.slane %v828, 4
          %v830 = vadd.f32 %v828, %v829
          %v831 = vrot.slane %v830, 2
          %v832 = vadd.f32 %v830, %v831
          %v833 = vrot.slane %v832, 1
          %v834 = vadd.f32 %v832, %v833
          %v835 = vadd.f32 %v825, %v827
          %v836 = vrot.slane %v835, 4
          %v837 = vadd.f32 %v835, %v836
          %v838 = vrot.slane %v837, 2
          %v839 = vadd.f32 %v837, %v838
          %v840 = vrot.slane %v839, 1
          %v841 = vadd.f32 %v839, %v840
          %v842 = vmul.f32 %v834, %v817
          %v843 = vmul.f32 %v841, %v817
          %v844 = vadd.f32 %v842, 1e-05
          %v845 = vadd.f32 %v843, 1e-05
          %v846 = vrsqrt.pop %v844
          %v847 = vmul.f32 %v846, %v844
          %v848 = vmul.f32 %v847, %v846
          %v849 = vmul.f32 0.5, %v848
          %v850 = vsub.f32 1.5, %v849
          %v851 = vmul.f32 %v846, %v850
          %vm852 = vweird.f32 %v844
          %vm853 = vweird.f32 %v846
          %vm854 = vmor %vm852, %vm853
          %v855 = vsel %vm854, %v846, %v851
          %v856 = vrsqrt.pop %v845
          %v857 = vmul.f32 %v856, %v845
          %v858 = vmul.f32 %v857, %v856
          %v859 = vmul.f32 0.5, %v858
          %v860 = vsub.f32 1.5, %v859
          %v861 = vmul.f32 %v856, %v860
          %vm862 = vweird.f32 %v845
          %vm863 = vweird.f32 %v856
          %vm864 = vmor %vm862, %vm863
          %v865 = vsel %vm864, %v856, %v861
          %v866 = vmul.f32 %v820, %v855
          %v867 = vmul.f32 %v821, %v865
          %v868 = vmul.f32 %v822, %v855
          %v869 = vmul.f32 %v823, %v865
          %vm870 = vcmp.ge.f32.partialorder %v866, 0.0
          %vm871 = vcmp.ge.f32.partialorder %v867, 0.0
          %vm872 = vcmp.ge.f32.partialorder %v868, 0.0
          %vm873 = vcmp.ge.f32.partialorder %v869, 0.0
          %v874 = vmul.f32 %v866, 0.2
          %v875 = vmul.f32 %v867, 0.2
          %v876 = vmul.f32 %v868, 0.2
          %v877 = vmul.f32 %v869, 0.2
          %v878 = vsel %vm870, %v866, %v874
          %v879 = vsel %vm871, %v867, %v875
          %v880 = vsel %vm872, %v868, %v876
          %v881 = vsel %vm873, %v869, %v877
          %882 = vst [vmem:[%s238] sm:$0xff] %v878
          %883 = vst [vmem:[%s238 + $0x8] sm:$0xff] %v879
          %884 = vst [vmem:[%s238 + $0x10] sm:$0xff] %v880
          %885 = vst [vmem:[%s238 + $0x18] sm:$0xff] %v881
        $region63: #{discriminator_forward.6} parent=50 // pred_fallthru
          _
        %p886 = scmp.lt.s32.totalorder %s18, 1
        %s887 = scalar_select %p886, %s18, 1
        %s888 = smul.addr %s887, 4
        %s889 = smul.addr %s888, 8
        %s890 = scalar_lea.vmem %s3, %s889
        // Predicated region
        $region64: #{discriminator_forward.6} parent=50 // pred_check
          %p891 = pneg %p119
        $region65: #{discriminator_forward.6} parent=50 // pred_check_branch
          %893 = sbr.rel (%p891) target = $region67
        $region66: #{discriminator_forward.6} parent=50 // pred_region
          _
        $region67: #{discriminator_forward.6} parent=50 // pred_fallthru
          _
      $region51: #{discriminator_forward.6} parent=5 // pred_fallthru
        _
      %p894 = scmp.le.s32.totalorder 2, %s9
      // Predicated region
      $region68: #{discriminator_forward.6} parent=5 // pred_check
        %p895 = pneg %p894
      $region69: #{discriminator_forward.6} parent=5 // pred_check_branch
        %897 = sbr.rel (%p895) target = $region71
      $region70: #{discriminator_forward.6} parent=5 // pred_region
        %s898 = ssub.s32 %s9, 2
        // Predicated region
        $region72: #{discriminator_forward.6} parent=70 // pred_check
          %p899 = pneg %p125
        $region73: #{discriminator_forward.6} parent=70 // pred_check_branch
          %901 = sbr.rel (%p899) target = $region75
        $region74: #{discriminator_forward.6} parent=70 // pred_region
          %p902 = scmp.lt.s32.totalorder %s20, 1
          %s903 = scalar_select %p902, %s20, 1
          %s904 = smul.addr %s903, 4
          %s905 = smul.addr %s904, 8
          %s906 = scalar_lea.vmem %s3, %s905
        $region75: #{discriminator_forward.6} parent=70 // pred_fallthru
          _
      $region71: #{discriminator_forward.6} parent=5 // pred_fallthru
        _
    $region6: #{discriminator_forward.6} parent=1 // loop_footer
      %s13 = sadd.s32 1, %s9
    $region7: #{discriminator_forward.6} parent=1 // loop_footer_branch
      %8 = sbr.rel target = $region3
    $region8: #{discriminator_forward.6} parent=1 // loop_exit
      _

// kernel: discriminator_forward.7
$region0: #{discriminator_forward.7}
  #allocation0 [shape = 'u32[]', space=smem, size = 0x4, offset = 0x4, fixed_abs, tag = 'smem constant byte address 0x4 - core index']
  #allocation1 [shape = 'u32[72,128]{1,0:T(1,128)}', space=vmem, size = 0x9000, scoped, tag = 'internal scratch']
  #allocation2 [shape = 'f32[16,512]{1,0:T(8,128)}', space=vmem, size = 0x8000, scoped, tag = 'scratch operand']
  %s0 = inlined_call_operand.vmem [shape: bf16[2,16,4096], index: 0, kind: input, shape index: {}]
  %s1 = inlined_call_operand.vmem [shape: bf16[4096,512], index: 1, kind: input, shape index: {}]
  %s2 = inlined_call_operand.vmem [shape: f32[1,512], index: 2, kind: input, shape index: {}]
  %s3 = inlined_call_operand.vmem [shape: f32[2,16,512], index: 3, kind: output, shape index: {}]
  %s4 = sld [smem:[#allocation0]]
  $region76: #{discriminator_forward.7} parent=0
    _
  %s6 = ssub.s32 1, %s4
  %s7 = scalar_select 0, %s6, %s4
  $region1: #{discriminator_forward.7} parent=0
    #allocation3 [shape = 'u8[32768]{0}', space=vmem, size = 0x8000, scoped, tag = 'input window, operand 0']
    loop: start=0, step=1, limit=18
    $region2: #{discriminator_forward.7} parent=1 // loop_pre_header
      _
    $region3: #{discriminator_forward.7} parent=1 // loop_header
      %s9 = sphi 0, %s13
      %p10 = scmp.ge.s32.totalorder %s9, 18
      %s16 = sphi 0, %s28
      %s17 = sphi 0, %s24
      %s18 = sphi 0, %s16
      %s19 = sphi 0, %s17
      %s20 = sphi 0, %s18
      %s21 = sphi 0, %s19
      %s33 = sphi 0, %s35
      %s36 = sphi 0, %s33
      %s37 = sphi 0, %s36
      %s53 = sphi 0, %s37
      %s59 = sphi 0, %s61
      %s62 = sphi 0, %s59
      %s63 = sphi 0, %s62
      %s79 = sphi 0, %s63
      %s83 = sphi 0, %s83
      %s85 = sphi 0, %s83
      %s86 = sphi 0, %s85
      %s100 = sphi 0, %s86
      %s106 = sphi 0, %s108
      %s109 = sphi 0, %s106
      %s110 = sphi 0, %s109
      %s126 = sphi 0, %s110
    $region4: #{discriminator_forward.7} parent=1 // loop_header_branch
      %12 = sbr.rel (%p10) target = $region8
    $region5: #{discriminator_forward.7} parent=1 // loop_body
      %s14 = ssub.s32 %s9, 1
      %s15 = ssub.s32 %s9, 2
      %s22 = sadd.s32 1, %s17
      %p23 = scmp.ge.s32.totalorder %s22, 8
      %s24 = scalar_select %p23, 0, %s22
      %s25 = sadd.s32 1, %s16
      %s26 = scalar_select %p23, %s25, %s16
      %p27 = scmp.ge.s32.totalorder %s26, 2
      %s28 = scalar_select %p27, 0, %s26
      %s29 = ssub.s32 %s16, %s28
      %s30 = ssub.s32 %s17, %s24
      %s31 = sor.u32 %s29, %s30
      %p32 = scmp.eq.s32.totalorder %s31, 0
      %s34 = sadd.s32 %s33, 1
      %s35 = scalar_select %p32, %s33, %s34
      %p38 = pneg %p32
      %p39 = scmp.eq.s32.totalorder %s9, 15
      %p40 = por %p38, %p39
      %p41 = scmp.ne.s32.totalorder %s33, %s36
      %p42 = scmp.eq.s32.totalorder %s9, 0
      %p43 = por %p41, %p42
      %p44 = scmp.ne.s32.totalorder %s33, %s36
      %p45 = scmp.eq.s32.totalorder %s14, 15
      %p46 = por %p44, %p45
      %p47 = scmp.ne.s32.totalorder %s36, %s37
      %p48 = scmp.eq.s32.totalorder %s14, 0
      %p49 = por %p47, %p48
      %p50 = scmp.ne.s32.totalorder %s36, %s37
      %p51 = scmp.eq.s32.totalorder %s15, 15
      %p52 = por %p50, %p51
      %p54 = scmp.ne.s32.totalorder %s37, %s53
      %p55 = scmp.eq.s32.totalorder %s15, 0
      %p56 = por %p54, %p55
      %s57 = ssub.s32 %s17, %s24
      %p58 = scmp.eq.s32.totalorder %s57, 0
      %s60 = sadd.s32 %s59, 1
      %s61 = scalar_select %p58, %s59, %s60
      %p64 = pneg %p58
      %p65 = scmp.eq.s32.totalorder %s9, 15
      %p66 = por %p64, %p65
      %p67 = scmp.ne.s32.totalorder %s59, %s62
      %p68 = scmp.eq.s32.totalorder %s9, 0
      %p69 = por %p67, %p68
      %p70 = scmp.ne.s32.totalorder %s59, %s62
      %p71 = scmp.eq.s32.totalorder %s14, 15
      %p72 = por %p70, %p71
      %p73 = scmp.ne.s32.totalorder %s62, %s63
      %p74 = scmp.eq.s32.totalorder %s14, 0
      %p75 = por %p73, %p74
      %p76 = scmp.ne.s32.totalorder %s62, %s63
      %p77 = scmp.eq.s32.totalorder %s15, 15
      %p78 = por %p76, %p77
      %p80 = scmp.ne.s32.totalorder %s63, %s79
      %p81 = scmp.eq.s32.totalorder %s15, 0
      %p82 = por %p80, %p81
      %s84 = sadd.s32 %s83, 1
      %p87 = scmp.eq.s32.totalorder %s9, 15
      %p88 = scmp.ne.s32.totalorder %s83, %s85
      %p89 = scmp.eq.s32.totalorder %s9, 0
      %p90 = por %p88, %p89
      %p91 = scmp.ne.s32.totalorder %s83, %s85
      %p92 = scmp.eq.s32.totalorder %s14, 15
      %p93 = por %p91, %p92
      %p94 = scmp.ne.s32.totalorder %s85, %s86
      %p95 = scmp.eq.s32.totalorder %s14, 0
      %p96 = por %p94, %p95
      %p97 = scmp.ne.s32.totalorder %s85, %s86
      %p98 = scmp.eq.s32.totalorder %s15, 15
      %p99 = por %p97, %p98
      %p101 = scmp.ne.s32.totalorder %s86, %s100
      %p102 = scmp.eq.s32.totalorder %s15, 0
      %p103 = por %p101, %p102
      %s104 = ssub.s32 %s16, %s28
      %p105 = scmp.eq.s32.totalorder %s104, 0
      %s107 = sadd.s32 %s106, 1
      %s108 = scalar_select %p105, %s106, %s107
      %p111 = pneg %p105
      %p112 = scmp.eq.s32.totalorder %s9, 15
      %p113 = por %p111, %p112
      %p114 = scmp.ne.s32.totalorder %s106, %s109
      %p115 = scmp.eq.s32.totalorder %s9, 0
      %p116 = por %p114, %p115
      %p117 = scmp.ne.s32.totalorder %s106, %s109
      %p118 = scmp.eq.s32.totalorder %s14, 15
      %p119 = por %p117, %p118
      %p120 = scmp.ne.s32.totalorder %s109, %s110
      %p121 = scmp.eq.s32.totalorder %s14, 0
      %p122 = por %p120, %p121
      %p123 = scmp.ne.s32.totalorder %s109, %s110
      %p124 = scmp.eq.s32.totalorder %s15, 15
      %p125 = por %p123, %p124
      %p127 = scmp.ne.s32.totalorder %s110, %s126
      %p128 = scmp.eq.s32.totalorder %s15, 0
      %p129 = por %p127, %p128
      %p130 = scmp.le.s32.totalorder 1, %s9
      %p131 = scmp.lt.s32.totalorder %s9, 17
      %p132 = pnand %p130, %p131
      %p133 = pneg %p132
      // Predicated region
      $region9: #{discriminator_forward.7} parent=5 // pred_check
        _
      $region10: #{discriminator_forward.7} parent=5 // pred_check_branch
        %135 = sbr.rel (%p132) target = $region12
      $region11: #{discriminator_forward.7} parent=5 // pred_region
        %s136 = ssub.s32 %s9, 1
        // Predicated region
        $region13: #{discriminator_forward.7} parent=11 // pred_check
          %p137 = pneg %p96
        $region14: #{discriminator_forward.7} parent=11 // pred_check_branch
          %139 = sbr.rel (%p137) target = $region16
        $region15: #{discriminator_forward.7} parent=11 // pred_region
          _
        $region16: #{discriminator_forward.7} parent=11 // pred_fallthru
          _
      $region12: #{discriminator_forward.7} parent=5 // pred_fallthru
        _
      %p140 = scmp.lt.s32.totalorder %s9, 16
      // Predicated region
      $region17: #{discriminator_forward.7} parent=5 // pred_check
        %p141 = pneg %p140
      $region18: #{discriminator_forward.7} parent=5 // pred_check_branch
        %143 = sbr.rel (%p141) target = $region20
      $region19: #{discriminator_forward.7} parent=5 // pred_region
        // Predicated region
        $region21: #{discriminator_forward.7} parent=19 // pred_check
          %p144 = pneg %p43
        $region22: #{discriminator_forward.7} parent=19 // pred_check_branch
          %146 = sbr.rel (%p144) target = $region24
        $region23: #{discriminator_forward.7} parent=19 // pred_region
          %s147 = sand.u32 %s33, 1
          %s148 = sand.u32 %s33, 1
          %s149 = smul.addr %s148, 32
          %s150 = scalar_lea.vmem [#allocation3], %s149
          %s151 = smul.u32 4, %s17
          %s152 = smul.addr %s16, 64
          %s153 = sadd.s32 %s151, %s152
          %s154 = smul.addr %s153, 4
          %s155 = scalar_lea.vmem %s0, %s154
          // Predicated region
          $region25: #{discriminator_forward.7} parent=23 // pred_check
            _
          $region26: #{discriminator_forward.7} parent=23 // pred_check_branch
            %157 = sbr.rel (0) target = $region28
          $region27: #{discriminator_forward.7} parent=23 // pred_region
            // Predicated region
            $region29: #{discriminator_forward.7} parent=27 // pred_check
              _
            $region30: #{discriminator_forward.7} parent=27 // pred_check_branch
              %159 = sbr.rel (0) target = $region32
            $region31: #{discriminator_forward.7} parent=27 // pred_region
              loop: start=0, step=1, limit=1
              $region33: #{discriminator_forward.7} parent=31 // loop_pre_header
                _
              $region34: #{discriminator_forward.7} parent=31 // loop_header
                %s161 = sphi 0, %s165
                %p162 = scmp.ge.s32.totalorder %s161, 1
                %s166 = sphi %s155, %s155
                %s167 = sphi %s150, %s150
              $region35: #{discriminator_forward.7} parent=31 // loop_header_branch
                %164 = sbr.rel (%p162) target = $region39
              $region36: #{discriminator_forward.7} parent=31 // loop_body
                %v168 = vld [vmem:[%s166] sm:$0xff]
                %169 = vst [vmem:[%s167] sm:$0xff] %v168
                %v170 = vld [vmem:[%s166 + $0x8] sm:$0xff]
                %171 = vst [vmem:[%s167 + $0x8] sm:$0xff] %v170
                %v172 = vld [vmem:[%s166 + $0x80] sm:$0xff]
                %173 = vst [vmem:[%s167 + $0x10] sm:$0xff] %v172
                %v174 = vld [vmem:[%s166 + $0x88] sm:$0xff]
                %175 = vst [vmem:[%s167 + $0x18] sm:$0xff] %v174
              $region37: #{discriminator_forward.7} parent=31 // loop_footer
                %s165 = sadd.s32 1, %s161
              $region38: #{discriminator_forward.7} parent=31 // loop_footer_branch
                %160 = sbr.rel target = $region34
              $region39: #{discriminator_forward.7} parent=31 // loop_exit
                _
            $region32: #{discriminator_forward.7} parent=27 // pred_fallthru
              _
            // Predicated region
            $region40: #{discriminator_forward.7} parent=27 // pred_check
              _
            $region41: #{discriminator_forward.7} parent=27 // pred_check_branch
              %177 = sbr.rel target = $region43
            $region42: #{discriminator_forward.7} parent=27 // pred_region
              _
            $region43: #{discriminator_forward.7} parent=27 // pred_fallthru
              _
          $region28: #{discriminator_forward.7} parent=23 // pred_fallthru
            _
          %178 = vnop
        $region24: #{discriminator_forward.7} parent=19 // pred_fallthru
          _
        // Predicated region
        $region44: #{discriminator_forward.7} parent=19 // pred_check
          %p179 = pneg %p69
        $region45: #{discriminator_forward.7} parent=19 // pred_check_branch
          %181 = sbr.rel (%p179) target = $region47
        $region46: #{discriminator_forward.7} parent=19 // pred_region
          %s182 = smul.u32 64, %s17
          %p183 = scmp.lt.s32.totalorder %s182, 511
          %s184 = scalar_select %p183, %s182, 511
          %s185 = smul.addr %s184, 4
          %s186 = smul.addr %s185, 4
          %s187 = scalar_lea.vmem %s1, %s186
          %s188 = smul.u32 64, %s17
        $region47: #{discriminator_forward.7} parent=19 // pred_fallthru
          _
      $region20: #{discriminator_forward.7} parent=5 // pred_fallthru
        _
      %p189 = scmp.le.s32.totalorder 1, %s9
      %p190 = scmp.lt.s32.totalorder %s9, 17
      %p191 = pnand %p189, %p190
      %p192 = pneg %p191
      // Predicated region
      $region48: #{discriminator_forward.7} parent=5 // pred_check
        _
      $region49: #{discriminator_forward.7} parent=5 // pred_check_branch
        %194 = sbr.rel (%p191) target = $region51
      $region50: #{discriminator_forward.7} parent=5 // pred_region
        %s195 = ssub.s32 %s9, 1
        %s196 = sand.u32 %s36, 1
        %s197 = sand.u32 %s36, 1
        %s198 = smul.addr %s197, 32
        %s199 = scalar_lea.vmem [#allocation3], %s198
        // Predicated region
        $region52: #{discriminator_forward.7} parent=50 // pred_check
          %p200 = pneg %p49
        $region53: #{discriminator_forward.7} parent=50 // pred_check_branch
          %202 = sbr.rel (%p200) target = $region55
        $region54: #{discriminator_forward.7} parent=50 // pred_region
          _
        $region55: #{discriminator_forward.7} parent=50 // pred_fallthru
          _
        %s203 = sand.u32 %s36, 1
        %s204 = sand.u32 %s36, 1
        %s205 = smul.addr %s204, 32
        %s206 = scalar_lea.vmem [#allocation3], %s205
        %p207 = pneg %p49
        %p208 = pneg %p46
        %s209 = smul.u32 64, %s19
        %p210 = scmp.lt.s32.totalorder %s209, 511
        %s211 = scalar_select %p210, %s209, 511
        %s212 = smul.addr %s211, 4
        %s213 = smul.addr %s212, 4
        %s214 = scalar_lea.vmem %s1, %s213
        %p215 = pneg %p75
        %p216 = pneg %p72
        %p217 = pneg %p96
        %p218 = pneg %p93
        %p219 = pneg %p122
        %p220 = pneg %p119
        %p221 = scmp.lt.s32.totalorder %s18, 1
        %s222 = scalar_select %p221, %s18, 1
        %s223 = smul.addr %s222, 8
        %s224 = smul.addr %s223, 8
        %s225 = scalar_lea.vmem %s3, %s224
        %s226 = smul.u32 4, %s19
        %s227 = smul.u32 64, %s19
        %p228 = scmp.lt.s32.totalorder %s227, 511
        %s229 = scalar_select %p228, %s227, 511
        %s230 = smul.addr %s229, 4
        %s231 = smul.addr %s230, 4
        %s232 = scalar_lea.vmem %s1, %s231
        %s233 = smul.u32 64, %s19
        %p234 = scmp.lt.s32.totalorder %s18, 1
        %s235 = scalar_select %p234, %s18, 1
        %s236 = smul.addr %s235, 8
        %s237 = smul.addr %s236, 8
        %s238 = scalar_lea.vmem %s3, %s237
        %p239 = scmp.eq.s32.totalorder %s19, 0
        // Predicated region
        $region56: #{discriminator_forward.7} parent=50 // pred_check
          %p240 = pneg %p239
        $region57: #{discriminator_forward.7} parent=50 // pred_check_branch
          %242 = sbr.rel (%p240) target = $region59
        $region58: #{discriminator_forward.7} parent=50 // pred_region
          %243 = vst [vmem:[#allocation2] sm:$0xff] 0.0
          %244 = vst [vmem:[#allocation2 + $0x8] sm:$0xff] 0.0
          %245 = vst [vmem:[#allocation2 + $0x10] sm:$0xff] 0.0
          %246 = vst [vmem:[#allocation2 + $0x18] sm:$0xff] 0.0
          %247 = vst [vmem:[#allocation2 + $0x20] sm:$0xff] 0.0
          %248 = vst [vmem:[#allocation2 + $0x28] sm:$0xff] 0.0
          %249 = vst [vmem:[#allocation2 + $0x30] sm:$0xff] 0.0
          %250 = vst [vmem:[#allocation2 + $0x38] sm:$0xff] 0.0
        $region59: #{discriminator_forward.7} parent=50 // pred_fallthru
          _
        %v251 = vld [vmem:[#allocation2] sm:$0xff]
        %v252 = vld [vmem:[#allocation2 + $0x8] sm:$0xff]
        %v253 = vld [vmem:[#allocation2 + $0x10] sm:$0xff]
        %v254 = vld [vmem:[#allocation2 + $0x18] sm:$0xff]
        %v255 = vld [vmem:[#allocation2 + $0x20] sm:$0xff]
        %v256 = vld [vmem:[#allocation2 + $0x28] sm:$0xff]
        %v257 = vld [vmem:[#allocation2 + $0x30] sm:$0xff]
        %v258 = vld [vmem:[#allocation2 + $0x38] sm:$0xff]
        %v259 = vld [vmem:[%s199] sm:$0xff]
        %v260 = vld [vmem:[%s199 + $0x8] sm:$0xff]
        %v261 = vld [vmem:[%s199 + $0x10] sm:$0xff]
        %v262 = vld [vmem:[%s199 + $0x18] sm:$0xff]
        %v263 = vld [vmem:[%s232] sm:$0xff]
        %v264 = vld [vmem:[%s232 + $0x8] sm:$0xff]
        %v265 = vld [vmem:[%s232 + $0x10] sm:$0xff]
        %v266 = vld [vmem:[%s232 + $0x18] sm:$0xff]
        %v267 = vld [vmem:[%s232 + $0x20] sm:$0xff]
        %v268 = vld [vmem:[%s232 + $0x28] sm:$0xff]
        %v269 = vld [vmem:[%s232 + $0x30] sm:$0xff]
        %v270 = vld [vmem:[%s232 + $0x38] sm:$0xff]
        %v271 = vld [vmem:[%s232 + $0x40] sm:$0xff]
        %v272 = vld [vmem:[%s232 + $0x48] sm:$0xff]
        %v273 = vld [vmem:[%s232 + $0x50] sm:$0xff]
        %v274 = vld [vmem:[%s232 + $0x58] sm:$0xff]
        %v275 = vld [vmem:[%s232 + $0x60] sm:$0xff]
        %v276 = vld [vmem:[%s232 + $0x68] sm:$0xff]
        %v277 = vld [vmem:[%s232 + $0x70] sm:$0xff]
        %v278 = vld [vmem:[%s232 + $0x78] sm:$0xff]
        %v279 = vld [vmem:[%s232 + $0x80] sm:$0xff]
        %v280 = vld [vmem:[%s232 + $0x88] sm:$0xff]
        %v281 = vld [vmem:[%s232 + $0x90] sm:$0xff]
        %v282 = vld [vmem:[%s232 + $0x98] sm:$0xff]
        %v283 = vld [vmem:[%s232 + $0xa0] sm:$0xff]
        %v284 = vld [vmem:[%s232 + $0xa8] sm:$0xff]
        %v285 = vld [vmem:[%s232 + $0xb0] sm:$0xff]
        %v286 = vld [vmem:[%s232 + $0xb8] sm:$0xff]
        %v287 = vld [vmem:[%s232 + $0xc0] sm:$0xff]
        %v288 = vld [vmem:[%s232 + $0xc8] sm:$0xff]
        %v289 = vld [vmem:[%s232 + $0xd0] sm:$0xff]
        %v290 = vld [vmem:[%s232 + $0xd8] sm:$0xff]
        %v291 = vld [vmem:[%s232 + $0xe0] sm:$0xff]
        %v292 = vld [vmem:[%s232 + $0xe8] sm:$0xff]
        %v293 = vld [vmem:[%s232 + $0xf0] sm:$0xff]
        %v294 = vld [vmem:[%s232 + $0xf8] sm:$0xff]
        %v295 = vld [vmem:[%s232 + $0x100] sm:$0xff]
        %v296 = vld [vmem:[%s232 + $0x108] sm:$0xff]
        %v297 = vld [vmem:[%s232 + $0x110] sm:$0xff]
        %v298 = vld [vmem:[%s232 + $0x118] sm:$0xff]
        %v299 = vld [vmem:[%s232 + $0x120] sm:$0xff]
        %v300 = vld [vmem:[%s232 + $0x128] sm:$0xff]
        %v301 = vld [vmem:[%s232 + $0x130] sm:$0xff]
        %v302 = vld [vmem:[%s232 + $0x138] sm:$0xff]
        %v303 = vld [vmem:[%s232 + $0x140] sm:$0xff]
        %v304 = vld [vmem:[%s232 + $0x148] sm:$0xff]
        %v305 = vld [vmem:[%s232 + $0x150] sm:$0xff]
        %v306 = vld [vmem:[%s232 + $0x158] sm:$0xff]
        %v307 = vld [vmem:[%s232 + $0x160] sm:$0xff]
        %v308 = vld [vmem:[%s232 + $0x168] sm:$0xff]
        %v309 = vld [vmem:[%s232 + $0x170] sm:$0xff]
        %v310 = vld [vmem:[%s232 + $0x178] sm:$0xff]
        %v311 = vld [vmem:[%s232 + $0x180] sm:$0xff]
        %v312 = vld [vmem:[%s232 + $0x188] sm:$0xff]
        %v313 = vld [vmem:[%s232 + $0x190] sm:$0xff]
        %v314 = vld [vmem:[%s232 + $0x198] sm:$0xff]
        %v315 = vld [vmem:[%s232 + $0x1a0] sm:$0xff]
        %v316 = vld [vmem:[%s232 + $0x1a8] sm:$0xff]
        %v317 = vld [vmem:[%s232 + $0x1b0] sm:$0xff]
        %v318 = vld [vmem:[%s232 + $0x1b8] sm:$0xff]
        %v319 = vld [vmem:[%s232 + $0x1c0] sm:$0xff]
        %v320 = vld [vmem:[%s232 + $0x1c8] sm:$0xff]
        %v321 = vld [vmem:[%s232 + $0x1d0] sm:$0xff]
        %v322 = vld [vmem:[%s232 + $0x1d8] sm:$0xff]
        %v323 = vld [vmem:[%s232 + $0x1e0] sm:$0xff]
        %v324 = vld [vmem:[%s232 + $0x1e8] sm:$0xff]
        %v325 = vld [vmem:[%s232 + $0x1f0] sm:$0xff]
        %v326 = vld [vmem:[%s232 + $0x1f8] sm:$0xff]
        %v327 = vld [vmem:[%s232 + $0x200] sm:$0xff]
        %v328 = vld [vmem:[%s232 + $0x208] sm:$0xff]
        %v329 = vld [vmem:[%s232 + $0x210] sm:$0xff]
        %v330 = vld [vmem:[%s232 + $0x218] sm:$0xff]
        %v331 = vld [vmem:[%s232 + $0x220] sm:$0xff]
        %v332 = vld [vmem:[%s232 + $0x228] sm:$0xff]
        %v333 = vld [vmem:[%s232 + $0x230] sm:$0xff]
        %v334 = vld [vmem:[%s232 + $0x238] sm:$0xff]
        %v335 = vld [vmem:[%s232 + $0x240] sm:$0xff]
        %v336 = vld [vmem:[%s232 + $0x248] sm:$0xff]
        %v337 = vld [vmem:[%s232 + $0x250] sm:$0xff]
        %v338 = vld [vmem:[%s232 + $0x258] sm:$0xff]
        %v339 = vld [vmem:[%s232 + $0x260] sm:$0xff]
        %v340 = vld [vmem:[%s232 + $0x268] sm:$0xff]
        %v341 = vld [vmem:[%s232 + $0x270] sm:$0xff]
        %v342 = vld [vmem:[%s232 + $0x278] sm:$0xff]
        %v343 = vld [vmem:[%s232 + $0x280] sm:$0xff]
        %v344 = vld [vmem:[%s232 + $0x288] sm:$0xff]
        %v345 = vld [vmem:[%s232 + $0x290] sm:$0xff]
        %v346 = vld [vmem:[%s232 + $0x298] sm:$0xff]
        %v347 = vld [vmem:[%s232 + $0x2a0] sm:$0xff]
        %v348 = vld [vmem:[%s232 + $0x2a8] sm:$0xff]
        %v349 = vld [vmem:[%s232 + $0x2b0] sm:$0xff]
        %v350 = vld [vmem:[%s232 + $0x2b8] sm:$0xff]
        %v351 = vld [vmem:[%s232 + $0x2c0] sm:$0xff]
        %v352 = vld [vmem:[%s232 + $0x2c8] sm:$0xff]
        %v353 = vld [vmem:[%s232 + $0x2d0] sm:$0xff]
        %v354 = vld [vmem:[%s232 + $0x2d8] sm:$0xff]
        %v355 = vld [vmem:[%s232 + $0x2e0] sm:$0xff]
        %v356 = vld [vmem:[%s232 + $0x2e8] sm:$0xff]
        %v357 = vld [vmem:[%s232 + $0x2f0] sm:$0xff]
        %v358 = vld [vmem:[%s232 + $0x2f8] sm:$0xff]
        %v359 = vld [vmem:[%s232 + $0x300] sm:$0xff]
        %v360 = vld [vmem:[%s232 + $0x308] sm:$0xff]
        %v361 = vld [vmem:[%s232 + $0x310] sm:$0xff]
        %v362 = vld [vmem:[%s232 + $0x318] sm:$0xff]
        %v363 = vld [vmem:[%s232 + $0x320] sm:$0xff]
        %v364 = vld [vmem:[%s232 + $0x328] sm:$0xff]
        %v365 = vld [vmem:[%s232 + $0x330] sm:$0xff]
        %v366 = vld [vmem:[%s232 + $0x338] sm:$0xff]
        %v367 = vld [vmem:[%s232 + $0x340] sm:$0xff]
        %v368 = vld [vmem:[%s232 + $0x348] sm:$0xff]
        %v369 = vld [vmem:[%s232 + $0x350] sm:$0xff]
        %v370 = vld [vmem:[%s232 + $0x358] sm:$0xff]
        %v371 = vld [vmem:[%s232 + $0x360] sm:$0xff]
        %v372 = vld [vmem:[%s232 + $0x368] sm:$0xff]
        %v373 = vld [vmem:[%s232 + $0x370] sm:$0xff]
        %v374 = vld [vmem:[%s232 + $0x378] sm:$0xff]
        %v375 = vld [vmem:[%s232 + $0x380] sm:$0xff]
        %v376 = vld [vmem:[%s232 + $0x388] sm:$0xff]
        %v377 = vld [vmem:[%s232 + $0x390] sm:$0xff]
        %v378 = vld [vmem:[%s232 + $0x398] sm:$0xff]
        %v379 = vld [vmem:[%s232 + $0x3a0] sm:$0xff]
        %v380 = vld [vmem:[%s232 + $0x3a8] sm:$0xff]
        %v381 = vld [vmem:[%s232 + $0x3b0] sm:$0xff]
        %v382 = vld [vmem:[%s232 + $0x3b8] sm:$0xff]
        %v383 = vld [vmem:[%s232 + $0x3c0] sm:$0xff]
        %v384 = vld [vmem:[%s232 + $0x3c8] sm:$0xff]
        %v385 = vld [vmem:[%s232 + $0x3d0] sm:$0xff]
        %v386 = vld [vmem:[%s232 + $0x3d8] sm:$0xff]
        %v387 = vld [vmem:[%s232 + $0x3e0] sm:$0xff]
        %v388 = vld [vmem:[%s232 + $0x3e8] sm:$0xff]
        %v389 = vld [vmem:[%s232 + $0x3f0] sm:$0xff]
        %v390 = vld [vmem:[%s232 + $0x3f8] sm:$0xff]
        %v395 = vunpack.c.l.b16 %v259
        %v396 = vunpack.c.h.b16 %v259
        %v397 = vunpack.c.l.b16 %v260
        %v398 = vunpack.c.h.b16 %v260
        %v399 = vunpack.c.l.b16 %v261
        %v400 = vunpack.c.h.b16 %v261
        %v401 = vunpack.c.l.b16 %v262
        %v402 = vunpack.c.h.b16 %v262
        %v403 = vpack.c.b16 %v399, %v395
        %v404 = vpack.c.b16 %v400, %v396
        %v405 = vpack.c.b16 %v401, %v397
        %v406 = vpack.c.b16 %v402, %v398
        %v539 = vunpack.c.l.b16 %v263
        %v540 = vunpack.c.h.b16 %v263
        %v541 = vunpack.c.l.b16 %v264
        %v542 = vunpack.c.h.b16 %v264
        %v543 = vunpack.c.l.b16 %v265
        %v544 = vunpack.c.h.b16 %v265
        %v545 = vunpack.c.l.b16 %v266
        %v546 = vunpack.c.h.b16 %v266
        %v547 = vunpack.c.l.b16 %v267
        %v548 = vunpack.c.h.b16 %v267
        %v549 = vunpack.c.l.b16 %v268
        %v550 = vunpack.c.h.b16 %v268
        %v551 = vunpack.c.l.b16 %v269
        %v552 = vunpack.c.h.b16 %v269
        %v553 = vunpack.c.l.b16 %v270
        %v554 = vunpack.c.h.b16 %v270
        %v555 = vunpack.c.l.b16 %v271
        %v556 = vunpack.c.h.b16 %v271
        %v557 = vunpack.c.l.b16 %v272
        %v558 = vunpack.c.h.b16 %v272
        %v559 = vunpack.c.l.b16 %v273
        %v560 = vunpack.c.h.b16 %v273
        %v561 = vunpack.c.l.b16 %v274
        %v562 = vunpack.c.h.b16 %v274
        %v563 = vunpack.c.l.b16 %v275
        %v564 = vunpack.c.h.b16 %v275
        %v565 = vunpack.c.l.b16 %v276
        %v566 = vunpack.c.h.b16 %v276
        %v567 = vunpack.c.l.b16 %v277
        %v568 = vunpack.c.h.b16 %v277
        %v569 = vunpack.c.l.b16 %v278
        %v570 = vunpack.c.h.b16 %v278
        %v571 = vunpack.c.l.b16 %v279
        %v572 = vunpack.c.h.b16 %v279
        %v573 = vunpack.c.l.b16 %v280
        %v574 = vunpack.c.h.b16 %v280
        %v575 = vunpack.c.l.b16 %v281
        %v576 = vunpack.c.h.b16 %v281
        %v577 = vunpack.c.l.b16 %v282
        %v578 = vunpack.c.h.b16 %v282
        %v579 = vunpack.c.l.b16 %v283
        %v580 = vunpack.c.h.b16 %v283
        %v581 = vunpack.c.l.b16 %v284
        %v582 = vunpack.c.h.b16 %v284
        %v583 = vunpack.c.l.b16 %v285
        %v584 = vunpack.c.h.b16 %v285
        %v585 = vunpack.c.l.b16 %v286
        %v586 = vunpack.c.h.b16 %v286
        %v587 = vunpack.c.l.b16 %v287
        %v588 = vunpack.c.h.b16 %v287
        %v589 = vunpack.c.l.b16 %v288
        %v590 = vunpack.c.h.b16 %v288
        %v591 = vunpack.c.l.b16 %v289
        %v592 = vunpack.c.h.b16 %v289
        %v593 = vunpack.c.l.b16 %v290
        %v594 = vunpack.c.h.b16 %v290
        %v595 = vunpack.c.l.b16 %v291
        %v596 = vunpack.c.h.b16 %v291
        %v597 = vunpack.c.l.b16 %v292
        %v598 = vunpack.c.h.b16 %v292
        %v599 = vunpack.c.l.b16 %v293
        %v600 = vunpack.c.h.b16 %v293
        %v601 = vunpack.c.l.b16 %v294
        %v602 = vunpack.c.h.b16 %v294
        %v603 = vunpack.c.l.b16 %v295
        %v604 = vunpack.c.h.b16 %v295
        %v605 = vunpack.c.l.b16 %v296
        %v606 = vunpack.c.h.b16 %v296
        %v607 = vunpack.c.l.b16 %v297
        %v608 = vunpack.c.h.b16 %v297
        %v609 = vunpack.c.l.b16 %v298
        %v610 = vunpack.c.h.b16 %v298
        %v611 = vunpack.c.l.b16 %v299
        %v612 = vunpack.c.h.b16 %v299
        %v613 = vunpack.c.l.b16 %v300
        %v614 = vunpack.c.h.b16 %v300
        %v615 = vunpack.c.l.b16 %v301
        %v616 = vunpack.c.h.b16 %v301
        %v617 = vunpack.c.l.b16 %v302
        %v618 = vunpack.c.h.b16 %v302
        %v619 = vunpack.c.l.b16 %v303
        %v620 = vunpack.c.h.b16 %v303
        %v621 = vunpack.c.l.b16 %v304
        %v622 = vunpack.c.h.b16 %v304
        %v623 = vunpack.c.l.b16 %v305
        %v624 = vunpack.c.h.b16 %v305
        %v625 = vunpack.c.l.b16 %v306
        %v626 = vunpack.c.h.b16 %v306
        %v627 = vunpack.c.l.b16 %v307
        %v628 = vunpack.c.h.b16 %v307
        %v629 = vunpack.c.l.b16 %v308
        %v630 = vunpack.c.h.b16 %v308
        %v631 = vunpack.c.l.b16 %v309
        %v632 = vunpack.c.h.b16 %v309
        %v633 = vunpack.c.l.b16 %v310
        %v634 = vunpack.c.h.b16 %v310
        %v635 = vunpack.c.l.b16 %v311
        %v636 = vunpack.c.h.b16 %v311
        %v637 = vunpack.c.l.b16 %v312
        %v638 = vunpack.c.h.b16 %v312
        %v639 = vunpack.c.l.b16 %v313
        %v640 = vunpack.c.h.b16 %v313
        %v641 = vunpack.c.l.b16 %v314
        %v642 = vunpack.c.h.b16 %v314
        %v643 = vunpack.c.l.b16 %v315
        %v644 = vunpack.c.h.b16 %v315
        %v645 = vunpack.c.l.b16 %v316
        %v646 = vunpack.c.h.b16 %v316
        %v647 = vunpack.c.l.b16 %v317
        %v648 = vunpack.c.h.b16 %v317
        %v649 = vunpack.c.l.b16 %v318
        %v650 = vunpack.c.h.b16 %v318
        %v651 = vunpack.c.l.b16 %v319
        %v652 = vunpack.c.h.b16 %v319
        %v653 = vunpack.c.l.b16 %v320
        %v654 = vunpack.c.h.b16 %v320
        %v655 = vunpack.c.l.b16 %v321
        %v656 = vunpack.c.h.b16 %v321
        %v657 = vunpack.c.l.b16 %v322
        %v658 = vunpack.c.h.b16 %v322
        %v659 = vunpack.c.l.b16 %v323
        %v660 = vunpack.c.h.b16 %v323
        %v661 = vunpack.c.l.b16 %v324
        %v662 = vunpack.c.h.b16 %v324
        %v663 = vunpack.c.l.b16 %v325
        %v664 = vunpack.c.h.b16 %v325
        %v665 = vunpack.c.l.b16 %v326
        %v666 = vunpack.c.h.b16 %v326
        %v667 = vunpack.c.l.b16 %v327
        %v668 = vunpack.c.h.b16 %v327
        %v669 = vunpack.c.l.b16 %v328
        %v670 = vunpack.c.h.b16 %v328
        %v671 = vunpack.c.l.b16 %v329
        %v672 = vunpack.c.h.b16 %v329
        %v673 = vunpack.c.l.b16 %v330
        %v674 = vunpack.c.h.b16 %v330
        %v675 = vunpack.c.l.b16 %v331
        %v676 = vunpack.c.h.b16 %v331
        %v677 = vunpack.c.l.b16 %v332
        %v678 = vunpack.c.h.b16 %v332
        %v679 = vunpack.c.l.b16 %v333
        %v680 = vunpack.c.h.b16 %v333
        %v681 = vunpack.c.l.b16 %v334
        %v682 = vunpack.c.h.b16 %v334
        %v683 = vunpack.c.l.b16 %v335
        %v684 = vunpack.c.h.b16 %v335
        %v685 = vunpack.c.l.b16 %v336
        %v686 = vunpack.c.h.b16 %v336
        %v687 = vunpack.c.l.b16 %v337
        %v688 = vunpack.c.h.b16 %v337
        %v689 = vunpack.c.l.b16 %v338
        %v690 = vunpack.c.h.b16 %v338
        %v691 = vunpack.c.l.b16 %v339
        %v692 = vunpack.c.h.b16 %v339
        %v693 = vunpack.c.l.b16 %v340
        %v694 = vunpack.c.h.b16 %v340
        %v695 = vunpack.c.l.b16 %v341
        %v696 = vunpack.c.h.b16 %v341
        %v697 = vunpack.c.l.b16 %v342
        %v698 = vunpack.c.h.b16 %v342
        %v699 = vunpack.c.l.b16 %v343
        %v700 = vunpack.c.h.b16 %v343
        %v701 = vunpack.c.l.b16 %v344
        %v702 = vunpack.c.h.b16 %v344
        %v703 = vunpack.c.l.b16 %v345
        %v704 = vunpack.c.h.b16 %v345
        %v705 = vunpack.c.l.b16 %v346
        %v706 = vunpack.c.h.b16 %v346
        %v707 = vunpack.c.l.b16 %v347
        %v708 = vunpack.c.h.b16 %v347
        %v709 = vunpack.c.l.b16 %v348
        %v710 = vunpack.c.h.b16 %v348
        %v711 = vunpack.c.l.b16 %v349
        %v712 = vunpack.c.h.b16 %v349
        %v713 = vunpack.c.l.b16 %v350
        %v714 = vunpack.c.h.b16 %v350
        %v715 = vunpack.c.l.b16 %v351
        %v716 = vunpack.c.h.b16 %v351
        %v717 = vunpack.c.l.b16 %v352
        %v718 = vunpack.c.h.b16 %v352
        %v719 = vunpack.c.l.b16 %v353
        %v720 = vunpack.c.h.b16 %v353
        %v721 = vunpack.c.l.b16 %v354
        %v722 = vunpack.c.h.b16 %v354
        %v723 = vunpack.c.l.b16 %v355
        %v724 = vunpack.c.h.b16 %v355
        %v725 = vunpack.c.l.b16 %v356
        %v726 = vunpack.c.h.b16 %v356
        %v727 = vunpack.c.l.b16 %v357
        %v728 = vunpack.c.h.b16 %v357
        %v729 = vunpack.c.l.b16 %v358
        %v730 = vunpack.c.h.b16 %v358
        %v731 = vunpack.c.l.b16 %v359
        %v732 = vunpack.c.h.b16 %v359
        %v733 = vunpack.c.l.b16 %v360
        %v734 = vunpack.c.h.b16 %v360
        %v735 = vunpack.c.l.b16 %v361
        %v736 = vunpack.c.h.b16 %v361
        %v737 = vunpack.c.l.b16 %v362
        %v738 = vunpack.c.h.b16 %v362
        %v739 = vunpack.c.l.b16 %v363
        %v740 = vunpack.c.h.b16 %v363
        %v741 = vunpack.c.l.b16 %v364
        %v742 = vunpack.c.h.b16 %v364
        %v743 = vunpack.c.l.b16 %v365
        %v744 = vunpack.c.h.b16 %v365
        %v745 = vunpack.c.l.b16 %v366
        %v746 = vunpack.c.h.b16 %v366
        %v747 = vunpack.c.l.b16 %v367
        %v748 = vunpack.c.h.b16 %v367
        %v749 = vunpack.c.l.b16 %v368
        %v750 = vunpack.c.h.b16 %v368
        %v751 = vunpack.c.l.b16 %v369
        %v752 = vunpack.c.h.b16 %v369
        %v753 = vunpack.c.l.b16 %v370
        %v754 = vunpack.c.h.b16 %v370
        %v755 = vunpack.c.l.b16 %v371
        %v756 = vunpack.c.h.b16 %v371
        %v757 = vunpack.c.l.b16 %v372
        %v758 = vunpack.c.h.b16 %v372
        %v759 = vunpack.c.l.b16 %v373
        %v760 = vunpack.c.h.b16 %v373
        %v761 = vunpack.c.l.b16 %v374
        %v762 = vunpack.c.h.b16 %v374
        %v763 = vunpack.c.l.b16 %v375
        %v764 = vunpack.c.h.b16 %v375
        %v765 = vunpack.c.l.b16 %v376
        %v766 = vunpack.c.h.b16 %v376
        %v767 = vunpack.c.l.b16 %v377
        %v768 = vunpack.c.h.b16 %v377
        %v769 = vunpack.c.l.b16 %v378
        %v770 = vunpack.c.h.b16 %v378
        %v771 = vunpack.c.l.b16 %v379
        %v772 = vunpack.c.h.b16 %v379
        %v773 = vunpack.c.l.b16 %v380
        %v774 = vunpack.c.h.b16 %v380
        %v775 = vunpack.c.l.b16 %v381
        %v776 = vunpack.c.h.b16 %v381
        %v777 = vunpack.c.l.b16 %v382
        %v778 = vunpack.c.h.b16 %v382
        %v779 = vunpack.c.l.b16 %v383
        %v780 = vunpack.c.h.b16 %v383
        %v781 = vunpack.c.l.b16 %v384
        %v782 = vunpack.c.h.b16 %v384
        %v783 = vunpack.c.l.b16 %v385
        %v784 = vunpack.c.h.b16 %v385
        %v785 = vunpack.c.l.b16 %v386
        %v786 = vunpack.c.h.b16 %v386
        %v787 = vunpack.c.l.b16 %v387
        %v788 = vunpack.c.h.b16 %v387
        %v789 = vunpack.c.l.b16 %v388
        %v790 = vunpack.c.h.b16 %v388
        %v791 = vunpack.c.l.b16 %v389
        %v792 = vunpack.c.h.b16 %v389
        %v793 = vunpack.c.l.b16 %v390
        %v794 = vunpack.c.h.b16 %v390
        %v795 = vpack.c.b16 %v543, %v539
        %v796 = vpack.c.b16 %v544, %v540
        %v797 = vpack.c.b16 %v545, %v541
        %v798 = vpack.c.b16 %v546, %v542
        %v799 = vpack.c.b16 %v551, %v547
        %v800 = vpack.c.b16 %v552, %v548
        %v801 = vpack.c.b16 %v553, %v549
        %v802 = vpack.c.b16 %v554, %v550
        %v803 = vpack.c.b16 %v559, %v555
        %v804 = vpack.c.b16 %v560, %v556
        %v805 = vpack.c.b16 %v561, %v557
        %v806 = vpack.c.b16 %v562, %v558
        %v807 = vpack.c.b16 %v567, %v563
        %v808 = vpack.c.b16 %v568, %v564
        %v809 = vpack.c.b16 %v569, %v565
        %v810 = vpack.c.b16 %v570, %v566
        %v811 = vpack.c.b16 %v575, %v571
        %v812 = vpack.c.b16 %v576, %v572
        %v813 = vpack.c.b16 %v577, %v573
        %v814 = vpack.c.b16 %v578, %v574
        %v815 = vpack.c.b16 %v583, %v579
        %v816 = vpack.c.b16 %v584, %v580
        %v817 = vpack.c.b16 %v585, %v581
        %v818 = vpack.c.b16 %v586, %v582
        %v819 = vpack.c.b16 %v591, %v587
        %v820 = vpack.c.b16 %v592, %v588
        %v821 = vpack.c.b16 %v593, %v589
        %v822 = vpack.c.b16 %v594, %v590
        %v823 = vpack.c.b16 %v599, %v595
        %v824 = vpack.c.b16 %v600, %v596
        %v825 = vpack.c.b16 %v601, %v597
        %v826 = vpack.c.b16 %v602, %v598
        %v827 = vpack.c.b16 %v607, %v603
        %v828 = vpack.c.b16 %v608, %v604
        %v829 = vpack.c.b16 %v609, %v605
        %v830 = vpack.c.b16 %v610, %v606
        %v831 = vpack.c.b16 %v615, %v611
        %v832 = vpack.c.b16 %v616, %v612
        %v833 = vpack.c.b16 %v617, %v613
        %v834 = vpack.c.b16 %v618, %v614
        %v835 = vpack.c.b16 %v623, %v619
        %v836 = vpack.c.b16 %v624, %v620
        %v837 = vpack.c.b16 %v625, %v621
        %v838 = vpack.c.b16 %v626, %v622
        %v839 = vpack.c.b16 %v631, %v627
        %v840 = vpack.c.b16 %v632, %v628
        %v841 = vpack.c.b16 %v633, %v629
        %v842 = vpack.c.b16 %v634, %v630
        %v843 = vpack.c.b16 %v639, %v635
        %v844 = vpack.c.b16 %v640, %v636
        %v845 = vpack.c.b16 %v641, %v637
        %v846 = vpack.c.b16 %v642, %v638
        %v847 = vpack.c.b16 %v647, %v643
        %v848 = vpack.c.b16 %v648, %v644
        %v849 = vpack.c.b16 %v649, %v645
        %v850 = vpack.c.b16 %v650, %v646
        %v851 = vpack.c.b16 %v655, %v651
        %v852 = vpack.c.b16 %v656, %v652
        %v853 = vpack.c.b16 %v657, %v653
        %v854 = vpack.c.b16 %v658, %v654
        %v855 = vpack.c.b16 %v663, %v659
        %v856 = vpack.c.b16 %v664, %v660
        %v857 = vpack.c.b16 %v665, %v661
        %v858 = vpack.c.b16 %v666, %v662
        %v859 = vpack.c.b16 %v671, %v667
        %v860 = vpack.c.b16 %v672, %v668
        %v861 = vpack.c.b16 %v673, %v669
        %v862 = vpack.c.b16 %v674, %v670
        %v863 = vpack.c.b16 %v679, %v675
        %v864 = vpack.c.b16 %v680, %v676
        %v865 = vpack.c.b16 %v681, %v677
        %v866 = vpack.c.b16 %v682, %v678
        %v867 = vpack.c.b16 %v687, %v683
        %v868 = vpack.c.b16 %v688, %v684
        %v869 = vpack.c.b16 %v689, %v685
        %v870 = vpack.c.b16 %v690, %v686
        %v871 = vpack.c.b16 %v695, %v691
        %v872 = vpack.c.b16 %v696, %v692
        %v873 = vpack.c.b16 %v697, %v693
        %v874 = vpack.c.b16 %v698, %v694
        %v875 = vpack.c.b16 %v703, %v699
        %v876 = vpack.c.b16 %v704, %v700
        %v877 = vpack.c.b16 %v705, %v701
        %v878 = vpack.c.b16 %v706, %v702
        %v879 = vpack.c.b16 %v711, %v707
        %v880 = vpack.c.b16 %v712, %v708
        %v881 = vpack.c.b16 %v713, %v709
        %v882 = vpack.c.b16 %v714, %v710
        %v883 = vpack.c.b16 %v719, %v715
        %v884 = vpack.c.b16 %v720, %v716
        %v885 = vpack.c.b16 %v721, %v717
        %v886 = vpack.c.b16 %v722, %v718
        %v887 = vpack.c.b16 %v727, %v723
        %v888 = vpack.c.b16 %v728, %v724
        %v889 = vpack.c.b16 %v729, %v725
        %v890 = vpack.c.b16 %v730, %v726
        %v891 = vpack.c.b16 %v735, %v731
        %v892 = vpack.c.b16 %v736, %v732
        %v893 = vpack.c.b16 %v737, %v733
        %v894 = vpack.c.b16 %v738, %v734
        %v895 = vpack.c.b16 %v743, %v739
        %v896 = vpack.c.b16 %v744, %v740
        %v897 = vpack.c.b16 %v745, %v741
        %v898 = vpack.c.b16 %v746, %v742
        %v899 = vpack.c.b16 %v751, %v747
        %v900 = vpack.c.b16 %v752, %v748
        %v901 = vpack.c.b16 %v753, %v749
        %v902 = vpack.c.b16 %v754, %v750
        %v903 = vpack.c.b16 %v759, %v755
        %v904 = vpack.c.b16 %v760, %v756
        %v905 = vpack.c.b16 %v761, %v757
        %v906 = vpack.c.b16 %v762, %v758
        %v907 = vpack.c.b16 %v767, %v763
        %v908 = vpack.c.b16 %v768, %v764
        %v909 = vpack.c.b16 %v769, %v765
        %v910 = vpack.c.b16 %v770, %v766
        %v911 = vpack.c.b16 %v775, %v771
        %v912 = vpack.c.b16 %v776, %v772
        %v913 = vpack.c.b16 %v777, %v773
        %v914 = vpack.c.b16 %v778, %v774
        %v915 = vpack.c.b16 %v783, %v779
        %v916 = vpack.c.b16 %v784, %v780
        %v917 = vpack.c.b16 %v785, %v781
        %v918 = vpack.c.b16 %v786, %v782
        %v919 = vpack.c.b16 %v791, %v787
        %v920 = vpack.c.b16 %v792, %v788
        %v921 = vpack.c.b16 %v793, %v789
        %v922 = vpack.c.b16 %v794, %v790
        %1051 = vmatpush.bf16.msra.mxu0 %v823
        %1052 = vmatpush.bf16.msra.mxu0 %v819
        %1053 = vmatpush.bf16.msra.mxu0 %v815
        %1054 = vmatpush.bf16.msra.mxu0 %v811
        %1055 = vmatpush.bf16.msra.mxu0 %v807
        %1056 = vmatpush.bf16.msra.mxu0 %v803
        %1057 = vmatpush.bf16.msra.mxu0 %v799
        %1058 = vmatpush.bf16.msra.mxu0 %v795
        %1059 = vmatmul.bf16.gmra.mxu0 %v403
        %v1060 = vpop.f32.mrf.mxu0
        %v1061 = vadd.f32 0.0, %v1060
        %v1062 = vpop.f32.mrf.mxu0
        %v1063 = vadd.f32 0.0, %v1062
        %1064 = vdwg.mxu0
        %1065 = vmatpush.bf16.msra.mxu0 %v855
        %1066 = vmatpush.bf16.msra.mxu0 %v851
        %1067 = vmatpush.bf16.msra.mxu0 %v847
        %1068 = vmatpush.bf16.msra.mxu0 %v843
        %1069 = vmatpush.bf16.msra.mxu0 %v839
        %1070 = vmatpush.bf16.msra.mxu0 %v835
        %1071 = vmatpush.bf16.msra.mxu0 %v831
        %1072 = vmatpush.bf16.msra.mxu0 %v827
        %1073 = vmatmul.bf16.gmra.mxu0 %v404
        %v1074 = vpop.f32.mrf.mxu0
        %v1075 = vadd.f32 %v1061, %v1074
        %v1076 = vpop.f32.mrf.mxu0
        %v1077 = vadd.f32 %v1063, %v1076
        %1078 = vdwg.mxu0
        %1079 = vmatpush.bf16.msra.mxu0 %v887
        %1080 = vmatpush.bf16.msra.mxu0 %v883
        %1081 = vmatpush.bf16.msra.mxu0 %v879
        %1082 = vmatpush.bf16.msra.mxu0 %v875
        %1083 = vmatpush.bf16.msra.mxu0 %v871
        %1084 = vmatpush.bf16.msra.mxu0 %v867
        %1085 = vmatpush.bf16.msra.mxu0 %v863
        %1086 = vmatpush.bf16.msra.mxu0 %v859
        %1087 = vmatmul.bf16.gmra.mxu0 %v405
        %v1088 = vpop.f32.mrf.mxu0
        %v1089 = vadd.f32 %v1075, %v1088
        %v1090 = vpop.f32.mrf.mxu0
        %v1091 = vadd.f32 %v1077, %v1090
        %1092 = vdwg.mxu0
        %1093 = vmatpush.bf16.msra.mxu0 %v919
        %1094 = vmatpush.bf16.msra.mxu0 %v915
        %1095 = vmatpush.bf16.msra.mxu0 %v911
        %1096 = vmatpush.bf16.msra.mxu0 %v907
        %1097 = vmatpush.bf16.msra.mxu0 %v903
        %1098 = vmatpush.bf16.msra.mxu0 %v899
        %1099 = vmatpush.bf16.msra.mxu0 %v895
        %1100 = vmatpush.bf16.msra.mxu0 %v891
        %1101 = vmatmul.bf16.gmra.mxu0 %v406
        %v1102 = vpop.f32.mrf.mxu0
        %v1103 = vadd.f32 %v1089, %v1102
        %v1104 = vpop.f32.mrf.mxu0
        %v1105 = vadd.f32 %v1091, %v1104
        %1106 = vdwg.mxu0
        %1107 = vmatpush.bf16.msra.mxu0 %v824
        %1108 = vmatpush.bf16.msra.mxu0 %v820
        %1109 = vmatpush.bf16.msra.mxu0 %v816
        %1110 = vmatpush.bf16.msra.mxu0 %v812
        %1111 = vmatpush.bf16.msra.mxu0 %v808
        %1112 = vmatpush.bf16.msra.mxu0 %v804
        %1113 = vmatpush.bf16.msra.mxu0 %v800
        %1114 = vmatpush.bf16.msra.mxu0 %v796
        %1115 = vmatmul.bf16.gmra.mxu0 %v403
        %v1116 = vpop.f32.mrf.mxu0
        %v1117 = vadd.f32 0.0, %v1116
        %v1118 = vpop.f32.mrf.mxu0
        %v1119 = vadd.f32 0.0, %v1118
        %1120 = vdwg.mxu0
        %1121 = vmatpush.bf16.msra.mxu0 %v856
        %1122 = vmatpush.bf16.msra.mxu0 %v852
        %1123 = vmatpush.bf16.msra.mxu0 %v848
        %1124 = vmatpush.bf16.msra.mxu0 %v844
        %1125 = vmatpush.bf16.msra.mxu0 %v840
        %1126 = vmatpush.bf16.msra.mxu0 %v836
        %1127 = vmatpush.bf16.msra.mxu0 %v832
        %1128 = vmatpush.bf16.msra.mxu0 %v828
        %1129 = vmatmul.bf16.gmra.mxu0 %v404
        %v1130 = vpop.f32.mrf.mxu0
        %v1131 = vadd.f32 %v1117, %v1130
        %v1132 = vpop.f32.mrf.mxu0
        %v1133 = vadd.f32 %v1119, %v1132
        %1134 = vdwg.mxu0
        %1135 = vmatpush.bf16.msra.mxu0 %v888
        %1136 = vmatpush.bf16.msra.mxu0 %v884
        %1137 = vmatpush.bf16.msra.mxu0 %v880
        %1138 = vmatpush.bf16.msra.mxu0 %v876
        %1139 = vmatpush.bf16.msra.mxu0 %v872
        %1140 = vmatpush.bf16.msra.mxu0 %v868
        %1141 = vmatpush.bf16.msra.mxu0 %v864
        %1142 = vmatpush.bf16.msra.mxu0 %v860
        %1143 = vmatmul.bf16.gmra.mxu0 %v405
        %v1144 = vpop.f32.mrf.mxu0
        %v1145 = vadd.f32 %v1131, %v1144
        %v1146 = vpop.f32.mrf.mxu0
        %v1147 = vadd.f32 %v1133, %v1146
        %1148 = vdwg.mxu0
        %1149 = vmatpush.bf16.msra.mxu0 %v920
        %1150 = vmatpush.bf16.msra.mxu0 %v916
        %1151 = vmatpush.bf16.msra.mxu0 %v912
        %1152 = vmatpush.bf16.msra.mxu0 %v908
        %1153 = vmatpush.bf16.msra.mxu0 %v904
        %1154 = vmatpush.bf16.msra.mxu0 %v900
        %1155 = vmatpush.bf16.msra.mxu0 %v896
        %1156 = vmatpush.bf16.msra.mxu0 %v892
        %1157 = vmatmul.bf16.gmra.mxu0 %v406
        %v1158 = vpop.f32.mrf.mxu0
        %v1159 = vadd.f32 %v1145, %v1158
        %v1160 = vpop.f32.mrf.mxu0
        %v1161 = vadd.f32 %v1147, %v1160
        %1162 = vdwg.mxu0
        %1163 = vmatpush.bf16.msra.mxu0 %v825
        %1164 = vmatpush.bf16.msra.mxu0 %v821
        %1165 = vmatpush.bf16.msra.mxu0 %v817
        %1166 = vmatpush.bf16.msra.mxu0 %v813
        %1167 = vmatpush.bf16.msra.mxu0 %v809
        %1168 = vmatpush.bf16.msra.mxu0 %v805
        %1169 = vmatpush.bf16.msra.mxu0 %v801
        %1170 = vmatpush.bf16.msra.mxu0 %v797
        %1171 = vmatmul.bf16.gmra.mxu0 %v403
        %v1172 = vpop.f32.mrf.mxu0
        %v1173 = vadd.f32 0.0, %v1172
        %v1174 = vpop.f32.mrf.mxu0
        %v1175 = vadd.f32 0.0, %v1174
        %1176 = vdwg.mxu0
        %1177 = vmatpush.bf16.msra.mxu0 %v857
        %1178 = vmatpush.bf16.msra.mxu0 %v853
        %1179 = vmatpush.bf16.msra.mxu0 %v849
        %1180 = vmatpush.bf16.msra.mxu0 %v845
        %1181 = vmatpush.bf16.msra.mxu0 %v841
        %1182 = vmatpush.bf16.msra.mxu0 %v837
        %1183 = vmatpush.bf16.msra.mxu0 %v833
        %1184 = vmatpush.bf16.msra.mxu0 %v829
        %1185 = vmatmul.bf16.gmra.mxu0 %v404
        %v1186 = vpop.f32.mrf.mxu0
        %v1187 = vadd.f32 %v1173, %v1186
        %v1188 = vpop.f32.mrf.mxu0
        %v1189 = vadd.f32 %v1175, %v1188
        %1190 = vdwg.mxu0
        %1191 = vmatpush.bf16.msra.mxu0 %v889
        %1192 = vmatpush.bf16.msra.mxu0 %v885
        %1193 = vmatpush.bf16.msra.mxu0 %v881
        %1194 = vmatpush.bf16.msra.mxu0 %v877
        %1195 = vmatpush.bf16.msra.mxu0 %v873
        %1196 = vmatpush.bf16.msra.mxu0 %v869
        %1197 = vmatpush.bf16.msra.mxu0 %v865
        %1198 = vmatpush.bf16.msra.mxu0 %v861
        %1199 = vmatmul.bf16.gmra.mxu0 %v405
        %v1200 = vpop.f32.mrf.mxu0
        %v1201 = vadd.f32 %v1187, %v1200
        %v1202 = vpop.f32.mrf.mxu0
        %v1203 = vadd.f32 %v1189, %v1202
        %1204 = vdwg.mxu0
        %1205 = vmatpush.bf16.msra.mxu0 %v921
        %1206 = vmatpush.bf16.msra.mxu0 %v917
        %1207 = vmatpush.bf16.msra.mxu0 %v913
        %1208 = vmatpush.bf16.msra.mxu0 %v909
        %1209 = vmatpush.bf16.msra.mxu0 %v905
        %1210 = vmatpush.bf16.msra.mxu0 %v901
        %1211 = vmatpush.bf16.msra.mxu0 %v897
        %1212 = vmatpush.bf16.msra.mxu0 %v893
        %1213 = vmatmul.bf16.gmra.mxu0 %v406
        %v1214 = vpop.f32.mrf.mxu0
        %v1215 = vadd.f32 %v1201, %v1214
        %v1216 = vpop.f32.mrf.mxu0
        %v1217 = vadd.f32 %v1203, %v1216
        %1218 = vdwg.mxu0
        %1219 = vmatpush.bf16.msra.mxu0 %v826
        %1220 = vmatpush.bf16.msra.mxu0 %v822
        %1221 = vmatpush.bf16.msra.mxu0 %v818
        %1222 = vmatpush.bf16.msra.mxu0 %v814
        %1223 = vmatpush.bf16.msra.mxu0 %v810
        %1224 = vmatpush.bf16.msra.mxu0 %v806
        %1225 = vmatpush.bf16.msra.mxu0 %v802
        %1226 = vmatpush.bf16.msra.mxu0 %v798
        %1227 = vmatmul.bf16.gmra.mxu0 %v403
        %v1228 = vpop.f32.mrf.mxu0
        %v1229 = vadd.f32 0.0, %v1228
        %v1230 = vpop.f32.mrf.mxu0
        %v1231 = vadd.f32 0.0, %v1230
        %1232 = vdwg.mxu0
        %1233 = vmatpush.bf16.msra.mxu0 %v858
        %1234 = vmatpush.bf16.msra.mxu0 %v854
        %1235 = vmatpush.bf16.msra.mxu0 %v850
        %1236 = vmatpush.bf16.msra.mxu0 %v846
        %1237 = vmatpush.bf16.msra.mxu0 %v842
        %1238 = vmatpush.bf16.msra.mxu0 %v838
        %1239 = vmatpush.bf16.msra.mxu0 %v834
        %1240 = vmatpush.bf16.msra.mxu0 %v830
        %1241 = vmatmul.bf16.gmra.mxu0 %v404
        %v1242 = vpop.f32.mrf.mxu0
        %v1243 = vadd.f32 %v1229, %v1242
        %v1244 = vpop.f32.mrf.mxu0
        %v1245 = vadd.f32 %v1231, %v1244
        %1246 = vdwg.mxu0
        %1247 = vmatpush.bf16.msra.mxu0 %v890
        %1248 = vmatpush.bf16.msra.mxu0 %v886
        %1249 = vmatpush.bf16.msra.mxu0 %v882
        %1250 = vmatpush.bf16.msra.mxu0 %v878
        %1251 = vmatpush.bf16.msra.mxu0 %v874
        %1252 = vmatpush.bf16.msra.mxu0 %v870
        %1253 = vmatpush.bf16.msra.mxu0 %v866
        %1254 = vmatpush.bf16.msra.mxu0 %v862
        %1255 = vmatmul.bf16.gmra.mxu0 %v405
        %v1256 = vpop.f32.mrf.mxu0
        %v1257 = vadd.f32 %v1243, %v1256
        %v1258 = vpop.f32.mrf.mxu0
        %v1259 = vadd.f32 %v1245, %v1258
        %1260 = vdwg.mxu0
        %1261 = vmatpush.bf16.msra.mxu0 %v922
        %1262 = vmatpush.bf16.msra.mxu0 %v918
        %1263 = vmatpush.bf16.msra.mxu0 %v914
        %1264 = vmatpush.bf16.msra.mxu0 %v910
        %1265 = vmatpush.bf16.msra.mxu0 %v906
        %1266 = vmatpush.bf16.msra.mxu0 %v902
        %1267 = vmatpush.bf16.msra.mxu0 %v898
        %1268 = vmatpush.bf16.msra.mxu0 %v894
        %1269 = vmatmul.bf16.gmra.mxu0 %v406
        %v1270 = vpop.f32.mrf.mxu0
        %v1271 = vadd.f32 %v1257, %v1270
        %v1272 = vpop.f32.mrf.mxu0
        %v1273 = vadd.f32 %v1259, %v1272
        %1274 = vdwg.mxu0
        %v1275 = vadd.f32 %v251, %v1103
        %v1276 = vadd.f32 %v252, %v1159
        %v1277 = vadd.f32 %v253, %v1215
        %v1278 = vadd.f32 %v254, %v1271
        %v1279 = vadd.f32 %v255, %v1105
        %v1280 = vadd.f32 %v256, %v1161
        %v1281 = vadd.f32 %v257, %v1217
        %v1282 = vadd.f32 %v258, %v1273
        %1283 = vst [vmem:[#allocation2] sm:$0xff] %v1275
        %1284 = vst [vmem:[#allocation2 + $0x8] sm:$0xff] %v1276
        %1285 = vst [vmem:[#allocation2 + $0x10] sm:$0xff] %v1277
        %1286 = vst [vmem:[#allocation2 + $0x18] sm:$0xff] %v1278
        %1287 = vst [vmem:[#allocation2 + $0x20] sm:$0xff] %v1279
        %1288 = vst [vmem:[#allocation2 + $0x28] sm:$0xff] %v1280
        %1289 = vst [vmem:[#allocation2 + $0x30] sm:$0xff] %v1281
        %1290 = vst [vmem:[#allocation2 + $0x38] sm:$0xff] %v1282
        %p1291 = scmp.eq.s32.totalorder %s19, 7
        // Predicated region
        $region60: #{discriminator_forward.7} parent=50 // pred_check
          %p1292 = pneg %p1291
        $region61: #{discriminator_forward.7} parent=50 // pred_check_branch
          %1294 = sbr.rel (%p1292) target = $region63
        $region62: #{discriminator_forward.7} parent=50 // pred_region
          %v1295 = vld [vmem:[#allocation2] sm:$0xff]
          %v1296 = vld [vmem:[#allocation2 + $0x8] sm:$0xff]
          %v1297 = vld [vmem:[#allocation2 + $0x10] sm:$0xff]
          %v1298 = vld [vmem:[#allocation2 + $0x18] sm:$0xff]
          %v1299 = vld [vmem:[#allocation2 + $0x20] sm:$0xff]
          %v1300 = vld [vmem:[#allocation2 + $0x28] sm:$0xff]
          %v1301 = vld [vmem:[#allocation2 + $0x30] sm:$0xff]
          %v1302 = vld [vmem:[#allocation2 + $0x38] sm:$0xff]
          %v1303 = vld [vmem:[%s2] sm:$0xf]
          %v1305 = vperm.slane %v1303, 0
          %v1306 = vperm.slane %v1303, 1
          %v1307 = vperm.slane %v1303, 2
          %v1308 = vperm.slane %v1303, 3
          %v1313 = vadd.f32 %v1295, %v1305
          %v1314 = vadd.f32 %v1296, %v1306
          %v1315 = vadd.f32 %v1297, %v1307
          %v1316 = vadd.f32 %v1298, %v1308
          %v1317 = vadd.f32 %v1299, %v1305
          %v1318 = vadd.f32 %v1300, %v1306
          %v1319 = vadd.f32 %v1301, %v1307
          %v1320 = vadd.f32 %v1302, %v1308
          %v1321 = vlaneseq
          %v1322 = vshrl.u32 %v1321, 7
          %v1323 = vadd.s32 %v1322, 8
          %vm1324 = vcmp.lt.s32.totalorder %v1322, 9
          %vm1325 = vcmp.lt.s32.totalorder %v1323, 9
          %v1326 = vsel %vm1324, 1, 0
          %v1327 = vsel %vm1325, 1, 0
          %v1328 = vcvt.s32.f32 %v1326
          %v1329 = vcvt.s32.f32 %v1327
          %v1330 = vmul.f32 %v1313, %v1328
          %v1331 = vmul.f32 %v1314, %v1328
          %v1332 = vmul.f32 %v1315, %v1328
          %v1333 = vmul.f32 %v1316, %v1328
          %v1334 = vmul.f32 %v1317, %v1329
          %v1335 = vmul.f32 %v1318, %v1329
          %v1336 = vmul.f32 %v1319, %v1329
          %v1337 = vmul.f32 %v1320, %v1329
          %v1338 = vadd.f32 %v1330, %v1334
          %v1339 = vrot.slane %v1338, 4
          %v1340 = vadd.f32 %v1338, %v1339
          %v1341 = vrot.slane %v1340, 2
          %v1342 = vadd.f32 %v1340, %v1341
          %v1343 = vrot.slane %v1342, 1
          %v1344 = vadd.f32 %v1342, %v1343
          %v1345 = vadd.f32 %v1331, %v1335
          %v1346 = vrot.slane %v1345, 4
          %v1347 = vadd.f32 %v1345, %v1346
          %v1348 = vrot.slane %v1347, 2
          %v1349 = vadd.f32 %v1347, %v1348
          %v1350 = vrot.slane %v1349, 1
          %v1351 = vadd.f32 %v1349, %v1350
          %v1352 = vadd.f32 %v1332, %v1336
          %v1353 = vrot.slane %v1352, 4
          %v1354 = vadd.f32 %v1352, %v1353
          %v1355 = vrot.slane %v1354, 2
          %v1356 = vadd.f32 %v1354, %v1355
          %v1357 = vrot.slane %v1356, 1
          %v1358 = vadd.f32 %v1356, %v1357
          %v1359 = vadd.f32 %v1333, %v1337
          %v1360 = vrot.slane %v1359, 4
          %v1361 = vadd.f32 %v1359, %v1360
          %v1362 = vrot.slane %v1361, 2
          %v1363 = vadd.f32 %v1361, %v1362
          %v1364 = vrot.slane %v1363, 1
          %v1365 = vadd.f32 %v1363, %v1364
          %v1366 = vmul.f32 %v1344, 0.11111111
          %v1367 = vmul.f32 %v1351, 0.11111111
          %v1368 = vmul.f32 %v1358, 0.11111111
          %v1369 = vmul.f32 %v1365, 0.11111111
          %v1370 = vsub.f32 %v1313, %v1366
          %v1371 = vsub.f32 %v1314, %v1367
          %v1372 = vsub.f32 %v1315, %v1368
          %v1373 = vsub.f32 %v1316, %v1369
          %v1374 = vsub.f32 %v1317, %v1366
          %v1375 = vsub.f32 %v1318, %v1367
          %v1376 = vsub.f32 %v1319, %v1368
          %v1377 = vsub.f32 %v1320, %v1369
          %v1378 = vmul.f32 %v1370, %v1370
          %v1379 = vmul.f32 %v1371, %v1371
          %v1380 = vmul.f32 %v1372, %v1372
          %v1381 = vmul.f32 %v1373, %v1373
          %v1382 = vmul.f32 %v1374, %v1374
          %v1383 = vmul.f32 %v1375, %v1375
          %v1384 = vmul.f32 %v1376, %v1376
          %v1385 = vmul.f32 %v1377, %v1377
          %v1386 = vmul.f32 %v1378, %v1328
          %v1387 = vmul.f32 %v1379, %v1328
          %v1388 = vmul.f32 %v1380, %v1328
          %v1389 = vmul.f32 %v1381, %v1328
          %v1390 = vmul.f32 %v1382, %v1329
          %v1391 = vmul.f32 %v1383, %v1329
          %v1392 = vmul.f32 %v1384, %v1329
          %v1393 = vmul.f32 %v1385, %v1329
          %v1394 = vadd.f32 %v1386, %v1390
          %v1395 = vrot.slane %v1394, 4
          %v1396 = vadd.f32 %v1394, %v1395
          %v1397 = vrot.slane %v1396, 2
          %v1398 = vadd.f32 %v1396, %v1397
          %v1399 = vrot.slane %v1398, 1
          %v1400 = vadd.f32 %v1398, %v1399
          %v1401 = vadd.f32 %v1387, %v1391
          %v1402 = vrot.slane %v1401, 4
          %v1403 = vadd.f32 %v1401, %v1402
          %v1404 = vrot.slane %v1403, 2
          %v1405 = vadd.f32 %v1403, %v1404
          %v1406 = vrot.slane %v1405, 1
          %v1407 = vadd.f32 %v1405, %v1406
          %v1408 = vadd.f32 %v1388, %v1392
          %v1409 = vrot.slane %v1408, 4
          %v1410 = vadd.f32 %v1408, %v1409
          %v1411 = vrot.slane %v1410, 2
          %v1412 = vadd.f32 %v1410, %v1411
          %v1413 = vrot.slane %v1412, 1
          %v1414 = vadd.f32 %v1412, %v1413
          %v1415 = vadd.f32 %v1389, %v1393
          %v1416 = vrot.slane %v1415, 4
          %v1417 = vadd.f32 %v1415, %v1416
          %v1418 = vrot.slane %v1417, 2
          %v1419 = vadd.f32 %v1417, %v1418
          %v1420 = vrot.slane %v1419, 1
          %v1421 = vadd.f32 %v1419, %v1420
          %v1422 = vmul.f32 %v1400, 0.11111111
          %v1423 = vmul.f32 %v1407, 0.11111111
          %v1424 = vmul.f32 %v1414, 0.11111111
          %v1425 = vmul.f32 %v1421, 0.11111111
          %v1426 = vadd.f32 %v1422, 1e-05
          %v1427 = vadd.f32 %v1423, 1e-05
          %v1428 = vadd.f32 %v1424, 1e-05
          %v1429 = vadd.f32 %v1425, 1e-05
          %v1430 = vrsqrt.pop %v1426
          %v1431 = vmul.f32 %v1430, %v1426
          %v1432 = vmul.f32 %v1431, %v1430
          %v1433 = vmul.f32 0.5, %v1432
          %v1434 = vsub.f32 1.5, %v1433
          %v1435 = vmul.f32 %v1430, %v1434
          %vm1436 = vweird.f32 %v1426
          %vm1437 = vweird.f32 %v1430
          %vm1438 = vmor %vm1436, %vm1437
          %v1439 = vsel %vm1438, %v1430, %v1435
          %v1440 = vrsqrt.pop %v1427
          %v1441 = vmul.f32 %v1440, %v1427
          %v1442 = vmul.f32 %v1441, %v1440
          %v1443 = vmul.f32 0.5, %v1442
          %v1444 = vsub.f32 1.5, %v1443
          %v1445 = vmul.f32 %v1440, %v1444
          %vm1446 = vweird.f32 %v1427
          %vm1447 = vweird.f32 %v1440
          %vm1448 = vmor %vm1446, %vm1447
          %v1449 = vsel %vm1448, %v1440, %v1445
          %v1450 = vrsqrt.pop %v1428
          %v1451 = vmul.f32 %v1450, %v1428
          %v1452 = vmul.f32 %v1451, %v1450
          %v1453 = vmul.f32 0.5, %v1452
          %v1454 = vsub.f32 1.5, %v1453
          %v1455 = vmul.f32 %v1450, %v1454
          %vm1456 = vweird.f32 %v1428
          %vm1457 = vweird.f32 %v1450
          %vm1458 = vmor %vm1456, %vm1457
          %v1459 = vsel %vm1458, %v1450, %v1455
          %v1460 = vrsqrt.pop %v1429
          %v1461 = vmul.f32 %v1460, %v1429
          %v1462 = vmul.f32 %v1461, %v1460
          %v1463 = vmul.f32 0.5, %v1462
          %v1464 = vsub.f32 1.5, %v1463
          %v1465 = vmul.f32 %v1460, %v1464
          %vm1466 = vweird.f32 %v1429
          %vm1467 = vweird.f32 %v1460
          %vm1468 = vmor %vm1466, %vm1467
          %v1469 = vsel %vm1468, %v1460, %v1465
          %v1470 = vmul.f32 %v1370, %v1439
          %v1471 = vmul.f32 %v1371, %v1449
          %v1472 = vmul.f32 %v1372, %v1459
          %v1473 = vmul.f32 %v1373, %v1469
          %v1474 = vmul.f32 %v1374, %v1439
          %v1475 = vmul.f32 %v1375, %v1449
          %v1476 = vmul.f32 %v1376, %v1459
          %v1477 = vmul.f32 %v1377, %v1469
          %vm1478 = vcmp.ge.f32.partialorder %v1470, 0.0
          %vm1479 = vcmp.ge.f32.partialorder %v1471, 0.0
          %vm1480 = vcmp.ge.f32.partialorder %v1472, 0.0
          %vm1481 = vcmp.ge.f32.partialorder %v1473, 0.0
          %vm1482 = vcmp.ge.f32.partialorder %v1474, 0.0
          %vm1483 = vcmp.ge.f32.partialorder %v1475, 0.0
          %vm1484 = vcmp.ge.f32.partialorder %v1476, 0.0
          %vm1485 = vcmp.ge.f32.partialorder %v1477, 0.0
          %v1486 = vmul.f32 %v1470, 0.2
          %v1487 = vmul.f32 %v1471, 0.2
          %v1488 = vmul.f32 %v1472, 0.2
          %v1489 = vmul.f32 %v1473, 0.2
          %v1490 = vmul.f32 %v1474, 0.2
          %v1491 = vmul.f32 %v1475, 0.2
          %v1492 = vmul.f32 %v1476, 0.2
          %v1493 = vmul.f32 %v1477, 0.2
          %v1494 = vsel %vm1478, %v1470, %v1486
          %v1495 = vsel %vm1479, %v1471, %v1487
          %v1496 = vsel %vm1480, %v1472, %v1488
          %v1497 = vsel %vm1481, %v1473, %v1489
          %v1498 = vsel %vm1482, %v1474, %v1490
          %v1499 = vsel %vm1483, %v1475, %v1491
          %v1500 = vsel %vm1484, %v1476, %v1492
          %v1501 = vsel %vm1485, %v1477, %v1493
          %1502 = vst [vmem:[%s238] sm:$0xff] %v1494
          %1503 = vst [vmem:[%s238 + $0x8] sm:$0xff] %v1495
          %1504 = vst [vmem:[%s238 + $0x10] sm:$0xff] %v1496
          %1505 = vst [vmem:[%s238 + $0x18] sm:$0xff] %v1497
          %1506 = vst [vmem:[%s238 + $0x20] sm:$0xff] %v1498
          %1507 = vst [vmem:[%s238 + $0x28] sm:$0xff] %v1499
          %1508 = vst [vmem:[%s238 + $0x30] sm:$0xff] %v1500
          %1509 = vst [vmem:[%s238 + $0x38] sm:$0xff] %v1501
        $region63: #{discriminator_forward.7} parent=50 // pred_fallthru
          _
        %p1510 = scmp.lt.s32.totalorder %s18, 1
        %s1511 = scalar_select %p1510, %s18, 1
        %s1512 = smul.addr %s1511, 8
        %s1513 = smul.addr %s1512, 8
        %s1514 = scalar_lea.vmem %s3, %s1513
        // Predicated region
        $region64: #{discriminator_forward.7} parent=50 // pred_check
          %p1515 = pneg %p119
        $region65: #{discriminator_forward.7} parent=50 // pred_check_branch
          %1517 = sbr.rel (%p1515) target = $region67
        $region66: #{discriminator_forward.7} parent=50 // pred_region
          _
        $region67: #{discriminator_forward.7} parent=50 // pred_fallthru
          _
      $region51: #{discriminator_forward.7} parent=5 // pred_fallthru
        _
      %p1518 = scmp.le.s32.totalorder 2, %s9
      // Predicated region
      $region68: #{discriminator_forward.7} parent=5 // pred_check
        %p1519 = pneg %p1518
      $region69: #{discriminator_forward.7} parent=5 // pred_check_branch
        %1521 = sbr.rel (%p1519) target = $region71
      $region70: #{discriminator_forward.7} parent=5 // pred_region
        %s1522 = ssub.s32 %s9, 2
        // Predicated region
        $region72: #{discriminator_forward.7} parent=70 // pred_check
          %p1523 = pneg %p125
        $region73: #{discriminator_forward.7} parent=70 // pred_check_branch
          %1525 = sbr.rel (%p1523) target = $region75
        $region74: #{discriminator_forward.7} parent=70 // pred_region
          %p1526 = scmp.lt.s32.totalorder %s20, 1
          %s1527 = scalar_select %p1526, %s20, 1
          %s1528 = smul.addr %s1527, 8
          %s1529 = smul.addr %s1528, 8
          %s1530 = scalar_lea.vmem %s3, %s1529
        $region75: #{discriminator_forward.7} parent=70 // pred_fallthru
          _
      $region71: #{discriminator_forward.7} parent=5 // pred_fallthru
        _
    $region6: #{discriminator_forward.7} parent=1 // loop_footer
      %s13 = sadd.s32 1, %s9
    $region7: #{discriminator_forward.7} parent=1 // loop_footer_branch
      %8 = sbr.rel target = $region3
    $region8: #{discriminator_forward.7} parent=1 // loop_exit
      _

</llo_original>
